<compile_context>
chip_gen: v5e
topology: v5e:2x2
jax: 0.10.0
libtpu: 0.0.40
codegen_flags: <defaults>
</compile_context>

<pallas_src>
import functools

import jax
import jax.numpy as jnp
from jax import lax
from jax.experimental import pallas as pl
from jax.experimental.pallas import tpu as pltpu


_SQRT_HALF = 0.7071067811865476


def _gelu_exact(x):
    """Exact (erf-based) GELU matching torch.nn.GELU() default.

    erf via Abramowitz & Stegun 7.1.26 (max abs error ~1.5e-7); uses only
    ops with straightforward VPU/EUP lowerings (mul/add/where/exp/div).
    """
    z = x * _SQRT_HALF
    az = jnp.where(z >= 0.0, z, -z)
    t = 1.0 / (1.0 + 0.3275911 * az)
    poly = ((((1.061405429 * t - 1.453152027) * t + 1.421413741) * t
             - 0.284496736) * t + 0.254829592) * t
    erf_abs = 1.0 - poly * jnp.exp(-az * az)
    erf_z = jnp.where(z >= 0.0, erf_abs, -erf_abs)
    return 0.5 * x * (1.0 + erf_z)


def _ccm_kernel(x_ref, w1_ref, b1_ref, w2_ref, b2_ref, mask_ref, out_ref,
                xp_ref, *, width, pad):
    # x_ref   : (1, C, HW)        input, spatial flattened (lane-dense)
    # w1_ref  : (9, hid, C)       3x3 conv taps, tap t = ky*3 + kx
    # b1_ref  : (hid, 1)          conv1 bias
    # w2_ref  : (C, hid)          1x1 conv weight
    # b2_ref  : (C, 1)            conv2 bias
    # mask_ref: (9, 1, HW)        1.0 where the tap's source pixel is inside
    #                             the image, 0.0 where the conv reads padding
    # out_ref : (1, C, HW)
    # xp_ref  : (C, HW + 2*pad)   VMEM scratch: x at lane offset `pad`,
    #                             zero borders emulate the conv's zero padding
    _, C, HW = x_ref.shape
    hid = w1_ref.shape[1]

    x = x_ref[0]                                              # (C, HW)

    # Zero-bordered, lane-shifted staging copy of x (VMEM only, no HBM pad).
    xp_ref[:, pl.ds(0, pad)] = jnp.zeros((C, pad), jnp.float32)
    xp_ref[:, pl.ds(pad + HW, pad)] = jnp.zeros((C, pad), jnp.float32)
    xp_ref[:, pl.ds(pad, HW)] = x.astype(jnp.float32)

    # conv1 (3x3, padding=1): 9 shifted, masked channel contractions.
    hidden = jnp.zeros((hid, HW), jnp.float32)
    tap = 0
    for dy in (-1, 0, 1):
        for dx in (-1, 0, 1):
            start = pad + dy * width + dx                     # static offset
            src = xp_ref[:, pl.ds(start, HW)]                 # (C, HW) shifted x
            src = src * mask_ref[tap]                         # zero out-of-image taps
            w_tap = w1_ref[tap]                               # (hid, C)
            # Tiny channel contraction -> exact-f32 rank-1 updates on the VPU.
            # NOTE: for large dim, replace this inner loop with
            #       jnp.dot(w_tap, src, preferred_element_type=jnp.float32).
            for c in range(C):
                hidden = hidden + w_tap[:, c:c + 1] * src[c:c + 1, :]
            tap += 1

    hidden = _gelu_exact(hidden + b1_ref[...])                # (hid, HW)

    # conv2 (1x1): second small channel contraction.
    out = jnp.zeros((C, HW), jnp.float32)
    for h in range(hid):
        out = out + w2_ref[:, h:h + 1] * hidden[h:h + 1, :]
    out = out + b2_ref[...]

    out_ref[0] = out.astype(out_ref.dtype)


@jax.jit
def ccm_forward(x, conv1_w, conv1_b, conv2_w, conv2_b):
    """CCM forward: Conv2d(C->hid, 3, pad=1) -> GELU -> Conv2d(hid->C, 1).

    x: (B, C, H, W) f32; conv1_w: (hid, C, 3, 3); conv1_b: (hid,);
    conv2_w: (C, hid, 1, 1); conv2_b: (C,).
    """
    B, C, H, W = x.shape
    hid = conv1_w.shape[0]
    HW = H * W
    pad = pl.cdiv(W + 1, 128) * 128        # lane-aligned zero-border width

    # Free, contiguous reshape: spatial goes to the lane axis (lane-dense).
    x_flat = x.reshape(B, C, HW)

    # Conv1 taps reordered to (tap, out_ch, in_ch); tap = ky*3 + kx.
    w1_taps = jnp.transpose(conv1_w, (2, 3, 0, 1)).reshape(9, hid, C)
    w1_taps = w1_taps.astype(jnp.float32)
    b1_col = conv1_b.reshape(hid, 1).astype(jnp.float32)
    w2_mat = conv2_w.reshape(C, hid).astype(jnp.float32)
    b2_col = conv2_b.reshape(C, 1).astype(jnp.float32)

    # Per-tap validity masks over the flattened spatial axis.
    hh = jnp.arange(H, dtype=jnp.int32).reshape(H, 1)
    ww = jnp.arange(W, dtype=jnp.int32).reshape(1, W)
    mask_list = []
    for dy in (-1, 0, 1):
        for dx in (-1, 0, 1):
            ok = ((hh + dy >= 0) & (hh + dy < H) &
                  (ww + dx >= 0) & (ww + dx < W))
            mask_list.append(ok.reshape(1, HW))
    masks = jnp.stack(mask_list, axis=0).astype(jnp.float32)  # (9, 1, HW)

    kernel = functools.partial(_ccm_kernel, width=W, pad=pad)
    out_flat = pl.pallas_call(
        kernel,
        out_shape=jax.ShapeDtypeStruct((B, C, HW), x.dtype),
        grid=(B,),
        in_specs=[
            pl.BlockSpec((1, C, HW), lambda b: (b, 0, 0)),     # x
            pl.BlockSpec((9, hid, C), lambda b: (0, 0, 0)),    # conv1 taps
            pl.BlockSpec((hid, 1), lambda b: (0, 0)),          # conv1 bias
            pl.BlockSpec((C, hid), lambda b: (0, 0)),          # conv2 weight
            pl.BlockSpec((C, 1), lambda b: (0, 0)),            # conv2 bias
            pl.BlockSpec((9, 1, HW), lambda b: (0, 0, 0)),     # tap masks
        ],
        out_specs=pl.BlockSpec((1, C, HW), lambda b: (b, 0, 0)),
        scratch_shapes=[pltpu.VMEM((C, HW + 2 * pad), jnp.float32)],
        compiler_params=pltpu.CompilerParams(
            dimension_semantics=("parallel",)),
    )(x_flat, w1_taps, b1_col, w2_mat, b2_col, masks)

    return out_flat.reshape(B, C, H, W)


def _reference(x, conv1_w, conv1_b, conv2_w, conv2_b):
    """Plain-JAX reference mirroring the PyTorch CCM forward."""
    y = lax.conv_general_dilated(
        x, conv1_w, window_strides=(1, 1), padding=((1, 1), (1, 1)),
        dimension_numbers=("NCHW", "OIHW", "NCHW"),
        precision=lax.Precision.HIGHEST)
    y = y + conv1_b.reshape(1, -1, 1, 1)
    y = jax.nn.gelu(y, approximate=False)
    y = lax.conv_general_dilated(
        y, conv2_w, window_strides=(1, 1), padding=((0, 0), (0, 0)),
        dimension_numbers=("NCHW", "OIHW", "NCHW"),
        precision=lax.Precision.HIGHEST)
    return y + conv2_b.reshape(1, -1, 1, 1)


if __name__ == "__main__":
    key = jax.random.PRNGKey(0)
    kx, k1, k2, k3, k4 = jax.random.split(key, 5)

    B, dim, H, W = 2, 8, 16, 16
    growth_rate = 2.0
    hidden = int(dim * growth_rate)

    x = jax.random.normal(kx, (B, dim, H, W), dtype=jnp.float32)

    # PyTorch default Conv2d init: U(-1/sqrt(fan_in), 1/sqrt(fan_in)).
    fan1 = dim * 3 * 3
    lim1 = 1.0 / (fan1 ** 0.5)
    conv1_w = jax.random.uniform(k1, (hidden, dim, 3, 3), jnp.float32, -lim1, lim1)
    conv1_b = jax.random.uniform(k2, (hidden,), jnp.float32, -lim1, lim1)
    fan2 = hidden
    lim2 = 1.0 / (fan2 ** 0.5)
    conv2_w = jax.random.uniform(k3, (dim, hidden, 1, 1), jnp.float32, -lim2, lim2)
    conv2_b = jax.random.uniform(k4, (dim,), jnp.float32, -lim2, lim2)

    out = jax.block_until_ready(
        ccm_forward(x, conv1_w, conv1_b, conv2_w, conv2_b))
    ref = jax.block_until_ready(
        _reference(x, conv1_w, conv1_b, conv2_w, conv2_b))

    assert out.shape == (B, dim, H, W)
    max_err = float(jnp.max(jnp.abs(out - ref)))
    assert jnp.allclose(out, ref, atol=1e-5, rtol=1e-5), max_err

    print("KERNEL_OK")
</pallas_src>

<mosaic_0001>
module attributes {stable_mosaic.version = 11 : i64} {
  func.func @_ccm_kernel(%arg0: i32, %arg1: memref<1x8x256xf32, #tpu.memory_space<vmem>>, %arg2: memref<9x16x8xf32, #tpu.memory_space<vmem>>, %arg3: memref<16x1xf32, #tpu.memory_space<vmem>>, %arg4: memref<8x16xf32, #tpu.memory_space<vmem>>, %arg5: memref<8x1xf32, #tpu.memory_space<vmem>>, %arg6: memref<9x1x256xf32, #tpu.memory_space<vmem>>, %arg7: memref<1x8x256xf32, #tpu.memory_space<vmem>>, %arg8: memref<8x512xf32, #tpu.memory_space<vmem>>) attributes {dimension_semantics = [#tpu.dimension_semantics<parallel>], iteration_bounds = array<i64: 2>, scalar_prefetch = 0 : i64, scratch_operands = 1 : i64, tpu.core_type = #tpu.core_type<tc>, window_params = [{transform_indices = @transform_0, window_bounds = array<i64: 1, 8, 256>}, {pipeline_mode = #tpu.pipeline_mode<synchronous>, transform_indices = @transform_1, window_bounds = array<i64: 9, 16, 8>}, {pipeline_mode = #tpu.pipeline_mode<synchronous>, transform_indices = @transform_2, window_bounds = array<i64: 16, 1>}, {pipeline_mode = #tpu.pipeline_mode<synchronous>, transform_indices = @transform_3, window_bounds = array<i64: 8, 16>}, {pipeline_mode = #tpu.pipeline_mode<synchronous>, transform_indices = @transform_4, window_bounds = array<i64: 8, 1>}, {pipeline_mode = #tpu.pipeline_mode<synchronous>, transform_indices = @transform_5, window_bounds = array<i64: 9, 1, 256>}, {transform_indices = @transform_6, window_bounds = array<i64: 1, 8, 256>}]} {
    %c0 = arith.constant 0 : index
    %c0_0 = arith.constant 0 : index
    %c0_1 = arith.constant 0 : index
    %0 = vector.load %arg1[%c0, %c0_0, %c0_1] : memref<1x8x256xf32, #tpu.memory_space<vmem>>, vector<1x8x256xf32>
    %1 = vector.shape_cast %0 : vector<1x8x256xf32> to vector<8x256xf32>
    %cst = arith.constant 0.000000e+00 : f32
    %2 = vector.broadcast %cst : f32 to vector<8x128xf32>
    %c0_2 = arith.constant 0 : index
    %c0_3 = arith.constant 0 : index
    %3 = vector.load %arg8[%c0_2, %c0_3] : memref<8x512xf32, #tpu.memory_space<vmem>>, vector<8x128xf32>
    tpu.vector_store %arg8[%c0_2, %c0_3], %2 {strides = array<i32>} : memref<8x512xf32, #tpu.memory_space<vmem>>, vector<8x128xf32>,
    %cst_4 = arith.constant 0.000000e+00 : f32
    %4 = vector.broadcast %cst_4 : f32 to vector<8x128xf32>
    %c0_5 = arith.constant 0 : index
    %c384 = arith.constant 384 : index
    %5 = vector.load %arg8[%c0_5, %c384] : memref<8x512xf32, #tpu.memory_space<vmem>>, vector<8x128xf32>
    tpu.vector_store %arg8[%c0_5, %c384], %4 {strides = array<i32>} : memref<8x512xf32, #tpu.memory_space<vmem>>, vector<8x128xf32>,
    %c0_6 = arith.constant 0 : index
    %c128 = arith.constant 128 : index
    %6 = vector.load %arg8[%c0_6, %c128] : memref<8x512xf32, #tpu.memory_space<vmem>>, vector<8x256xf32>
    tpu.vector_store %arg8[%c0_6, %c128], %1 {strides = array<i32>} : memref<8x512xf32, #tpu.memory_space<vmem>>, vector<8x256xf32>,
    %cst_7 = arith.constant 0.000000e+00 : f32
    %7 = vector.broadcast %cst_7 : f32 to vector<16x256xf32>
    %c0_8 = arith.constant 0 : index
    %c111 = arith.constant 111 : index
    %8 = vector.load %arg8[%c0_8, %c111] : memref<8x512xf32, #tpu.memory_space<vmem>>, vector<8x256xf32>
    %c0_9 = arith.constant 0 : index
    %c0_10 = arith.constant 0 : index
    %c0_11 = arith.constant 0 : index
    %9 = vector.load %arg6[%c0_9, %c0_10, %c0_11] : memref<9x1x256xf32, #tpu.memory_space<vmem>>, vector<1x1x256xf32>
    %10 = vector.shape_cast %9 : vector<1x1x256xf32> to vector<1x256xf32>
    %11 = vector.broadcast %10 : vector<1x256xf32> to vector<8x256xf32>
    %12 = arith.mulf %8, %11 : vector<8x256xf32>
    %c0_12 = arith.constant 0 : index
    %c0_13 = arith.constant 0 : index
    %c0_14 = arith.constant 0 : index
    %13 = vector.load %arg2[%c0_12, %c0_13, %c0_14] : memref<9x16x8xf32, #tpu.memory_space<vmem>>, vector<1x16x8xf32>
    %14 = vector.shape_cast %13 : vector<1x16x8xf32> to vector<16x8xf32>
    %15 = vector.extract_strided_slice %14 {offsets = [0, 0], sizes = [16, 1], strides = [1, 1]} : vector<16x8xf32> to vector<16x1xf32>
    %16 = vector.extract_strided_slice %12 {offsets = [0, 0], sizes = [1, 256], strides = [1, 1]} : vector<8x256xf32> to vector<1x256xf32>
    %17 = vector.broadcast %15 : vector<16x1xf32> to vector<16x256xf32>
    %18 = vector.broadcast %16 : vector<1x256xf32> to vector<16x256xf32>
    %19 = arith.mulf %17, %18 : vector<16x256xf32>
    %20 = arith.addf %7, %19 : vector<16x256xf32>
    %21 = vector.extract_strided_slice %14 {offsets = [0, 1], sizes = [16, 1], strides = [1, 1]} : vector<16x8xf32> to vector<16x1xf32>
    %22 = vector.extract_strided_slice %12 {offsets = [1, 0], sizes = [1, 256], strides = [1, 1]} : vector<8x256xf32> to vector<1x256xf32>
    %23 = vector.broadcast %21 : vector<16x1xf32> to vector<16x256xf32>
    %24 = vector.broadcast %22 : vector<1x256xf32> to vector<16x256xf32>
    %25 = arith.mulf %23, %24 : vector<16x256xf32>
    %26 = arith.addf %20, %25 : vector<16x256xf32>
    %27 = vector.extract_strided_slice %14 {offsets = [0, 2], sizes = [16, 1], strides = [1, 1]} : vector<16x8xf32> to vector<16x1xf32>
    %28 = vector.extract_strided_slice %12 {offsets = [2, 0], sizes = [1, 256], strides = [1, 1]} : vector<8x256xf32> to vector<1x256xf32>
    %29 = vector.broadcast %27 : vector<16x1xf32> to vector<16x256xf32>
    %30 = vector.broadcast %28 : vector<1x256xf32> to vector<16x256xf32>
    %31 = arith.mulf %29, %30 : vector<16x256xf32>
    %32 = arith.addf %26, %31 : vector<16x256xf32>
    %33 = vector.extract_strided_slice %14 {offsets = [0, 3], sizes = [16, 1], strides = [1, 1]} : vector<16x8xf32> to vector<16x1xf32>
    %34 = vector.extract_strided_slice %12 {offsets = [3, 0], sizes = [1, 256], strides = [1, 1]} : vector<8x256xf32> to vector<1x256xf32>
    %35 = vector.broadcast %33 : vector<16x1xf32> to vector<16x256xf32>
    %36 = vector.broadcast %34 : vector<1x256xf32> to vector<16x256xf32>
    %37 = arith.mulf %35, %36 : vector<16x256xf32>
    %38 = arith.addf %32, %37 : vector<16x256xf32>
    %39 = vector.extract_strided_slice %14 {offsets = [0, 4], sizes = [16, 1], strides = [1, 1]} : vector<16x8xf32> to vector<16x1xf32>
    %40 = vector.extract_strided_slice %12 {offsets = [4, 0], sizes = [1, 256], strides = [1, 1]} : vector<8x256xf32> to vector<1x256xf32>
    %41 = vector.broadcast %39 : vector<16x1xf32> to vector<16x256xf32>
    %42 = vector.broadcast %40 : vector<1x256xf32> to vector<16x256xf32>
    %43 = arith.mulf %41, %42 : vector<16x256xf32>
    %44 = arith.addf %38, %43 : vector<16x256xf32>
    %45 = vector.extract_strided_slice %14 {offsets = [0, 5], sizes = [16, 1], strides = [1, 1]} : vector<16x8xf32> to vector<16x1xf32>
    %46 = vector.extract_strided_slice %12 {offsets = [5, 0], sizes = [1, 256], strides = [1, 1]} : vector<8x256xf32> to vector<1x256xf32>
    %47 = vector.broadcast %45 : vector<16x1xf32> to vector<16x256xf32>
    %48 = vector.broadcast %46 : vector<1x256xf32> to vector<16x256xf32>
    %49 = arith.mulf %47, %48 : vector<16x256xf32>
    %50 = arith.addf %44, %49 : vector<16x256xf32>
    %51 = vector.extract_strided_slice %14 {offsets = [0, 6], sizes = [16, 1], strides = [1, 1]} : vector<16x8xf32> to vector<16x1xf32>
    %52 = vector.extract_strided_slice %12 {offsets = [6, 0], sizes = [1, 256], strides = [1, 1]} : vector<8x256xf32> to vector<1x256xf32>
    %53 = vector.broadcast %51 : vector<16x1xf32> to vector<16x256xf32>
    %54 = vector.broadcast %52 : vector<1x256xf32> to vector<16x256xf32>
    %55 = arith.mulf %53, %54 : vector<16x256xf32>
    %56 = arith.addf %50, %55 : vector<16x256xf32>
    %57 = vector.extract_strided_slice %14 {offsets = [0, 7], sizes = [16, 1], strides = [1, 1]} : vector<16x8xf32> to vector<16x1xf32>
    %58 = vector.extract_strided_slice %12 {offsets = [7, 0], sizes = [1, 256], strides = [1, 1]} : vector<8x256xf32> to vector<1x256xf32>
    %59 = vector.broadcast %57 : vector<16x1xf32> to vector<16x256xf32>
    %60 = vector.broadcast %58 : vector<1x256xf32> to vector<16x256xf32>
    %61 = arith.mulf %59, %60 : vector<16x256xf32>
    %62 = arith.addf %56, %61 : vector<16x256xf32>
    %c0_15 = arith.constant 0 : index
    %c112 = arith.constant 112 : index
    %63 = vector.load %arg8[%c0_15, %c112] : memref<8x512xf32, #tpu.memory_space<vmem>>, vector<8x256xf32>
    %c1 = arith.constant 1 : index
    %c0_16 = arith.constant 0 : index
    %c0_17 = arith.constant 0 : index
    %64 = vector.load %arg6[%c1, %c0_16, %c0_17] : memref<9x1x256xf32, #tpu.memory_space<vmem>>, vector<1x1x256xf32>
    %65 = vector.shape_cast %64 : vector<1x1x256xf32> to vector<1x256xf32>
    %66 = vector.broadcast %65 : vector<1x256xf32> to vector<8x256xf32>
    %67 = arith.mulf %63, %66 : vector<8x256xf32>
    %c1_18 = arith.constant 1 : index
    %c0_19 = arith.constant 0 : index
    %c0_20 = arith.constant 0 : index
    %68 = vector.load %arg2[%c1_18, %c0_19, %c0_20] : memref<9x16x8xf32, #tpu.memory_space<vmem>>, vector<1x16x8xf32>
    %69 = vector.shape_cast %68 : vector<1x16x8xf32> to vector<16x8xf32>
    %70 = vector.extract_strided_slice %69 {offsets = [0, 0], sizes = [16, 1], strides = [1, 1]} : vector<16x8xf32> to vector<16x1xf32>
    %71 = vector.extract_strided_slice %67 {offsets = [0, 0], sizes = [1, 256], strides = [1, 1]} : vector<8x256xf32> to vector<1x256xf32>
    %72 = vector.broadcast %70 : vector<16x1xf32> to vector<16x256xf32>
    %73 = vector.broadcast %71 : vector<1x256xf32> to vector<16x256xf32>
    %74 = arith.mulf %72, %73 : vector<16x256xf32>
    %75 = arith.addf %62, %74 : vector<16x256xf32>
    %76 = vector.extract_strided_slice %69 {offsets = [0, 1], sizes = [16, 1], strides = [1, 1]} : vector<16x8xf32> to vector<16x1xf32>
    %77 = vector.extract_strided_slice %67 {offsets = [1, 0], sizes = [1, 256], strides = [1, 1]} : vector<8x256xf32> to vector<1x256xf32>
    %78 = vector.broadcast %76 : vector<16x1xf32> to vector<16x256xf32>
    %79 = vector.broadcast %77 : vector<1x256xf32> to vector<16x256xf32>
    %80 = arith.mulf %78, %79 : vector<16x256xf32>
    %81 = arith.addf %75, %80 : vector<16x256xf32>
    %82 = vector.extract_strided_slice %69 {offsets = [0, 2], sizes = [16, 1], strides = [1, 1]} : vector<16x8xf32> to vector<16x1xf32>
    %83 = vector.extract_strided_slice %67 {offsets = [2, 0], sizes = [1, 256], strides = [1, 1]} : vector<8x256xf32> to vector<1x256xf32>
    %84 = vector.broadcast %82 : vector<16x1xf32> to vector<16x256xf32>
    %85 = vector.broadcast %83 : vector<1x256xf32> to vector<16x256xf32>
    %86 = arith.mulf %84, %85 : vector<16x256xf32>
    %87 = arith.addf %81, %86 : vector<16x256xf32>
    %88 = vector.extract_strided_slice %69 {offsets = [0, 3], sizes = [16, 1], strides = [1, 1]} : vector<16x8xf32> to vector<16x1xf32>
    %89 = vector.extract_strided_slice %67 {offsets = [3, 0], sizes = [1, 256], strides = [1, 1]} : vector<8x256xf32> to vector<1x256xf32>
    %90 = vector.broadcast %88 : vector<16x1xf32> to vector<16x256xf32>
    %91 = vector.broadcast %89 : vector<1x256xf32> to vector<16x256xf32>
    %92 = arith.mulf %90, %91 : vector<16x256xf32>
    %93 = arith.addf %87, %92 : vector<16x256xf32>
    %94 = vector.extract_strided_slice %69 {offsets = [0, 4], sizes = [16, 1], strides = [1, 1]} : vector<16x8xf32> to vector<16x1xf32>
    %95 = vector.extract_strided_slice %67 {offsets = [4, 0], sizes = [1, 256], strides = [1, 1]} : vector<8x256xf32> to vector<1x256xf32>
    %96 = vector.broadcast %94 : vector<16x1xf32> to vector<16x256xf32>
    %97 = vector.broadcast %95 : vector<1x256xf32> to vector<16x256xf32>
    %98 = arith.mulf %96, %97 : vector<16x256xf32>
    %99 = arith.addf %93, %98 : vector<16x256xf32>
    %100 = vector.extract_strided_slice %69 {offsets = [0, 5], sizes = [16, 1], strides = [1, 1]} : vector<16x8xf32> to vector<16x1xf32>
    %101 = vector.extract_strided_slice %67 {offsets = [5, 0], sizes = [1, 256], strides = [1, 1]} : vector<8x256xf32> to vector<1x256xf32>
    %102 = vector.broadcast %100 : vector<16x1xf32> to vector<16x256xf32>
    %103 = vector.broadcast %101 : vector<1x256xf32> to vector<16x256xf32>
    %104 = arith.mulf %102, %103 : vector<16x256xf32>
    %105 = arith.addf %99, %104 : vector<16x256xf32>
    %106 = vector.extract_strided_slice %69 {offsets = [0, 6], sizes = [16, 1], strides = [1, 1]} : vector<16x8xf32> to vector<16x1xf32>
    %107 = vector.extract_strided_slice %67 {offsets = [6, 0], sizes = [1, 256], strides = [1, 1]} : vector<8x256xf32> to vector<1x256xf32>
    %108 = vector.broadcast %106 : vector<16x1xf32> to vector<16x256xf32>
    %109 = vector.broadcast %107 : vector<1x256xf32> to vector<16x256xf32>
    %110 = arith.mulf %108, %109 : vector<16x256xf32>
    %111 = arith.addf %105, %110 : vector<16x256xf32>
    %112 = vector.extract_strided_slice %69 {offsets = [0, 7], sizes = [16, 1], strides = [1, 1]} : vector<16x8xf32> to vector<16x1xf32>
    %113 = vector.extract_strided_slice %67 {offsets = [7, 0], sizes = [1, 256], strides = [1, 1]} : vector<8x256xf32> to vector<1x256xf32>
    %114 = vector.broadcast %112 : vector<16x1xf32> to vector<16x256xf32>
    %115 = vector.broadcast %113 : vector<1x256xf32> to vector<16x256xf32>
    %116 = arith.mulf %114, %115 : vector<16x256xf32>
    %117 = arith.addf %111, %116 : vector<16x256xf32>
    %c0_21 = arith.constant 0 : index
    %c113 = arith.constant 113 : index
    %118 = vector.load %arg8[%c0_21, %c113] : memref<8x512xf32, #tpu.memory_space<vmem>>, vector<8x256xf32>
    %c2 = arith.constant 2 : index
    %c0_22 = arith.constant 0 : index
    %c0_23 = arith.constant 0 : index
    %119 = vector.load %arg6[%c2, %c0_22, %c0_23] : memref<9x1x256xf32, #tpu.memory_space<vmem>>, vector<1x1x256xf32>
    %120 = vector.shape_cast %119 : vector<1x1x256xf32> to vector<1x256xf32>
    %121 = vector.broadcast %120 : vector<1x256xf32> to vector<8x256xf32>
    %122 = arith.mulf %118, %121 : vector<8x256xf32>
    %c2_24 = arith.constant 2 : index
    %c0_25 = arith.constant 0 : index
    %c0_26 = arith.constant 0 : index
    %123 = vector.load %arg2[%c2_24, %c0_25, %c0_26] : memref<9x16x8xf32, #tpu.memory_space<vmem>>, vector<1x16x8xf32>
    %124 = vector.shape_cast %123 : vector<1x16x8xf32> to vector<16x8xf32>
    %125 = vector.extract_strided_slice %124 {offsets = [0, 0], sizes = [16, 1], strides = [1, 1]} : vector<16x8xf32> to vector<16x1xf32>
    %126 = vector.extract_strided_slice %122 {offsets = [0, 0], sizes = [1, 256], strides = [1, 1]} : vector<8x256xf32> to vector<1x256xf32>
    %127 = vector.broadcast %125 : vector<16x1xf32> to vector<16x256xf32>
    %128 = vector.broadcast %126 : vector<1x256xf32> to vector<16x256xf32>
    %129 = arith.mulf %127, %128 : vector<16x256xf32>
    %130 = arith.addf %117, %129 : vector<16x256xf32>
    %131 = vector.extract_strided_slice %124 {offsets = [0, 1], sizes = [16, 1], strides = [1, 1]} : vector<16x8xf32> to vector<16x1xf32>
    %132 = vector.extract_strided_slice %122 {offsets = [1, 0], sizes = [1, 256], strides = [1, 1]} : vector<8x256xf32> to vector<1x256xf32>
    %133 = vector.broadcast %131 : vector<16x1xf32> to vector<16x256xf32>
    %134 = vector.broadcast %132 : vector<1x256xf32> to vector<16x256xf32>
    %135 = arith.mulf %133, %134 : vector<16x256xf32>
    %136 = arith.addf %130, %135 : vector<16x256xf32>
    %137 = vector.extract_strided_slice %124 {offsets = [0, 2], sizes = [16, 1], strides = [1, 1]} : vector<16x8xf32> to vector<16x1xf32>
    %138 = vector.extract_strided_slice %122 {offsets = [2, 0], sizes = [1, 256], strides = [1, 1]} : vector<8x256xf32> to vector<1x256xf32>
    %139 = vector.broadcast %137 : vector<16x1xf32> to vector<16x256xf32>
    %140 = vector.broadcast %138 : vector<1x256xf32> to vector<16x256xf32>
    %141 = arith.mulf %139, %140 : vector<16x256xf32>
    %142 = arith.addf %136, %141 : vector<16x256xf32>
    %143 = vector.extract_strided_slice %124 {offsets = [0, 3], sizes = [16, 1], strides = [1, 1]} : vector<16x8xf32> to vector<16x1xf32>
    %144 = vector.extract_strided_slice %122 {offsets = [3, 0], sizes = [1, 256], strides = [1, 1]} : vector<8x256xf32> to vector<1x256xf32>
    %145 = vector.broadcast %143 : vector<16x1xf32> to vector<16x256xf32>
    %146 = vector.broadcast %144 : vector<1x256xf32> to vector<16x256xf32>
    %147 = arith.mulf %145, %146 : vector<16x256xf32>
    %148 = arith.addf %142, %147 : vector<16x256xf32>
    %149 = vector.extract_strided_slice %124 {offsets = [0, 4], sizes = [16, 1], strides = [1, 1]} : vector<16x8xf32> to vector<16x1xf32>
    %150 = vector.extract_strided_slice %122 {offsets = [4, 0], sizes = [1, 256], strides = [1, 1]} : vector<8x256xf32> to vector<1x256xf32>
    %151 = vector.broadcast %149 : vector<16x1xf32> to vector<16x256xf32>
    %152 = vector.broadcast %150 : vector<1x256xf32> to vector<16x256xf32>
    %153 = arith.mulf %151, %152 : vector<16x256xf32>
    %154 = arith.addf %148, %153 : vector<16x256xf32>
    %155 = vector.extract_strided_slice %124 {offsets = [0, 5], sizes = [16, 1], strides = [1, 1]} : vector<16x8xf32> to vector<16x1xf32>
    %156 = vector.extract_strided_slice %122 {offsets = [5, 0], sizes = [1, 256], strides = [1, 1]} : vector<8x256xf32> to vector<1x256xf32>
    %157 = vector.broadcast %155 : vector<16x1xf32> to vector<16x256xf32>
    %158 = vector.broadcast %156 : vector<1x256xf32> to vector<16x256xf32>
    %159 = arith.mulf %157, %158 : vector<16x256xf32>
    %160 = arith.addf %154, %159 : vector<16x256xf32>
    %161 = vector.extract_strided_slice %124 {offsets = [0, 6], sizes = [16, 1], strides = [1, 1]} : vector<16x8xf32> to vector<16x1xf32>
    %162 = vector.extract_strided_slice %122 {offsets = [6, 0], sizes = [1, 256], strides = [1, 1]} : vector<8x256xf32> to vector<1x256xf32>
    %163 = vector.broadcast %161 : vector<16x1xf32> to vector<16x256xf32>
    %164 = vector.broadcast %162 : vector<1x256xf32> to vector<16x256xf32>
    %165 = arith.mulf %163, %164 : vector<16x256xf32>
    %166 = arith.addf %160, %165 : vector<16x256xf32>
    %167 = vector.extract_strided_slice %124 {offsets = [0, 7], sizes = [16, 1], strides = [1, 1]} : vector<16x8xf32> to vector<16x1xf32>
    %168 = vector.extract_strided_slice %122 {offsets = [7, 0], sizes = [1, 256], strides = [1, 1]} : vector<8x256xf32> to vector<1x256xf32>
    %169 = vector.broadcast %167 : vector<16x1xf32> to vector<16x256xf32>
    %170 = vector.broadcast %168 : vector<1x256xf32> to vector<16x256xf32>
    %171 = arith.mulf %169, %170 : vector<16x256xf32>
    %172 = arith.addf %166, %171 : vector<16x256xf32>
    %c0_27 = arith.constant 0 : index
    %c127 = arith.constant 127 : index
    %173 = vector.load %arg8[%c0_27, %c127] : memref<8x512xf32, #tpu.memory_space<vmem>>, vector<8x256xf32>
    %c3 = arith.constant 3 : index
    %c0_28 = arith.constant 0 : index
    %c0_29 = arith.constant 0 : index
    %174 = vector.load %arg6[%c3, %c0_28, %c0_29] : memref<9x1x256xf32, #tpu.memory_space<vmem>>, vector<1x1x256xf32>
    %175 = vector.shape_cast %174 : vector<1x1x256xf32> to vector<1x256xf32>
    %176 = vector.broadcast %175 : vector<1x256xf32> to vector<8x256xf32>
    %177 = arith.mulf %173, %176 : vector<8x256xf32>
    %c3_30 = arith.constant 3 : index
    %c0_31 = arith.constant 0 : index
    %c0_32 = arith.constant 0 : index
    %178 = vector.load %arg2[%c3_30, %c0_31, %c0_32] : memref<9x16x8xf32, #tpu.memory_space<vmem>>, vector<1x16x8xf32>
    %179 = vector.shape_cast %178 : vector<1x16x8xf32> to vector<16x8xf32>
    %180 = vector.extract_strided_slice %179 {offsets = [0, 0], sizes = [16, 1], strides = [1, 1]} : vector<16x8xf32> to vector<16x1xf32>
    %181 = vector.extract_strided_slice %177 {offsets = [0, 0], sizes = [1, 256], strides = [1, 1]} : vector<8x256xf32> to vector<1x256xf32>
    %182 = vector.broadcast %180 : vector<16x1xf32> to vector<16x256xf32>
    %183 = vector.broadcast %181 : vector<1x256xf32> to vector<16x256xf32>
    %184 = arith.mulf %182, %183 : vector<16x256xf32>
    %185 = arith.addf %172, %184 : vector<16x256xf32>
    %186 = vector.extract_strided_slice %179 {offsets = [0, 1], sizes = [16, 1], strides = [1, 1]} : vector<16x8xf32> to vector<16x1xf32>
    %187 = vector.extract_strided_slice %177 {offsets = [1, 0], sizes = [1, 256], strides = [1, 1]} : vector<8x256xf32> to vector<1x256xf32>
    %188 = vector.broadcast %186 : vector<16x1xf32> to vector<16x256xf32>
    %189 = vector.broadcast %187 : vector<1x256xf32> to vector<16x256xf32>
    %190 = arith.mulf %188, %189 : vector<16x256xf32>
    %191 = arith.addf %185, %190 : vector<16x256xf32>
    %192 = vector.extract_strided_slice %179 {offsets = [0, 2], sizes = [16, 1], strides = [1, 1]} : vector<16x8xf32> to vector<16x1xf32>
    %193 = vector.extract_strided_slice %177 {offsets = [2, 0], sizes = [1, 256], strides = [1, 1]} : vector<8x256xf32> to vector<1x256xf32>
    %194 = vector.broadcast %192 : vector<16x1xf32> to vector<16x256xf32>
    %195 = vector.broadcast %193 : vector<1x256xf32> to vector<16x256xf32>
    %196 = arith.mulf %194, %195 : vector<16x256xf32>
    %197 = arith.addf %191, %196 : vector<16x256xf32>
    %198 = vector.extract_strided_slice %179 {offsets = [0, 3], sizes = [16, 1], strides = [1, 1]} : vector<16x8xf32> to vector<16x1xf32>
    %199 = vector.extract_strided_slice %177 {offsets = [3, 0], sizes = [1, 256], strides = [1, 1]} : vector<8x256xf32> to vector<1x256xf32>
    %200 = vector.broadcast %198 : vector<16x1xf32> to vector<16x256xf32>
    %201 = vector.broadcast %199 : vector<1x256xf32> to vector<16x256xf32>
    %202 = arith.mulf %200, %201 : vector<16x256xf32>
    %203 = arith.addf %197, %202 : vector<16x256xf32>
    %204 = vector.extract_strided_slice %179 {offsets = [0, 4], sizes = [16, 1], strides = [1, 1]} : vector<16x8xf32> to vector<16x1xf32>
    %205 = vector.extract_strided_slice %177 {offsets = [4, 0], sizes = [1, 256], strides = [1, 1]} : vector<8x256xf32> to vector<1x256xf32>
    %206 = vector.broadcast %204 : vector<16x1xf32> to vector<16x256xf32>
    %207 = vector.broadcast %205 : vector<1x256xf32> to vector<16x256xf32>
    %208 = arith.mulf %206, %207 : vector<16x256xf32>
    %209 = arith.addf %203, %208 : vector<16x256xf32>
    %210 = vector.extract_strided_slice %179 {offsets = [0, 5], sizes = [16, 1], strides = [1, 1]} : vector<16x8xf32> to vector<16x1xf32>
    %211 = vector.extract_strided_slice %177 {offsets = [5, 0], sizes = [1, 256], strides = [1, 1]} : vector<8x256xf32> to vector<1x256xf32>
    %212 = vector.broadcast %210 : vector<16x1xf32> to vector<16x256xf32>
    %213 = vector.broadcast %211 : vector<1x256xf32> to vector<16x256xf32>
    %214 = arith.mulf %212, %213 : vector<16x256xf32>
    %215 = arith.addf %209, %214 : vector<16x256xf32>
    %216 = vector.extract_strided_slice %179 {offsets = [0, 6], sizes = [16, 1], strides = [1, 1]} : vector<16x8xf32> to vector<16x1xf32>
    %217 = vector.extract_strided_slice %177 {offsets = [6, 0], sizes = [1, 256], strides = [1, 1]} : vector<8x256xf32> to vector<1x256xf32>
    %218 = vector.broadcast %216 : vector<16x1xf32> to vector<16x256xf32>
    %219 = vector.broadcast %217 : vector<1x256xf32> to vector<16x256xf32>
    %220 = arith.mulf %218, %219 : vector<16x256xf32>
    %221 = arith.addf %215, %220 : vector<16x256xf32>
    %222 = vector.extract_strided_slice %179 {offsets = [0, 7], sizes = [16, 1], strides = [1, 1]} : vector<16x8xf32> to vector<16x1xf32>
    %223 = vector.extract_strided_slice %177 {offsets = [7, 0], sizes = [1, 256], strides = [1, 1]} : vector<8x256xf32> to vector<1x256xf32>
    %224 = vector.broadcast %222 : vector<16x1xf32> to vector<16x256xf32>
    %225 = vector.broadcast %223 : vector<1x256xf32> to vector<16x256xf32>
    %226 = arith.mulf %224, %225 : vector<16x256xf32>
    %227 = arith.addf %221, %226 : vector<16x256xf32>
    %c0_33 = arith.constant 0 : index
    %c128_34 = arith.constant 128 : index
    %228 = vector.load %arg8[%c0_33, %c128_34] : memref<8x512xf32, #tpu.memory_space<vmem>>, vector<8x256xf32>
    %c4 = arith.constant 4 : index
    %c0_35 = arith.constant 0 : index
    %c0_36 = arith.constant 0 : index
    %229 = vector.load %arg6[%c4, %c0_35, %c0_36] : memref<9x1x256xf32, #tpu.memory_space<vmem>>, vector<1x1x256xf32>
    %230 = vector.shape_cast %229 : vector<1x1x256xf32> to vector<1x256xf32>
    %231 = vector.broadcast %230 : vector<1x256xf32> to vector<8x256xf32>
    %232 = arith.mulf %228, %231 : vector<8x256xf32>
    %c4_37 = arith.constant 4 : index
    %c0_38 = arith.constant 0 : index
    %c0_39 = arith.constant 0 : index
    %233 = vector.load %arg2[%c4_37, %c0_38, %c0_39] : memref<9x16x8xf32, #tpu.memory_space<vmem>>, vector<1x16x8xf32>
    %234 = vector.shape_cast %233 : vector<1x16x8xf32> to vector<16x8xf32>
    %235 = vector.extract_strided_slice %234 {offsets = [0, 0], sizes = [16, 1], strides = [1, 1]} : vector<16x8xf32> to vector<16x1xf32>
    %236 = vector.extract_strided_slice %232 {offsets = [0, 0], sizes = [1, 256], strides = [1, 1]} : vector<8x256xf32> to vector<1x256xf32>
    %237 = vector.broadcast %235 : vector<16x1xf32> to vector<16x256xf32>
    %238 = vector.broadcast %236 : vector<1x256xf32> to vector<16x256xf32>
    %239 = arith.mulf %237, %238 : vector<16x256xf32>
    %240 = arith.addf %227, %239 : vector<16x256xf32>
    %241 = vector.extract_strided_slice %234 {offsets = [0, 1], sizes = [16, 1], strides = [1, 1]} : vector<16x8xf32> to vector<16x1xf32>
    %242 = vector.extract_strided_slice %232 {offsets = [1, 0], sizes = [1, 256], strides = [1, 1]} : vector<8x256xf32> to vector<1x256xf32>
    %243 = vector.broadcast %241 : vector<16x1xf32> to vector<16x256xf32>
    %244 = vector.broadcast %242 : vector<1x256xf32> to vector<16x256xf32>
    %245 = arith.mulf %243, %244 : vector<16x256xf32>
    %246 = arith.addf %240, %245 : vector<16x256xf32>
    %247 = vector.extract_strided_slice %234 {offsets = [0, 2], sizes = [16, 1], strides = [1, 1]} : vector<16x8xf32> to vector<16x1xf32>
    %248 = vector.extract_strided_slice %232 {offsets = [2, 0], sizes = [1, 256], strides = [1, 1]} : vector<8x256xf32> to vector<1x256xf32>
    %249 = vector.broadcast %247 : vector<16x1xf32> to vector<16x256xf32>
    %250 = vector.broadcast %248 : vector<1x256xf32> to vector<16x256xf32>
    %251 = arith.mulf %249, %250 : vector<16x256xf32>
    %252 = arith.addf %246, %251 : vector<16x256xf32>
    %253 = vector.extract_strided_slice %234 {offsets = [0, 3], sizes = [16, 1], strides = [1, 1]} : vector<16x8xf32> to vector<16x1xf32>
    %254 = vector.extract_strided_slice %232 {offsets = [3, 0], sizes = [1, 256], strides = [1, 1]} : vector<8x256xf32> to vector<1x256xf32>
    %255 = vector.broadcast %253 : vector<16x1xf32> to vector<16x256xf32>
    %256 = vector.broadcast %254 : vector<1x256xf32> to vector<16x256xf32>
    %257 = arith.mulf %255, %256 : vector<16x256xf32>
    %258 = arith.addf %252, %257 : vector<16x256xf32>
    %259 = vector.extract_strided_slice %234 {offsets = [0, 4], sizes = [16, 1], strides = [1, 1]} : vector<16x8xf32> to vector<16x1xf32>
    %260 = vector.extract_strided_slice %232 {offsets = [4, 0], sizes = [1, 256], strides = [1, 1]} : vector<8x256xf32> to vector<1x256xf32>
    %261 = vector.broadcast %259 : vector<16x1xf32> to vector<16x256xf32>
    %262 = vector.broadcast %260 : vector<1x256xf32> to vector<16x256xf32>
    %263 = arith.mulf %261, %262 : vector<16x256xf32>
    %264 = arith.addf %258, %263 : vector<16x256xf32>
    %265 = vector.extract_strided_slice %234 {offsets = [0, 5], sizes = [16, 1], strides = [1, 1]} : vector<16x8xf32> to vector<16x1xf32>
    %266 = vector.extract_strided_slice %232 {offsets = [5, 0], sizes = [1, 256], strides = [1, 1]} : vector<8x256xf32> to vector<1x256xf32>
    %267 = vector.broadcast %265 : vector<16x1xf32> to vector<16x256xf32>
    %268 = vector.broadcast %266 : vector<1x256xf32> to vector<16x256xf32>
    %269 = arith.mulf %267, %268 : vector<16x256xf32>
    %270 = arith.addf %264, %269 : vector<16x256xf32>
    %271 = vector.extract_strided_slice %234 {offsets = [0, 6], sizes = [16, 1], strides = [1, 1]} : vector<16x8xf32> to vector<16x1xf32>
    %272 = vector.extract_strided_slice %232 {offsets = [6, 0], sizes = [1, 256], strides = [1, 1]} : vector<8x256xf32> to vector<1x256xf32>
    %273 = vector.broadcast %271 : vector<16x1xf32> to vector<16x256xf32>
    %274 = vector.broadcast %272 : vector<1x256xf32> to vector<16x256xf32>
    %275 = arith.mulf %273, %274 : vector<16x256xf32>
    %276 = arith.addf %270, %275 : vector<16x256xf32>
    %277 = vector.extract_strided_slice %234 {offsets = [0, 7], sizes = [16, 1], strides = [1, 1]} : vector<16x8xf32> to vector<16x1xf32>
    %278 = vector.extract_strided_slice %232 {offsets = [7, 0], sizes = [1, 256], strides = [1, 1]} : vector<8x256xf32> to vector<1x256xf32>
    %279 = vector.broadcast %277 : vector<16x1xf32> to vector<16x256xf32>
    %280 = vector.broadcast %278 : vector<1x256xf32> to vector<16x256xf32>
    %281 = arith.mulf %279, %280 : vector<16x256xf32>
    %282 = arith.addf %276, %281 : vector<16x256xf32>
    %c0_40 = arith.constant 0 : index
    %c129 = arith.constant 129 : index
    %283 = vector.load %arg8[%c0_40, %c129] : memref<8x512xf32, #tpu.memory_space<vmem>>, vector<8x256xf32>
    %c5 = arith.constant 5 : index
    %c0_41 = arith.constant 0 : index
    %c0_42 = arith.constant 0 : index
    %284 = vector.load %arg6[%c5, %c0_41, %c0_42] : memref<9x1x256xf32, #tpu.memory_space<vmem>>, vector<1x1x256xf32>
    %285 = vector.shape_cast %284 : vector<1x1x256xf32> to vector<1x256xf32>
    %286 = vector.broadcast %285 : vector<1x256xf32> to vector<8x256xf32>
    %287 = arith.mulf %283, %286 : vector<8x256xf32>
    %c5_43 = arith.constant 5 : index
    %c0_44 = arith.constant 0 : index
    %c0_45 = arith.constant 0 : index
    %288 = vector.load %arg2[%c5_43, %c0_44, %c0_45] : memref<9x16x8xf32, #tpu.memory_space<vmem>>, vector<1x16x8xf32>
    %289 = vector.shape_cast %288 : vector<1x16x8xf32> to vector<16x8xf32>
    %290 = vector.extract_strided_slice %289 {offsets = [0, 0], sizes = [16, 1], strides = [1, 1]} : vector<16x8xf32> to vector<16x1xf32>
    %291 = vector.extract_strided_slice %287 {offsets = [0, 0], sizes = [1, 256], strides = [1, 1]} : vector<8x256xf32> to vector<1x256xf32>
    %292 = vector.broadcast %290 : vector<16x1xf32> to vector<16x256xf32>
    %293 = vector.broadcast %291 : vector<1x256xf32> to vector<16x256xf32>
    %294 = arith.mulf %292, %293 : vector<16x256xf32>
    %295 = arith.addf %282, %294 : vector<16x256xf32>
    %296 = vector.extract_strided_slice %289 {offsets = [0, 1], sizes = [16, 1], strides = [1, 1]} : vector<16x8xf32> to vector<16x1xf32>
    %297 = vector.extract_strided_slice %287 {offsets = [1, 0], sizes = [1, 256], strides = [1, 1]} : vector<8x256xf32> to vector<1x256xf32>
    %298 = vector.broadcast %296 : vector<16x1xf32> to vector<16x256xf32>
    %299 = vector.broadcast %297 : vector<1x256xf32> to vector<16x256xf32>
    %300 = arith.mulf %298, %299 : vector<16x256xf32>
    %301 = arith.addf %295, %300 : vector<16x256xf32>
    %302 = vector.extract_strided_slice %289 {offsets = [0, 2], sizes = [16, 1], strides = [1, 1]} : vector<16x8xf32> to vector<16x1xf32>
    %303 = vector.extract_strided_slice %287 {offsets = [2, 0], sizes = [1, 256], strides = [1, 1]} : vector<8x256xf32> to vector<1x256xf32>
    %304 = vector.broadcast %302 : vector<16x1xf32> to vector<16x256xf32>
    %305 = vector.broadcast %303 : vector<1x256xf32> to vector<16x256xf32>
    %306 = arith.mulf %304, %305 : vector<16x256xf32>
    %307 = arith.addf %301, %306 : vector<16x256xf32>
    %308 = vector.extract_strided_slice %289 {offsets = [0, 3], sizes = [16, 1], strides = [1, 1]} : vector<16x8xf32> to vector<16x1xf32>
    %309 = vector.extract_strided_slice %287 {offsets = [3, 0], sizes = [1, 256], strides = [1, 1]} : vector<8x256xf32> to vector<1x256xf32>
    %310 = vector.broadcast %308 : vector<16x1xf32> to vector<16x256xf32>
    %311 = vector.broadcast %309 : vector<1x256xf32> to vector<16x256xf32>
    %312 = arith.mulf %310, %311 : vector<16x256xf32>
    %313 = arith.addf %307, %312 : vector<16x256xf32>
    %314 = vector.extract_strided_slice %289 {offsets = [0, 4], sizes = [16, 1], strides = [1, 1]} : vector<16x8xf32> to vector<16x1xf32>
    %315 = vector.extract_strided_slice %287 {offsets = [4, 0], sizes = [1, 256], strides = [1, 1]} : vector<8x256xf32> to vector<1x256xf32>
    %316 = vector.broadcast %314 : vector<16x1xf32> to vector<16x256xf32>
    %317 = vector.broadcast %315 : vector<1x256xf32> to vector<16x256xf32>
    %318 = arith.mulf %316, %317 : vector<16x256xf32>
    %319 = arith.addf %313, %318 : vector<16x256xf32>
    %320 = vector.extract_strided_slice %289 {offsets = [0, 5], sizes = [16, 1], strides = [1, 1]} : vector<16x8xf32> to vector<16x1xf32>
    %321 = vector.extract_strided_slice %287 {offsets = [5, 0], sizes = [1, 256], strides = [1, 1]} : vector<8x256xf32> to vector<1x256xf32>
    %322 = vector.broadcast %320 : vector<16x1xf32> to vector<16x256xf32>
    %323 = vector.broadcast %321 : vector<1x256xf32> to vector<16x256xf32>
    %324 = arith.mulf %322, %323 : vector<16x256xf32>
    %325 = arith.addf %319, %324 : vector<16x256xf32>
    %326 = vector.extract_strided_slice %289 {offsets = [0, 6], sizes = [16, 1], strides = [1, 1]} : vector<16x8xf32> to vector<16x1xf32>
    %327 = vector.extract_strided_slice %287 {offsets = [6, 0], sizes = [1, 256], strides = [1, 1]} : vector<8x256xf32> to vector<1x256xf32>
    %328 = vector.broadcast %326 : vector<16x1xf32> to vector<16x256xf32>
    %329 = vector.broadcast %327 : vector<1x256xf32> to vector<16x256xf32>
    %330 = arith.mulf %328, %329 : vector<16x256xf32>
    %331 = arith.addf %325, %330 : vector<16x256xf32>
    %332 = vector.extract_strided_slice %289 {offsets = [0, 7], sizes = [16, 1], strides = [1, 1]} : vector<16x8xf32> to vector<16x1xf32>
    %333 = vector.extract_strided_slice %287 {offsets = [7, 0], sizes = [1, 256], strides = [1, 1]} : vector<8x256xf32> to vector<1x256xf32>
    %334 = vector.broadcast %332 : vector<16x1xf32> to vector<16x256xf32>
    %335 = vector.broadcast %333 : vector<1x256xf32> to vector<16x256xf32>
    %336 = arith.mulf %334, %335 : vector<16x256xf32>
    %337 = arith.addf %331, %336 : vector<16x256xf32>
    %c0_46 = arith.constant 0 : index
    %c143 = arith.constant 143 : index
    %338 = vector.load %arg8[%c0_46, %c143] : memref<8x512xf32, #tpu.memory_space<vmem>>, vector<8x256xf32>
    %c6 = arith.constant 6 : index
    %c0_47 = arith.constant 0 : index
    %c0_48 = arith.constant 0 : index
    %339 = vector.load %arg6[%c6, %c0_47, %c0_48] : memref<9x1x256xf32, #tpu.memory_space<vmem>>, vector<1x1x256xf32>
    %340 = vector.shape_cast %339 : vector<1x1x256xf32> to vector<1x256xf32>
    %341 = vector.broadcast %340 : vector<1x256xf32> to vector<8x256xf32>
    %342 = arith.mulf %338, %341 : vector<8x256xf32>
    %c6_49 = arith.constant 6 : index
    %c0_50 = arith.constant 0 : index
    %c0_51 = arith.constant 0 : index
    %343 = vector.load %arg2[%c6_49, %c0_50, %c0_51] : memref<9x16x8xf32, #tpu.memory_space<vmem>>, vector<1x16x8xf32>
    %344 = vector.shape_cast %343 : vector<1x16x8xf32> to vector<16x8xf32>
    %345 = vector.extract_strided_slice %344 {offsets = [0, 0], sizes = [16, 1], strides = [1, 1]} : vector<16x8xf32> to vector<16x1xf32>
    %346 = vector.extract_strided_slice %342 {offsets = [0, 0], sizes = [1, 256], strides = [1, 1]} : vector<8x256xf32> to vector<1x256xf32>
    %347 = vector.broadcast %345 : vector<16x1xf32> to vector<16x256xf32>
    %348 = vector.broadcast %346 : vector<1x256xf32> to vector<16x256xf32>
    %349 = arith.mulf %347, %348 : vector<16x256xf32>
    %350 = arith.addf %337, %349 : vector<16x256xf32>
    %351 = vector.extract_strided_slice %344 {offsets = [0, 1], sizes = [16, 1], strides = [1, 1]} : vector<16x8xf32> to vector<16x1xf32>
    %352 = vector.extract_strided_slice %342 {offsets = [1, 0], sizes = [1, 256], strides = [1, 1]} : vector<8x256xf32> to vector<1x256xf32>
    %353 = vector.broadcast %351 : vector<16x1xf32> to vector<16x256xf32>
    %354 = vector.broadcast %352 : vector<1x256xf32> to vector<16x256xf32>
    %355 = arith.mulf %353, %354 : vector<16x256xf32>
    %356 = arith.addf %350, %355 : vector<16x256xf32>
    %357 = vector.extract_strided_slice %344 {offsets = [0, 2], sizes = [16, 1], strides = [1, 1]} : vector<16x8xf32> to vector<16x1xf32>
    %358 = vector.extract_strided_slice %342 {offsets = [2, 0], sizes = [1, 256], strides = [1, 1]} : vector<8x256xf32> to vector<1x256xf32>
    %359 = vector.broadcast %357 : vector<16x1xf32> to vector<16x256xf32>
    %360 = vector.broadcast %358 : vector<1x256xf32> to vector<16x256xf32>
    %361 = arith.mulf %359, %360 : vector<16x256xf32>
    %362 = arith.addf %356, %361 : vector<16x256xf32>
    %363 = vector.extract_strided_slice %344 {offsets = [0, 3], sizes = [16, 1], strides = [1, 1]} : vector<16x8xf32> to vector<16x1xf32>
    %364 = vector.extract_strided_slice %342 {offsets = [3, 0], sizes = [1, 256], strides = [1, 1]} : vector<8x256xf32> to vector<1x256xf32>
    %365 = vector.broadcast %363 : vector<16x1xf32> to vector<16x256xf32>
    %366 = vector.broadcast %364 : vector<1x256xf32> to vector<16x256xf32>
    %367 = arith.mulf %365, %366 : vector<16x256xf32>
    %368 = arith.addf %362, %367 : vector<16x256xf32>
    %369 = vector.extract_strided_slice %344 {offsets = [0, 4], sizes = [16, 1], strides = [1, 1]} : vector<16x8xf32> to vector<16x1xf32>
    %370 = vector.extract_strided_slice %342 {offsets = [4, 0], sizes = [1, 256], strides = [1, 1]} : vector<8x256xf32> to vector<1x256xf32>
    %371 = vector.broadcast %369 : vector<16x1xf32> to vector<16x256xf32>
    %372 = vector.broadcast %370 : vector<1x256xf32> to vector<16x256xf32>
    %373 = arith.mulf %371, %372 : vector<16x256xf32>
    %374 = arith.addf %368, %373 : vector<16x256xf32>
    %375 = vector.extract_strided_slice %344 {offsets = [0, 5], sizes = [16, 1], strides = [1, 1]} : vector<16x8xf32> to vector<16x1xf32>
    %376 = vector.extract_strided_slice %342 {offsets = [5, 0], sizes = [1, 256], strides = [1, 1]} : vector<8x256xf32> to vector<1x256xf32>
    %377 = vector.broadcast %375 : vector<16x1xf32> to vector<16x256xf32>
    %378 = vector.broadcast %376 : vector<1x256xf32> to vector<16x256xf32>
    %379 = arith.mulf %377, %378 : vector<16x256xf32>
    %380 = arith.addf %374, %379 : vector<16x256xf32>
    %381 = vector.extract_strided_slice %344 {offsets = [0, 6], sizes = [16, 1], strides = [1, 1]} : vector<16x8xf32> to vector<16x1xf32>
    %382 = vector.extract_strided_slice %342 {offsets = [6, 0], sizes = [1, 256], strides = [1, 1]} : vector<8x256xf32> to vector<1x256xf32>
    %383 = vector.broadcast %381 : vector<16x1xf32> to vector<16x256xf32>
    %384 = vector.broadcast %382 : vector<1x256xf32> to vector<16x256xf32>
    %385 = arith.mulf %383, %384 : vector<16x256xf32>
    %386 = arith.addf %380, %385 : vector<16x256xf32>
    %387 = vector.extract_strided_slice %344 {offsets = [0, 7], sizes = [16, 1], strides = [1, 1]} : vector<16x8xf32> to vector<16x1xf32>
    %388 = vector.extract_strided_slice %342 {offsets = [7, 0], sizes = [1, 256], strides = [1, 1]} : vector<8x256xf32> to vector<1x256xf32>
    %389 = vector.broadcast %387 : vector<16x1xf32> to vector<16x256xf32>
    %390 = vector.broadcast %388 : vector<1x256xf32> to vector<16x256xf32>
    %391 = arith.mulf %389, %390 : vector<16x256xf32>
    %392 = arith.addf %386, %391 : vector<16x256xf32>
    %c0_52 = arith.constant 0 : index
    %c144 = arith.constant 144 : index
    %393 = vector.load %arg8[%c0_52, %c144] : memref<8x512xf32, #tpu.memory_space<vmem>>, vector<8x256xf32>
    %c7 = arith.constant 7 : index
    %c0_53 = arith.constant 0 : index
    %c0_54 = arith.constant 0 : index
    %394 = vector.load %arg6[%c7, %c0_53, %c0_54] : memref<9x1x256xf32, #tpu.memory_space<vmem>>, vector<1x1x256xf32>
    %395 = vector.shape_cast %394 : vector<1x1x256xf32> to vector<1x256xf32>
    %396 = vector.broadcast %395 : vector<1x256xf32> to vector<8x256xf32>
    %397 = arith.mulf %393, %396 : vector<8x256xf32>
    %c7_55 = arith.constant 7 : index
    %c0_56 = arith.constant 0 : index
    %c0_57 = arith.constant 0 : index
    %398 = vector.load %arg2[%c7_55, %c0_56, %c0_57] : memref<9x16x8xf32, #tpu.memory_space<vmem>>, vector<1x16x8xf32>
    %399 = vector.shape_cast %398 : vector<1x16x8xf32> to vector<16x8xf32>
    %400 = vector.extract_strided_slice %399 {offsets = [0, 0], sizes = [16, 1], strides = [1, 1]} : vector<16x8xf32> to vector<16x1xf32>
    %401 = vector.extract_strided_slice %397 {offsets = [0, 0], sizes = [1, 256], strides = [1, 1]} : vector<8x256xf32> to vector<1x256xf32>
    %402 = vector.broadcast %400 : vector<16x1xf32> to vector<16x256xf32>
    %403 = vector.broadcast %401 : vector<1x256xf32> to vector<16x256xf32>
    %404 = arith.mulf %402, %403 : vector<16x256xf32>
    %405 = arith.addf %392, %404 : vector<16x256xf32>
    %406 = vector.extract_strided_slice %399 {offsets = [0, 1], sizes = [16, 1], strides = [1, 1]} : vector<16x8xf32> to vector<16x1xf32>
    %407 = vector.extract_strided_slice %397 {offsets = [1, 0], sizes = [1, 256], strides = [1, 1]} : vector<8x256xf32> to vector<1x256xf32>
    %408 = vector.broadcast %406 : vector<16x1xf32> to vector<16x256xf32>
    %409 = vector.broadcast %407 : vector<1x256xf32> to vector<16x256xf32>
    %410 = arith.mulf %408, %409 : vector<16x256xf32>
    %411 = arith.addf %405, %410 : vector<16x256xf32>
    %412 = vector.extract_strided_slice %399 {offsets = [0, 2], sizes = [16, 1], strides = [1, 1]} : vector<16x8xf32> to vector<16x1xf32>
    %413 = vector.extract_strided_slice %397 {offsets = [2, 0], sizes = [1, 256], strides = [1, 1]} : vector<8x256xf32> to vector<1x256xf32>
    %414 = vector.broadcast %412 : vector<16x1xf32> to vector<16x256xf32>
    %415 = vector.broadcast %413 : vector<1x256xf32> to vector<16x256xf32>
    %416 = arith.mulf %414, %415 : vector<16x256xf32>
    %417 = arith.addf %411, %416 : vector<16x256xf32>
    %418 = vector.extract_strided_slice %399 {offsets = [0, 3], sizes = [16, 1], strides = [1, 1]} : vector<16x8xf32> to vector<16x1xf32>
    %419 = vector.extract_strided_slice %397 {offsets = [3, 0], sizes = [1, 256], strides = [1, 1]} : vector<8x256xf32> to vector<1x256xf32>
    %420 = vector.broadcast %418 : vector<16x1xf32> to vector<16x256xf32>
    %421 = vector.broadcast %419 : vector<1x256xf32> to vector<16x256xf32>
    %422 = arith.mulf %420, %421 : vector<16x256xf32>
    %423 = arith.addf %417, %422 : vector<16x256xf32>
    %424 = vector.extract_strided_slice %399 {offsets = [0, 4], sizes = [16, 1], strides = [1, 1]} : vector<16x8xf32> to vector<16x1xf32>
    %425 = vector.extract_strided_slice %397 {offsets = [4, 0], sizes = [1, 256], strides = [1, 1]} : vector<8x256xf32> to vector<1x256xf32>
    %426 = vector.broadcast %424 : vector<16x1xf32> to vector<16x256xf32>
    %427 = vector.broadcast %425 : vector<1x256xf32> to vector<16x256xf32>
    %428 = arith.mulf %426, %427 : vector<16x256xf32>
    %429 = arith.addf %423, %428 : vector<16x256xf32>
    %430 = vector.extract_strided_slice %399 {offsets = [0, 5], sizes = [16, 1], strides = [1, 1]} : vector<16x8xf32> to vector<16x1xf32>
    %431 = vector.extract_strided_slice %397 {offsets = [5, 0], sizes = [1, 256], strides = [1, 1]} : vector<8x256xf32> to vector<1x256xf32>
    %432 = vector.broadcast %430 : vector<16x1xf32> to vector<16x256xf32>
    %433 = vector.broadcast %431 : vector<1x256xf32> to vector<16x256xf32>
    %434 = arith.mulf %432, %433 : vector<16x256xf32>
    %435 = arith.addf %429, %434 : vector<16x256xf32>
    %436 = vector.extract_strided_slice %399 {offsets = [0, 6], sizes = [16, 1], strides = [1, 1]} : vector<16x8xf32> to vector<16x1xf32>
    %437 = vector.extract_strided_slice %397 {offsets = [6, 0], sizes = [1, 256], strides = [1, 1]} : vector<8x256xf32> to vector<1x256xf32>
    %438 = vector.broadcast %436 : vector<16x1xf32> to vector<16x256xf32>
    %439 = vector.broadcast %437 : vector<1x256xf32> to vector<16x256xf32>
    %440 = arith.mulf %438, %439 : vector<16x256xf32>
    %441 = arith.addf %435, %440 : vector<16x256xf32>
    %442 = vector.extract_strided_slice %399 {offsets = [0, 7], sizes = [16, 1], strides = [1, 1]} : vector<16x8xf32> to vector<16x1xf32>
    %443 = vector.extract_strided_slice %397 {offsets = [7, 0], sizes = [1, 256], strides = [1, 1]} : vector<8x256xf32> to vector<1x256xf32>
    %444 = vector.broadcast %442 : vector<16x1xf32> to vector<16x256xf32>
    %445 = vector.broadcast %443 : vector<1x256xf32> to vector<16x256xf32>
    %446 = arith.mulf %444, %445 : vector<16x256xf32>
    %447 = arith.addf %441, %446 : vector<16x256xf32>
    %c0_58 = arith.constant 0 : index
    %c145 = arith.constant 145 : index
    %448 = vector.load %arg8[%c0_58, %c145] : memref<8x512xf32, #tpu.memory_space<vmem>>, vector<8x256xf32>
    %c8 = arith.constant 8 : index
    %c0_59 = arith.constant 0 : index
    %c0_60 = arith.constant 0 : index
    %449 = vector.load %arg6[%c8, %c0_59, %c0_60] : memref<9x1x256xf32, #tpu.memory_space<vmem>>, vector<1x1x256xf32>
    %450 = vector.shape_cast %449 : vector<1x1x256xf32> to vector<1x256xf32>
    %451 = vector.broadcast %450 : vector<1x256xf32> to vector<8x256xf32>
    %452 = arith.mulf %448, %451 : vector<8x256xf32>
    %c8_61 = arith.constant 8 : index
    %c0_62 = arith.constant 0 : index
    %c0_63 = arith.constant 0 : index
    %453 = vector.load %arg2[%c8_61, %c0_62, %c0_63] : memref<9x16x8xf32, #tpu.memory_space<vmem>>, vector<1x16x8xf32>
    %454 = vector.shape_cast %453 : vector<1x16x8xf32> to vector<16x8xf32>
    %455 = vector.extract_strided_slice %454 {offsets = [0, 0], sizes = [16, 1], strides = [1, 1]} : vector<16x8xf32> to vector<16x1xf32>
    %456 = vector.extract_strided_slice %452 {offsets = [0, 0], sizes = [1, 256], strides = [1, 1]} : vector<8x256xf32> to vector<1x256xf32>
    %457 = vector.broadcast %455 : vector<16x1xf32> to vector<16x256xf32>
    %458 = vector.broadcast %456 : vector<1x256xf32> to vector<16x256xf32>
    %459 = arith.mulf %457, %458 : vector<16x256xf32>
    %460 = arith.addf %447, %459 : vector<16x256xf32>
    %461 = vector.extract_strided_slice %454 {offsets = [0, 1], sizes = [16, 1], strides = [1, 1]} : vector<16x8xf32> to vector<16x1xf32>
    %462 = vector.extract_strided_slice %452 {offsets = [1, 0], sizes = [1, 256], strides = [1, 1]} : vector<8x256xf32> to vector<1x256xf32>
    %463 = vector.broadcast %461 : vector<16x1xf32> to vector<16x256xf32>
    %464 = vector.broadcast %462 : vector<1x256xf32> to vector<16x256xf32>
    %465 = arith.mulf %463, %464 : vector<16x256xf32>
    %466 = arith.addf %460, %465 : vector<16x256xf32>
    %467 = vector.extract_strided_slice %454 {offsets = [0, 2], sizes = [16, 1], strides = [1, 1]} : vector<16x8xf32> to vector<16x1xf32>
    %468 = vector.extract_strided_slice %452 {offsets = [2, 0], sizes = [1, 256], strides = [1, 1]} : vector<8x256xf32> to vector<1x256xf32>
    %469 = vector.broadcast %467 : vector<16x1xf32> to vector<16x256xf32>
    %470 = vector.broadcast %468 : vector<1x256xf32> to vector<16x256xf32>
    %471 = arith.mulf %469, %470 : vector<16x256xf32>
    %472 = arith.addf %466, %471 : vector<16x256xf32>
    %473 = vector.extract_strided_slice %454 {offsets = [0, 3], sizes = [16, 1], strides = [1, 1]} : vector<16x8xf32> to vector<16x1xf32>
    %474 = vector.extract_strided_slice %452 {offsets = [3, 0], sizes = [1, 256], strides = [1, 1]} : vector<8x256xf32> to vector<1x256xf32>
    %475 = vector.broadcast %473 : vector<16x1xf32> to vector<16x256xf32>
    %476 = vector.broadcast %474 : vector<1x256xf32> to vector<16x256xf32>
    %477 = arith.mulf %475, %476 : vector<16x256xf32>
    %478 = arith.addf %472, %477 : vector<16x256xf32>
    %479 = vector.extract_strided_slice %454 {offsets = [0, 4], sizes = [16, 1], strides = [1, 1]} : vector<16x8xf32> to vector<16x1xf32>
    %480 = vector.extract_strided_slice %452 {offsets = [4, 0], sizes = [1, 256], strides = [1, 1]} : vector<8x256xf32> to vector<1x256xf32>
    %481 = vector.broadcast %479 : vector<16x1xf32> to vector<16x256xf32>
    %482 = vector.broadcast %480 : vector<1x256xf32> to vector<16x256xf32>
    %483 = arith.mulf %481, %482 : vector<16x256xf32>
    %484 = arith.addf %478, %483 : vector<16x256xf32>
    %485 = vector.extract_strided_slice %454 {offsets = [0, 5], sizes = [16, 1], strides = [1, 1]} : vector<16x8xf32> to vector<16x1xf32>
    %486 = vector.extract_strided_slice %452 {offsets = [5, 0], sizes = [1, 256], strides = [1, 1]} : vector<8x256xf32> to vector<1x256xf32>
    %487 = vector.broadcast %485 : vector<16x1xf32> to vector<16x256xf32>
    %488 = vector.broadcast %486 : vector<1x256xf32> to vector<16x256xf32>
    %489 = arith.mulf %487, %488 : vector<16x256xf32>
    %490 = arith.addf %484, %489 : vector<16x256xf32>
    %491 = vector.extract_strided_slice %454 {offsets = [0, 6], sizes = [16, 1], strides = [1, 1]} : vector<16x8xf32> to vector<16x1xf32>
    %492 = vector.extract_strided_slice %452 {offsets = [6, 0], sizes = [1, 256], strides = [1, 1]} : vector<8x256xf32> to vector<1x256xf32>
    %493 = vector.broadcast %491 : vector<16x1xf32> to vector<16x256xf32>
    %494 = vector.broadcast %492 : vector<1x256xf32> to vector<16x256xf32>
    %495 = arith.mulf %493, %494 : vector<16x256xf32>
    %496 = arith.addf %490, %495 : vector<16x256xf32>
    %497 = vector.extract_strided_slice %454 {offsets = [0, 7], sizes = [16, 1], strides = [1, 1]} : vector<16x8xf32> to vector<16x1xf32>
    %498 = vector.extract_strided_slice %452 {offsets = [7, 0], sizes = [1, 256], strides = [1, 1]} : vector<8x256xf32> to vector<1x256xf32>
    %499 = vector.broadcast %497 : vector<16x1xf32> to vector<16x256xf32>
    %500 = vector.broadcast %498 : vector<1x256xf32> to vector<16x256xf32>
    %501 = arith.mulf %499, %500 : vector<16x256xf32>
    %502 = arith.addf %496, %501 : vector<16x256xf32>
    %c0_64 = arith.constant 0 : index
    %c0_65 = arith.constant 0 : index
    %503 = vector.load %arg3[%c0_64, %c0_65] : memref<16x1xf32, #tpu.memory_space<vmem>>, vector<16x1xf32>
    %504 = vector.broadcast %503 : vector<16x1xf32> to vector<16x256xf32>
    %505 = arith.addf %502, %504 : vector<16x256xf32>
    %cst_66 = arith.constant 0.707106769 : f32
    %506 = vector.broadcast %cst_66 : f32 to vector<16x256xf32>
    %507 = arith.mulf %505, %506 : vector<16x256xf32>
    %cst_67 = arith.constant 0.000000e+00 : f32
    %508 = vector.broadcast %cst_67 : f32 to vector<16x256xf32>
    %509 = arith.cmpf oge, %507, %508 : vector<16x256xf32>
    %cst_68 = arith.constant 0.000000e+00 : f32
    %510 = vector.broadcast %cst_68 : f32 to vector<16x256xf32>
    %511 = arith.subf %510, %507 : vector<16x256xf32>
    %512 = arith.select %509, %507, %511 : vector<16x256xi1>, vector<16x256xf32>
    %cst_69 = arith.constant 0.327591091 : f32
    %513 = vector.broadcast %cst_69 : f32 to vector<16x256xf32>
    %514 = arith.mulf %513, %512 : vector<16x256xf32>
    %cst_70 = arith.constant 1.000000e+00 : f32
    %515 = vector.broadcast %cst_70 : f32 to vector<16x256xf32>
    %516 = arith.addf %515, %514 : vector<16x256xf32>
    %cst_71 = arith.constant 1.000000e+00 : f32
    %517 = vector.broadcast %cst_71 : f32 to vector<16x256xf32>
    %518 = arith.divf %517, %516 : vector<16x256xf32>
    %cst_72 = arith.constant 1.06140542 : f32
    %519 = vector.broadcast %cst_72 : f32 to vector<16x256xf32>
    %520 = arith.mulf %519, %518 : vector<16x256xf32>
    %cst_73 = arith.constant 1.45315206 : f32
    %521 = vector.broadcast %cst_73 : f32 to vector<16x256xf32>
    %522 = arith.subf %520, %521 : vector<16x256xf32>
    %523 = arith.mulf %522, %518 : vector<16x256xf32>
    %cst_74 = arith.constant 1.42141378 : f32
    %524 = vector.broadcast %cst_74 : f32 to vector<16x256xf32>
    %525 = arith.addf %523, %524 : vector<16x256xf32>
    %526 = arith.mulf %525, %518 : vector<16x256xf32>
    %cst_75 = arith.constant 0.284496725 : f32
    %527 = vector.broadcast %cst_75 : f32 to vector<16x256xf32>
    %528 = arith.subf %526, %527 : vector<16x256xf32>
    %529 = arith.mulf %528, %518 : vector<16x256xf32>
    %cst_76 = arith.constant 0.254829586 : f32
    %530 = vector.broadcast %cst_76 : f32 to vector<16x256xf32>
    %531 = arith.addf %529, %530 : vector<16x256xf32>
    %532 = arith.mulf %531, %518 : vector<16x256xf32>
    %cst_77 = arith.constant 0.000000e+00 : f32
    %533 = vector.broadcast %cst_77 : f32 to vector<16x256xf32>
    %534 = arith.subf %533, %512 : vector<16x256xf32>
    %535 = arith.mulf %534, %512 : vector<16x256xf32>
    %536 = math.exp %535 : vector<16x256xf32>
    %537 = arith.mulf %532, %536 : vector<16x256xf32>
    %cst_78 = arith.constant 1.000000e+00 : f32
    %538 = vector.broadcast %cst_78 : f32 to vector<16x256xf32>
    %539 = arith.subf %538, %537 : vector<16x256xf32>
    %cst_79 = arith.constant 0.000000e+00 : f32
    %540 = vector.broadcast %cst_79 : f32 to vector<16x256xf32>
    %541 = arith.cmpf oge, %507, %540 : vector<16x256xf32>
    %cst_80 = arith.constant 0.000000e+00 : f32
    %542 = vector.broadcast %cst_80 : f32 to vector<16x256xf32>
    %543 = arith.subf %542, %539 : vector<16x256xf32>
    %544 = arith.select %541, %539, %543 : vector<16x256xi1>, vector<16x256xf32>
    %cst_81 = arith.constant 5.000000e-01 : f32
    %545 = vector.broadcast %cst_81 : f32 to vector<16x256xf32>
    %546 = arith.mulf %545, %505 : vector<16x256xf32>
    %cst_82 = arith.constant 1.000000e+00 : f32
    %547 = vector.broadcast %cst_82 : f32 to vector<16x256xf32>
    %548 = arith.addf %547, %544 : vector<16x256xf32>
    %549 = arith.mulf %546, %548 : vector<16x256xf32>
    %cst_83 = arith.constant 0.000000e+00 : f32
    %550 = vector.broadcast %cst_83 : f32 to vector<8x256xf32>
    %c0_84 = arith.constant 0 : index
    %c0_85 = arith.constant 0 : index
    %551 = vector.load %arg4[%c0_84, %c0_85] : memref<8x16xf32, #tpu.memory_space<vmem>>, vector<8x1xf32>
    %552 = vector.extract_strided_slice %549 {offsets = [0, 0], sizes = [1, 256], strides = [1, 1]} : vector<16x256xf32> to vector<1x256xf32>
    %553 = vector.broadcast %551 : vector<8x1xf32> to vector<8x256xf32>
    %554 = vector.broadcast %552 : vector<1x256xf32> to vector<8x256xf32>
    %555 = arith.mulf %553, %554 : vector<8x256xf32>
    %556 = arith.addf %550, %555 : vector<8x256xf32>
    %c0_86 = arith.constant 0 : index
    %c1_87 = arith.constant 1 : index
    %557 = vector.load %arg4[%c0_86, %c1_87] : memref<8x16xf32, #tpu.memory_space<vmem>>, vector<8x1xf32>
    %558 = vector.extract_strided_slice %549 {offsets = [1, 0], sizes = [1, 256], strides = [1, 1]} : vector<16x256xf32> to vector<1x256xf32>
    %559 = vector.broadcast %557 : vector<8x1xf32> to vector<8x256xf32>
    %560 = vector.broadcast %558 : vector<1x256xf32> to vector<8x256xf32>
    %561 = arith.mulf %559, %560 : vector<8x256xf32>
    %562 = arith.addf %556, %561 : vector<8x256xf32>
    %c0_88 = arith.constant 0 : index
    %c2_89 = arith.constant 2 : index
    %563 = vector.load %arg4[%c0_88, %c2_89] : memref<8x16xf32, #tpu.memory_space<vmem>>, vector<8x1xf32>
    %564 = vector.extract_strided_slice %549 {offsets = [2, 0], sizes = [1, 256], strides = [1, 1]} : vector<16x256xf32> to vector<1x256xf32>
    %565 = vector.broadcast %563 : vector<8x1xf32> to vector<8x256xf32>
    %566 = vector.broadcast %564 : vector<1x256xf32> to vector<8x256xf32>
    %567 = arith.mulf %565, %566 : vector<8x256xf32>
    %568 = arith.addf %562, %567 : vector<8x256xf32>
    %c0_90 = arith.constant 0 : index
    %c3_91 = arith.constant 3 : index
    %569 = vector.load %arg4[%c0_90, %c3_91] : memref<8x16xf32, #tpu.memory_space<vmem>>, vector<8x1xf32>
    %570 = vector.extract_strided_slice %549 {offsets = [3, 0], sizes = [1, 256], strides = [1, 1]} : vector<16x256xf32> to vector<1x256xf32>
    %571 = vector.broadcast %569 : vector<8x1xf32> to vector<8x256xf32>
    %572 = vector.broadcast %570 : vector<1x256xf32> to vector<8x256xf32>
    %573 = arith.mulf %571, %572 : vector<8x256xf32>
    %574 = arith.addf %568, %573 : vector<8x256xf32>
    %c0_92 = arith.constant 0 : index
    %c4_93 = arith.constant 4 : index
    %575 = vector.load %arg4[%c0_92, %c4_93] : memref<8x16xf32, #tpu.memory_space<vmem>>, vector<8x1xf32>
    %576 = vector.extract_strided_slice %549 {offsets = [4, 0], sizes = [1, 256], strides = [1, 1]} : vector<16x256xf32> to vector<1x256xf32>
    %577 = vector.broadcast %575 : vector<8x1xf32> to vector<8x256xf32>
    %578 = vector.broadcast %576 : vector<1x256xf32> to vector<8x256xf32>
    %579 = arith.mulf %577, %578 : vector<8x256xf32>
    %580 = arith.addf %574, %579 : vector<8x256xf32>
    %c0_94 = arith.constant 0 : index
    %c5_95 = arith.constant 5 : index
    %581 = vector.load %arg4[%c0_94, %c5_95] : memref<8x16xf32, #tpu.memory_space<vmem>>, vector<8x1xf32>
    %582 = vector.extract_strided_slice %549 {offsets = [5, 0], sizes = [1, 256], strides = [1, 1]} : vector<16x256xf32> to vector<1x256xf32>
    %583 = vector.broadcast %581 : vector<8x1xf32> to vector<8x256xf32>
    %584 = vector.broadcast %582 : vector<1x256xf32> to vector<8x256xf32>
    %585 = arith.mulf %583, %584 : vector<8x256xf32>
    %586 = arith.addf %580, %585 : vector<8x256xf32>
    %c0_96 = arith.constant 0 : index
    %c6_97 = arith.constant 6 : index
    %587 = vector.load %arg4[%c0_96, %c6_97] : memref<8x16xf32, #tpu.memory_space<vmem>>, vector<8x1xf32>
    %588 = vector.extract_strided_slice %549 {offsets = [6, 0], sizes = [1, 256], strides = [1, 1]} : vector<16x256xf32> to vector<1x256xf32>
    %589 = vector.broadcast %587 : vector<8x1xf32> to vector<8x256xf32>
    %590 = vector.broadcast %588 : vector<1x256xf32> to vector<8x256xf32>
    %591 = arith.mulf %589, %590 : vector<8x256xf32>
    %592 = arith.addf %586, %591 : vector<8x256xf32>
    %c0_98 = arith.constant 0 : index
    %c7_99 = arith.constant 7 : index
    %593 = vector.load %arg4[%c0_98, %c7_99] : memref<8x16xf32, #tpu.memory_space<vmem>>, vector<8x1xf32>
    %594 = vector.extract_strided_slice %549 {offsets = [7, 0], sizes = [1, 256], strides = [1, 1]} : vector<16x256xf32> to vector<1x256xf32>
    %595 = vector.broadcast %593 : vector<8x1xf32> to vector<8x256xf32>
    %596 = vector.broadcast %594 : vector<1x256xf32> to vector<8x256xf32>
    %597 = arith.mulf %595, %596 : vector<8x256xf32>
    %598 = arith.addf %592, %597 : vector<8x256xf32>
    %c0_100 = arith.constant 0 : index
    %c8_101 = arith.constant 8 : index
    %599 = vector.load %arg4[%c0_100, %c8_101] : memref<8x16xf32, #tpu.memory_space<vmem>>, vector<8x1xf32>
    %600 = vector.extract_strided_slice %549 {offsets = [8, 0], sizes = [1, 256], strides = [1, 1]} : vector<16x256xf32> to vector<1x256xf32>
    %601 = vector.broadcast %599 : vector<8x1xf32> to vector<8x256xf32>
    %602 = vector.broadcast %600 : vector<1x256xf32> to vector<8x256xf32>
    %603 = arith.mulf %601, %602 : vector<8x256xf32>
    %604 = arith.addf %598, %603 : vector<8x256xf32>
    %c0_102 = arith.constant 0 : index
    %c9 = arith.constant 9 : index
    %605 = vector.load %arg4[%c0_102, %c9] : memref<8x16xf32, #tpu.memory_space<vmem>>, vector<8x1xf32>
    %606 = vector.extract_strided_slice %549 {offsets = [9, 0], sizes = [1, 256], strides = [1, 1]} : vector<16x256xf32> to vector<1x256xf32>
    %607 = vector.broadcast %605 : vector<8x1xf32> to vector<8x256xf32>
    %608 = vector.broadcast %606 : vector<1x256xf32> to vector<8x256xf32>
    %609 = arith.mulf %607, %608 : vector<8x256xf32>
    %610 = arith.addf %604, %609 : vector<8x256xf32>
    %c0_103 = arith.constant 0 : index
    %c10 = arith.constant 10 : index
    %611 = vector.load %arg4[%c0_103, %c10] : memref<8x16xf32, #tpu.memory_space<vmem>>, vector<8x1xf32>
    %612 = vector.extract_strided_slice %549 {offsets = [10, 0], sizes = [1, 256], strides = [1, 1]} : vector<16x256xf32> to vector<1x256xf32>
    %613 = vector.broadcast %611 : vector<8x1xf32> to vector<8x256xf32>
    %614 = vector.broadcast %612 : vector<1x256xf32> to vector<8x256xf32>
    %615 = arith.mulf %613, %614 : vector<8x256xf32>
    %616 = arith.addf %610, %615 : vector<8x256xf32>
    %c0_104 = arith.constant 0 : index
    %c11 = arith.constant 11 : index
    %617 = vector.load %arg4[%c0_104, %c11] : memref<8x16xf32, #tpu.memory_space<vmem>>, vector<8x1xf32>
    %618 = vector.extract_strided_slice %549 {offsets = [11, 0], sizes = [1, 256], strides = [1, 1]} : vector<16x256xf32> to vector<1x256xf32>
    %619 = vector.broadcast %617 : vector<8x1xf32> to vector<8x256xf32>
    %620 = vector.broadcast %618 : vector<1x256xf32> to vector<8x256xf32>
    %621 = arith.mulf %619, %620 : vector<8x256xf32>
    %622 = arith.addf %616, %621 : vector<8x256xf32>
    %c0_105 = arith.constant 0 : index
    %c12 = arith.constant 12 : index
    %623 = vector.load %arg4[%c0_105, %c12] : memref<8x16xf32, #tpu.memory_space<vmem>>, vector<8x1xf32>
    %624 = vector.extract_strided_slice %549 {offsets = [12, 0], sizes = [1, 256], strides = [1, 1]} : vector<16x256xf32> to vector<1x256xf32>
    %625 = vector.broadcast %623 : vector<8x1xf32> to vector<8x256xf32>
    %626 = vector.broadcast %624 : vector<1x256xf32> to vector<8x256xf32>
    %627 = arith.mulf %625, %626 : vector<8x256xf32>
    %628 = arith.addf %622, %627 : vector<8x256xf32>
    %c0_106 = arith.constant 0 : index
    %c13 = arith.constant 13 : index
    %629 = vector.load %arg4[%c0_106, %c13] : memref<8x16xf32, #tpu.memory_space<vmem>>, vector<8x1xf32>
    %630 = vector.extract_strided_slice %549 {offsets = [13, 0], sizes = [1, 256], strides = [1, 1]} : vector<16x256xf32> to vector<1x256xf32>
    %631 = vector.broadcast %629 : vector<8x1xf32> to vector<8x256xf32>
    %632 = vector.broadcast %630 : vector<1x256xf32> to vector<8x256xf32>
    %633 = arith.mulf %631, %632 : vector<8x256xf32>
    %634 = arith.addf %628, %633 : vector<8x256xf32>
    %c0_107 = arith.constant 0 : index
    %c14 = arith.constant 14 : index
    %635 = vector.load %arg4[%c0_107, %c14] : memref<8x16xf32, #tpu.memory_space<vmem>>, vector<8x1xf32>
    %636 = vector.extract_strided_slice %549 {offsets = [14, 0], sizes = [1, 256], strides = [1, 1]} : vector<16x256xf32> to vector<1x256xf32>
    %637 = vector.broadcast %635 : vector<8x1xf32> to vector<8x256xf32>
    %638 = vector.broadcast %636 : vector<1x256xf32> to vector<8x256xf32>
    %639 = arith.mulf %637, %638 : vector<8x256xf32>
    %640 = arith.addf %634, %639 : vector<8x256xf32>
    %c0_108 = arith.constant 0 : index
    %c15 = arith.constant 15 : index
    %641 = vector.load %arg4[%c0_108, %c15] : memref<8x16xf32, #tpu.memory_space<vmem>>, vector<8x1xf32>
    %642 = vector.extract_strided_slice %549 {offsets = [15, 0], sizes = [1, 256], strides = [1, 1]} : vector<16x256xf32> to vector<1x256xf32>
    %643 = vector.broadcast %641 : vector<8x1xf32> to vector<8x256xf32>
    %644 = vector.broadcast %642 : vector<1x256xf32> to vector<8x256xf32>
    %645 = arith.mulf %643, %644 : vector<8x256xf32>
    %646 = arith.addf %640, %645 : vector<8x256xf32>
    %c0_109 = arith.constant 0 : index
    %c0_110 = arith.constant 0 : index
    %647 = vector.load %arg5[%c0_109, %c0_110] : memref<8x1xf32, #tpu.memory_space<vmem>>, vector<8x1xf32>
    %648 = vector.broadcast %647 : vector<8x1xf32> to vector<8x256xf32>
    %649 = arith.addf %646, %648 : vector<8x256xf32>
    %c0_111 = arith.constant 0 : index
    %c0_112 = arith.constant 0 : index
    %c0_113 = arith.constant 0 : index
    %650 = vector.load %arg7[%c0_111, %c0_112, %c0_113] : memref<1x8x256xf32, #tpu.memory_space<vmem>>, vector<1x8x256xf32>
    %651 = vector.shape_cast %650 : vector<1x8x256xf32> to vector<8x256xf32>
    %652 = vector.shape_cast %649 : vector<8x256xf32> to vector<1x8x256xf32>
    tpu.vector_store %arg7[%c0_111, %c0_112, %c0_113], %652 {strides = array<i32>} : memref<1x8x256xf32, #tpu.memory_space<vmem>>, vector<1x8x256xf32>,
    return
  }
  func.func @transform_0(%arg0: i32) -> (i32, i32, i32) {
    %c0_i32 = arith.constant 0 : i32
    %c0_i32_0 = arith.constant 0 : i32
    %c0_i32_1 = arith.constant 0 : i32
    return %arg0, %c0_i32, %c0_i32_0 : i32, i32, i32
  }
  func.func @transform_1(%arg0: i32) -> (i32, i32, i32) {
    %c0_i32 = arith.constant 0 : i32
    %c0_i32_0 = arith.constant 0 : i32
    %c0_i32_1 = arith.constant 0 : i32
    %c0_i32_2 = arith.constant 0 : i32
    return %c0_i32, %c0_i32_0, %c0_i32_1 : i32, i32, i32
  }
  func.func @transform_2(%arg0: i32) -> (i32, i32) {
    %c0_i32 = arith.constant 0 : i32
    %c0_i32_0 = arith.constant 0 : i32
    %c0_i32_1 = arith.constant 0 : i32
    return %c0_i32, %c0_i32_0 : i32, i32
  }
  func.func @transform_3(%arg0: i32) -> (i32, i32) {
    %c0_i32 = arith.constant 0 : i32
    %c0_i32_0 = arith.constant 0 : i32
    %c0_i32_1 = arith.constant 0 : i32
    return %c0_i32, %c0_i32_0 : i32, i32
  }
  func.func @transform_4(%arg0: i32) -> (i32, i32) {
    %c0_i32 = arith.constant 0 : i32
    %c0_i32_0 = arith.constant 0 : i32
    %c0_i32_1 = arith.constant 0 : i32
    return %c0_i32, %c0_i32_0 : i32, i32
  }
  func.func @transform_5(%arg0: i32) -> (i32, i32, i32) {
    %c0_i32 = arith.constant 0 : i32
    %c0_i32_0 = arith.constant 0 : i32
    %c0_i32_1 = arith.constant 0 : i32
    %c0_i32_2 = arith.constant 0 : i32
    return %c0_i32, %c0_i32_0, %c0_i32_1 : i32, i32, i32
  }
  func.func @transform_6(%arg0: i32) -> (i32, i32, i32) {
    %c0_i32 = arith.constant 0 : i32
    %c0_i32_0 = arith.constant 0 : i32
    %c0_i32_1 = arith.constant 0 : i32
    return %arg0, %c0_i32, %c0_i32_0 : i32, i32, i32
  }
}

</mosaic_0001>

<llo_original>
// kernel: ccm_forward.1
$region0: #{ccm_forward.1}
  #allocation0 [shape = 'u32[]', space=smem, size = 0x4, offset = 0x4, fixed_abs, tag = 'smem constant byte address 0x4 - core index']
  #allocation1 [shape = 'u32[72,128]{1,0:T(1,128)}', space=vmem, size = 0x9000, scoped, tag = 'internal scratch']
  #allocation2 [shape = 'f32[8,512]{1,0:T(8,128)}', space=vmem, size = 0x4000, scoped, tag = 'scratch operand']
  %s0 = inlined_call_operand.vmem [shape: f32[2,8,256], index: 0, kind: input, shape index: {}]
  %s1 = inlined_call_operand.vmem [shape: f32[9,16,8], index: 1, kind: input, shape index: {}]
  %s2 = inlined_call_operand.vmem [shape: f32[16,1], index: 2, kind: input, shape index: {}]
  %s3 = inlined_call_operand.vmem [shape: f32[8,16], index: 3, kind: input, shape index: {}]
  %s4 = inlined_call_operand.vmem [shape: f32[8,1], index: 4, kind: input, shape index: {}]
  %s5 = inlined_call_operand.vmem [shape: f32[9,1,256], index: 5, kind: input, shape index: {}]
  %s6 = inlined_call_operand.vmem [shape: f32[2,8,256], index: 6, kind: output, shape index: {}]
  %s7 = sld [smem:[#allocation0]]
  $region57: #{ccm_forward.1} parent=0
    _
  %s9 = ssub.s32 1, %s7
  %s10 = scalar_select 0, %s9, %s7
  loop: start=0, step=1, limit=4
  $region2: #{ccm_forward.1} parent=0 // loop_pre_header
    _
  $region3: #{ccm_forward.1} parent=0 // loop_header
    %s12 = sphi 0, %s16
    %p13 = scmp.ge.s32.totalorder %s12, 4
    %s22 = sphi 0, %s24
    %s25 = sphi 0, %s22
    %s26 = sphi 0, %s25
    %s42 = sphi 0, %s26
    %s46 = sphi 0, %s46
    %s48 = sphi 0, %s46
    %s49 = sphi 0, %s48
    %s63 = sphi 0, %s49
    %s67 = sphi 0, %s67
    %s69 = sphi 0, %s67
    %s70 = sphi 0, %s69
    %s84 = sphi 0, %s70
    %s88 = sphi 0, %s88
    %s90 = sphi 0, %s88
    %s91 = sphi 0, %s90
    %s105 = sphi 0, %s91
    %s109 = sphi 0, %s109
    %s111 = sphi 0, %s109
    %s112 = sphi 0, %s111
    %s126 = sphi 0, %s112
    %s130 = sphi 0, %s130
    %s132 = sphi 0, %s130
    %s133 = sphi 0, %s132
    %s147 = sphi 0, %s133
    %s153 = sphi 0, %s155
    %s156 = sphi 0, %s153
    %s157 = sphi 0, %s156
    %s173 = sphi 0, %s157
  $region4: #{ccm_forward.1} parent=0 // loop_header_branch
    %15 = sbr.rel (%p13) target = $region8
  $region5: #{ccm_forward.1} parent=0 // loop_body
    %s17 = ssub.s32 %s12, 1
    %s18 = ssub.s32 %s12, 2
    %s19 = sadd.s32 %s12, 1
    %s20 = ssub.s32 %s12, %s19
    %p21 = scmp.eq.s32.totalorder %s20, 0
    %s23 = sadd.s32 %s22, 1
    %s24 = scalar_select %p21, %s22, %s23
    %p27 = pneg %p21
    %p28 = scmp.eq.s32.totalorder %s12, 1
    %p29 = por %p27, %p28
    %p30 = scmp.ne.s32.totalorder %s22, %s25
    %p31 = scmp.eq.s32.totalorder %s12, 0
    %p32 = por %p30, %p31
    %p33 = scmp.ne.s32.totalorder %s22, %s25
    %p34 = scmp.eq.s32.totalorder %s17, 1
    %p35 = por %p33, %p34
    %p36 = scmp.ne.s32.totalorder %s25, %s26
    %p37 = scmp.eq.s32.totalorder %s17, 0
    %p38 = por %p36, %p37
    %p39 = scmp.ne.s32.totalorder %s25, %s26
    %p40 = scmp.eq.s32.totalorder %s18, 1
    %p41 = por %p39, %p40
    %p43 = scmp.ne.s32.totalorder %s26, %s42
    %p44 = scmp.eq.s32.totalorder %s18, 0
    %p45 = por %p43, %p44
    %s47 = sadd.s32 %s46, 1
    %p50 = scmp.eq.s32.totalorder %s12, 1
    %p51 = scmp.ne.s32.totalorder %s46, %s48
    %p52 = scmp.eq.s32.totalorder %s12, 0
    %p53 = por %p51, %p52
    %p54 = scmp.ne.s32.totalorder %s46, %s48
    %p55 = scmp.eq.s32.totalorder %s17, 1
    %p56 = por %p54, %p55
    %p57 = scmp.ne.s32.totalorder %s48, %s49
    %p58 = scmp.eq.s32.totalorder %s17, 0
    %p59 = por %p57, %p58
    %p60 = scmp.ne.s32.totalorder %s48, %s49
    %p61 = scmp.eq.s32.totalorder %s18, 1
    %p62 = por %p60, %p61
    %p64 = scmp.ne.s32.totalorder %s49, %s63
    %p65 = scmp.eq.s32.totalorder %s18, 0
    %p66 = por %p64, %p65
    %s68 = sadd.s32 %s67, 1
    %p71 = scmp.eq.s32.totalorder %s12, 1
    %p72 = scmp.ne.s32.totalorder %s67, %s69
    %p73 = scmp.eq.s32.totalorder %s12, 0
    %p74 = por %p72, %p73
    %p75 = scmp.ne.s32.totalorder %s67, %s69
    %p76 = scmp.eq.s32.totalorder %s17, 1
    %p77 = por %p75, %p76
    %p78 = scmp.ne.s32.totalorder %s69, %s70
    %p79 = scmp.eq.s32.totalorder %s17, 0
    %p80 = por %p78, %p79
    %p81 = scmp.ne.s32.totalorder %s69, %s70
    %p82 = scmp.eq.s32.totalorder %s18, 1
    %p83 = por %p81, %p82
    %p85 = scmp.ne.s32.totalorder %s70, %s84
    %p86 = scmp.eq.s32.totalorder %s18, 0
    %p87 = por %p85, %p86
    %s89 = sadd.s32 %s88, 1
    %p92 = scmp.eq.s32.totalorder %s12, 1
    %p93 = scmp.ne.s32.totalorder %s88, %s90
    %p94 = scmp.eq.s32.totalorder %s12, 0
    %p95 = por %p93, %p94
    %p96 = scmp.ne.s32.totalorder %s88, %s90
    %p97 = scmp.eq.s32.totalorder %s17, 1
    %p98 = por %p96, %p97
    %p99 = scmp.ne.s32.totalorder %s90, %s91
    %p100 = scmp.eq.s32.totalorder %s17, 0
    %p101 = por %p99, %p100
    %p102 = scmp.ne.s32.totalorder %s90, %s91
    %p103 = scmp.eq.s32.totalorder %s18, 1
    %p104 = por %p102, %p103
    %p106 = scmp.ne.s32.totalorder %s91, %s105
    %p107 = scmp.eq.s32.totalorder %s18, 0
    %p108 = por %p106, %p107
    %s110 = sadd.s32 %s109, 1
    %p113 = scmp.eq.s32.totalorder %s12, 1
    %p114 = scmp.ne.s32.totalorder %s109, %s111
    %p115 = scmp.eq.s32.totalorder %s12, 0
    %p116 = por %p114, %p115
    %p117 = scmp.ne.s32.totalorder %s109, %s111
    %p118 = scmp.eq.s32.totalorder %s17, 1
    %p119 = por %p117, %p118
    %p120 = scmp.ne.s32.totalorder %s111, %s112
    %p121 = scmp.eq.s32.totalorder %s17, 0
    %p122 = por %p120, %p121
    %p123 = scmp.ne.s32.totalorder %s111, %s112
    %p124 = scmp.eq.s32.totalorder %s18, 1
    %p125 = por %p123, %p124
    %p127 = scmp.ne.s32.totalorder %s112, %s126
    %p128 = scmp.eq.s32.totalorder %s18, 0
    %p129 = por %p127, %p128
    %s131 = sadd.s32 %s130, 1
    %p134 = scmp.eq.s32.totalorder %s12, 1
    %p135 = scmp.ne.s32.totalorder %s130, %s132
    %p136 = scmp.eq.s32.totalorder %s12, 0
    %p137 = por %p135, %p136
    %p138 = scmp.ne.s32.totalorder %s130, %s132
    %p139 = scmp.eq.s32.totalorder %s17, 1
    %p140 = por %p138, %p139
    %p141 = scmp.ne.s32.totalorder %s132, %s133
    %p142 = scmp.eq.s32.totalorder %s17, 0
    %p143 = por %p141, %p142
    %p144 = scmp.ne.s32.totalorder %s132, %s133
    %p145 = scmp.eq.s32.totalorder %s18, 1
    %p146 = por %p144, %p145
    %p148 = scmp.ne.s32.totalorder %s133, %s147
    %p149 = scmp.eq.s32.totalorder %s18, 0
    %p150 = por %p148, %p149
    %s151 = ssub.s32 %s12, %s19
    %p152 = scmp.eq.s32.totalorder %s151, 0
    %s154 = sadd.s32 %s153, 1
    %s155 = scalar_select %p152, %s153, %s154
    %p158 = pneg %p152
    %p159 = scmp.eq.s32.totalorder %s12, 1
    %p160 = por %p158, %p159
    %p161 = scmp.ne.s32.totalorder %s153, %s156
    %p162 = scmp.eq.s32.totalorder %s12, 0
    %p163 = por %p161, %p162
    %p164 = scmp.ne.s32.totalorder %s153, %s156
    %p165 = scmp.eq.s32.totalorder %s17, 1
    %p166 = por %p164, %p165
    %p167 = scmp.ne.s32.totalorder %s156, %s157
    %p168 = scmp.eq.s32.totalorder %s17, 0
    %p169 = por %p167, %p168
    %p170 = scmp.ne.s32.totalorder %s156, %s157
    %p171 = scmp.eq.s32.totalorder %s18, 1
    %p172 = por %p170, %p171
    %p174 = scmp.ne.s32.totalorder %s157, %s173
    %p175 = scmp.eq.s32.totalorder %s18, 0
    %p176 = por %p174, %p175
    %p177 = scmp.le.s32.totalorder 1, %s12
    %p178 = scmp.lt.s32.totalorder %s12, 3
    %p179 = pnand %p177, %p178
    %p180 = pneg %p179
    // Predicated region
    $region9: #{ccm_forward.1} parent=5 // pred_check
      _
    $region10: #{ccm_forward.1} parent=5 // pred_check_branch
      %182 = sbr.rel (%p179) target = $region12
    $region11: #{ccm_forward.1} parent=5 // pred_region
      %s183 = ssub.s32 %s12, 1
      // Predicated region
      $region13: #{ccm_forward.1} parent=11 // pred_check
        %p184 = pneg %p59
      $region14: #{ccm_forward.1} parent=11 // pred_check_branch
        %186 = sbr.rel (%p184) target = $region16
      $region15: #{ccm_forward.1} parent=11 // pred_region
        _
      $region16: #{ccm_forward.1} parent=11 // pred_fallthru
        _
      // Predicated region
      $region17: #{ccm_forward.1} parent=11 // pred_check
        %p187 = pneg %p80
      $region18: #{ccm_forward.1} parent=11 // pred_check_branch
        %189 = sbr.rel (%p187) target = $region20
      $region19: #{ccm_forward.1} parent=11 // pred_region
        _
      $region20: #{ccm_forward.1} parent=11 // pred_fallthru
        _
      // Predicated region
      $region21: #{ccm_forward.1} parent=11 // pred_check
        %p190 = pneg %p101
      $region22: #{ccm_forward.1} parent=11 // pred_check_branch
        %192 = sbr.rel (%p190) target = $region24
      $region23: #{ccm_forward.1} parent=11 // pred_region
        _
      $region24: #{ccm_forward.1} parent=11 // pred_fallthru
        _
      // Predicated region
      $region25: #{ccm_forward.1} parent=11 // pred_check
        %p193 = pneg %p122
      $region26: #{ccm_forward.1} parent=11 // pred_check_branch
        %195 = sbr.rel (%p193) target = $region28
      $region27: #{ccm_forward.1} parent=11 // pred_region
        _
      $region28: #{ccm_forward.1} parent=11 // pred_fallthru
        _
      // Predicated region
      $region29: #{ccm_forward.1} parent=11 // pred_check
        %p196 = pneg %p143
      $region30: #{ccm_forward.1} parent=11 // pred_check_branch
        %198 = sbr.rel (%p196) target = $region32
      $region31: #{ccm_forward.1} parent=11 // pred_region
        _
      $region32: #{ccm_forward.1} parent=11 // pred_fallthru
        _
    $region12: #{ccm_forward.1} parent=5 // pred_fallthru
      _
    %p199 = scmp.lt.s32.totalorder %s12, 2
    // Predicated region
    $region33: #{ccm_forward.1} parent=5 // pred_check
      %p200 = pneg %p199
    $region34: #{ccm_forward.1} parent=5 // pred_check_branch
      %202 = sbr.rel (%p200) target = $region36
    $region35: #{ccm_forward.1} parent=5 // pred_region
      // Predicated region
      $region37: #{ccm_forward.1} parent=35 // pred_check
        %p203 = pneg %p32
      $region38: #{ccm_forward.1} parent=35 // pred_check_branch
        %205 = sbr.rel (%p203) target = $region40
      $region39: #{ccm_forward.1} parent=35 // pred_region
        %p206 = scmp.lt.s32.totalorder %s12, 1
        %s207 = scalar_select %p206, %s12, 1
        %s208 = smul.addr %s207, 2
        %s209 = smul.addr %s208, 8
        %s210 = scalar_lea.vmem %s0, %s209
      $region40: #{ccm_forward.1} parent=35 // pred_fallthru
        _
    $region36: #{ccm_forward.1} parent=5 // pred_fallthru
      _
    %p211 = scmp.le.s32.totalorder 1, %s12
    %p212 = scmp.lt.s32.totalorder %s12, 3
    %p213 = pnand %p211, %p212
    %p214 = pneg %p213
    // Predicated region
    $region41: #{ccm_forward.1} parent=5 // pred_check
      _
    $region42: #{ccm_forward.1} parent=5 // pred_check_branch
      %216 = sbr.rel (%p213) target = $region44
    $region43: #{ccm_forward.1} parent=5 // pred_region
      %s217 = ssub.s32 %s12, 1
      %p218 = scmp.lt.s32.totalorder %s17, 1
      %s219 = scalar_select %p218, %s17, 1
      %s220 = smul.addr %s219, 2
      %s221 = smul.addr %s220, 8
      %s222 = scalar_lea.vmem %s0, %s221
      %p223 = pneg %p38
      %p224 = pneg %p35
      %p225 = pneg %p59
      %p226 = pneg %p56
      %p227 = pneg %p80
      %p228 = pneg %p77
      %p229 = pneg %p101
      %p230 = pneg %p98
      %p231 = pneg %p122
      %p232 = pneg %p119
      %p233 = pneg %p143
      %p234 = pneg %p140
      %p235 = pneg %p169
      %p236 = pneg %p166
      %p237 = scmp.lt.s32.totalorder %s17, 1
      %s238 = scalar_select %p237, %s17, 1
      %s239 = smul.addr %s238, 2
      %s240 = smul.addr %s239, 8
      %s241 = scalar_lea.vmem %s6, %s240
      %p242 = scmp.lt.s32.totalorder %s17, 1
      %s243 = scalar_select %p242, %s17, 1
      %s244 = smul.addr %s243, 2
      %s245 = smul.addr %s244, 8
      %s246 = scalar_lea.vmem %s0, %s245
      %p247 = scmp.lt.s32.totalorder %s17, 1
      %s248 = scalar_select %p247, %s17, 1
      %s249 = smul.addr %s248, 2
      %s250 = smul.addr %s249, 8
      %s251 = scalar_lea.vmem %s6, %s250
      %v252 = vld [vmem:[%s246] sm:$0xff]
      %v253 = vld [vmem:[%s246 + $0x8] sm:$0xff]
      %254 = vst [vmem:[#allocation2] sm:$0xff] 0.0
      %255 = vst [vmem:[#allocation2 + $0x18] sm:$0xff] 0.0
      %256 = vst [vmem:[#allocation2 + $0x8] sm:$0xff] %v252
      %257 = vst [vmem:[#allocation2 + $0x10] sm:$0xff] %v253
      %v258 = vld [vmem:[#allocation2] sm:$0xff]
      %v259 = vld [vmem:[#allocation2 + $0x8] sm:$0xff]
      %v260 = vld [vmem:[#allocation2 + $0x10] sm:$0xff]
      %v261 = vld [vmem:[%s5] sm:$0x3]
      %v263 = vperm.slane %v261, 0
      %v264 = vperm.slane %v261, 1
      %265 = vrot.lane.b32.xlu0 %v263, 111
      %v266 = vpop.permute.xlu0 %265
      %267 = vrot.lane.b32.xlu0 %v264, 111
      %v268 = vpop.permute.xlu0 %267
      %vm269 = vcmask 908288
      %v270 = vsel %vm269, %v266, %v268
      %v274 = vmul.f32 %v258, %v266
      %v275 = vmul.f32 %v259, %v270
      %v276 = vmul.f32 %v260, %v268
      %v277 = vld [vmem:[%s1] sm:$0xff]
      %v278 = vld [vmem:[%s1 + $0x8] sm:$0xff]
      %280 = vset.pattern.permute.xlu0 0
      %281 = vperm.xlu0 %280, %v277
      %v282 = vpop.permute.xlu0 %281
      %285 = vset.pattern.permute.xlu0 0
      %286 = vperm.xlu0 %285, %v278
      %v287 = vpop.permute.xlu0 %286
      %v289 = vperm.slane %v274, 0
      %v290 = vperm.slane %v275, 0
      %v291 = vperm.slane %v276, 0
      %v292 = vmul.f32 %v282, %v289
      %v293 = vmul.f32 %v282, %v290
      %v294 = vmul.f32 %v282, %v291
      %v295 = vmul.f32 %v287, %v289
      %v296 = vmul.f32 %v287, %v290
      %v297 = vmul.f32 %v287, %v291
      %v298 = vadd.f32 %v292, 0.0
      %v299 = vadd.f32 %v293, 0.0
      %v300 = vadd.f32 %v294, 0.0
      %v301 = vadd.f32 %v295, 0.0
      %v302 = vadd.f32 %v296, 0.0
      %v303 = vadd.f32 %v297, 0.0
      %304 = vset.pattern.permute.xlu0 1
      %305 = vperm.xlu0 %304, %v277
      %v306 = vpop.permute.xlu0 %305
      %308 = vset.pattern.permute.xlu0 1
      %309 = vperm.xlu0 %308, %v278
      %v310 = vpop.permute.xlu0 %309
      %v312 = vperm.slane %v274, 1
      %v313 = vperm.slane %v275, 1
      %v314 = vperm.slane %v276, 1
      %v315 = vmul.f32 %v306, %v312
      %v316 = vmul.f32 %v306, %v313
      %v317 = vmul.f32 %v306, %v314
      %v318 = vmul.f32 %v310, %v312
      %v319 = vmul.f32 %v310, %v313
      %v320 = vmul.f32 %v310, %v314
      %v321 = vadd.f32 %v298, %v315
      %v322 = vadd.f32 %v299, %v316
      %v323 = vadd.f32 %v300, %v317
      %v324 = vadd.f32 %v301, %v318
      %v325 = vadd.f32 %v302, %v319
      %v326 = vadd.f32 %v303, %v320
      %327 = vset.pattern.permute.xlu0 2
      %328 = vperm.xlu0 %327, %v277
      %v329 = vpop.permute.xlu0 %328
      %331 = vset.pattern.permute.xlu0 2
      %332 = vperm.xlu0 %331, %v278
      %v333 = vpop.permute.xlu0 %332
      %v335 = vperm.slane %v274, 2
      %v336 = vperm.slane %v275, 2
      %v337 = vperm.slane %v276, 2
      %v338 = vmul.f32 %v329, %v335
      %v339 = vmul.f32 %v329, %v336
      %v340 = vmul.f32 %v329, %v337
      %v341 = vmul.f32 %v333, %v335
      %v342 = vmul.f32 %v333, %v336
      %v343 = vmul.f32 %v333, %v337
      %v344 = vadd.f32 %v321, %v338
      %v345 = vadd.f32 %v322, %v339
      %v346 = vadd.f32 %v323, %v340
      %v347 = vadd.f32 %v324, %v341
      %v348 = vadd.f32 %v325, %v342
      %v349 = vadd.f32 %v326, %v343
      %350 = vset.pattern.permute.xlu0 3
      %351 = vperm.xlu0 %350, %v277
      %v352 = vpop.permute.xlu0 %351
      %354 = vset.pattern.permute.xlu0 3
      %355 = vperm.xlu0 %354, %v278
      %v356 = vpop.permute.xlu0 %355
      %v358 = vperm.slane %v274, 3
      %v359 = vperm.slane %v275, 3
      %v360 = vperm.slane %v276, 3
      %v361 = vmul.f32 %v352, %v358
      %v362 = vmul.f32 %v352, %v359
      %v363 = vmul.f32 %v352, %v360
      %v364 = vmul.f32 %v356, %v358
      %v365 = vmul.f32 %v356, %v359
      %v366 = vmul.f32 %v356, %v360
      %v367 = vadd.f32 %v344, %v361
      %v368 = vadd.f32 %v345, %v362
      %v369 = vadd.f32 %v346, %v363
      %v370 = vadd.f32 %v347, %v364
      %v371 = vadd.f32 %v348, %v365
      %v372 = vadd.f32 %v349, %v366
      %373 = vset.pattern.permute.xlu0 4
      %374 = vperm.xlu0 %373, %v277
      %v375 = vpop.permute.xlu0 %374
      %377 = vset.pattern.permute.xlu0 4
      %378 = vperm.xlu0 %377, %v278
      %v379 = vpop.permute.xlu0 %378
      %v381 = vperm.slane %v274, 4
      %v382 = vperm.slane %v275, 4
      %v383 = vperm.slane %v276, 4
      %v384 = vmul.f32 %v375, %v381
      %v385 = vmul.f32 %v375, %v382
      %v386 = vmul.f32 %v375, %v383
      %v387 = vmul.f32 %v379, %v381
      %v388 = vmul.f32 %v379, %v382
      %v389 = vmul.f32 %v379, %v383
      %v390 = vadd.f32 %v367, %v384
      %v391 = vadd.f32 %v368, %v385
      %v392 = vadd.f32 %v369, %v386
      %v393 = vadd.f32 %v370, %v387
      %v394 = vadd.f32 %v371, %v388
      %v395 = vadd.f32 %v372, %v389
      %396 = vset.pattern.permute.xlu0 5
      %397 = vperm.xlu0 %396, %v277
      %v398 = vpop.permute.xlu0 %397
      %400 = vset.pattern.permute.xlu0 5
      %401 = vperm.xlu0 %400, %v278
      %v402 = vpop.permute.xlu0 %401
      %v404 = vperm.slane %v274, 5
      %v405 = vperm.slane %v275, 5
      %v406 = vperm.slane %v276, 5
      %v407 = vmul.f32 %v398, %v404
      %v408 = vmul.f32 %v398, %v405
      %v409 = vmul.f32 %v398, %v406
      %v410 = vmul.f32 %v402, %v404
      %v411 = vmul.f32 %v402, %v405
      %v412 = vmul.f32 %v402, %v406
      %v413 = vadd.f32 %v390, %v407
      %v414 = vadd.f32 %v391, %v408
      %v415 = vadd.f32 %v392, %v409
      %v416 = vadd.f32 %v393, %v410
      %v417 = vadd.f32 %v394, %v411
      %v418 = vadd.f32 %v395, %v412
      %419 = vset.pattern.permute.xlu0 6
      %420 = vperm.xlu0 %419, %v277
      %v421 = vpop.permute.xlu0 %420
      %423 = vset.pattern.permute.xlu0 6
      %424 = vperm.xlu0 %423, %v278
      %v425 = vpop.permute.xlu0 %424
      %v427 = vperm.slane %v274, 6
      %v428 = vperm.slane %v275, 6
      %v429 = vperm.slane %v276, 6
      %v430 = vmul.f32 %v421, %v427
      %v431 = vmul.f32 %v421, %v428
      %v432 = vmul.f32 %v421, %v429
      %v433 = vmul.f32 %v425, %v427
      %v434 = vmul.f32 %v425, %v428
      %v435 = vmul.f32 %v425, %v429
      %v436 = vadd.f32 %v413, %v430
      %v437 = vadd.f32 %v414, %v431
      %v438 = vadd.f32 %v415, %v432
      %v439 = vadd.f32 %v416, %v433
      %v440 = vadd.f32 %v417, %v434
      %v441 = vadd.f32 %v418, %v435
      %442 = vset.pattern.permute.xlu0 7
      %443 = vperm.xlu0 %442, %v277
      %v444 = vpop.permute.xlu0 %443
      %446 = vset.pattern.permute.xlu0 7
      %447 = vperm.xlu0 %446, %v278
      %v448 = vpop.permute.xlu0 %447
      %v450 = vperm.slane %v274, 7
      %v451 = vperm.slane %v275, 7
      %v452 = vperm.slane %v276, 7
      %v453 = vmul.f32 %v444, %v450
      %v454 = vmul.f32 %v444, %v451
      %v455 = vmul.f32 %v444, %v452
      %v456 = vmul.f32 %v448, %v450
      %v457 = vmul.f32 %v448, %v451
      %v458 = vmul.f32 %v448, %v452
      %v459 = vadd.f32 %v436, %v453
      %v460 = vadd.f32 %v437, %v454
      %v461 = vadd.f32 %v438, %v455
      %v462 = vadd.f32 %v439, %v456
      %v463 = vadd.f32 %v440, %v457
      %v464 = vadd.f32 %v441, %v458
      %s465 = scalar_lea.vmem %s5, 2
      %v466 = vld [vmem:[%s465] sm:$0x3]
      %v468 = vperm.slane %v466, 0
      %v469 = vperm.slane %v466, 1
      %470 = vrot.lane.b32.xlu0 %v468, 112
      %v471 = vpop.permute.xlu0 %470
      %472 = vrot.lane.b32.xlu0 %v469, 112
      %v473 = vpop.permute.xlu0 %472
      %vm474 = vcmask 916480
      %v475 = vsel %vm474, %v471, %v473
      %v479 = vmul.f32 %v258, %v471
      %v480 = vmul.f32 %v259, %v475
      %v481 = vmul.f32 %v260, %v473
      %s482 = scalar_lea.vmem %s1, 16
      %v483 = vld [vmem:[%s482] sm:$0xff]
      %v484 = vld [vmem:[%s482 + $0x8] sm:$0xff]
      %486 = vset.pattern.permute.xlu0 0
      %487 = vperm.xlu0 %486, %v483
      %v488 = vpop.permute.xlu0 %487
      %491 = vset.pattern.permute.xlu0 0
      %492 = vperm.xlu0 %491, %v484
      %v493 = vpop.permute.xlu0 %492
      %v495 = vperm.slane %v479, 0
      %v496 = vperm.slane %v480, 0
      %v497 = vperm.slane %v481, 0
      %v498 = vmul.f32 %v488, %v495
      %v499 = vmul.f32 %v488, %v496
      %v500 = vmul.f32 %v488, %v497
      %v501 = vmul.f32 %v493, %v495
      %v502 = vmul.f32 %v493, %v496
      %v503 = vmul.f32 %v493, %v497
      %510 = vrot.lane.b32.xlu0 %v498, 127
      %v511 = vpop.permute.xlu0 %510
      %512 = vrot.lane.b32.xlu0 %v499, 127
      %v513 = vpop.permute.xlu0 %512
      %514 = vrot.lane.b32.xlu0 %v500, 127
      %v515 = vpop.permute.xlu0 %514
      %516 = vrot.lane.b32.xlu0 %v501, 127
      %v517 = vpop.permute.xlu0 %516
      %518 = vrot.lane.b32.xlu0 %v502, 127
      %v519 = vpop.permute.xlu0 %518
      %520 = vrot.lane.b32.xlu0 %v503, 127
      %v521 = vpop.permute.xlu0 %520
      %vm522 = vcmask 1039360
      %v523 = vsel %vm522, %v511, %v513
      %v524 = vsel %vm522, %v513, %v515
      %v525 = vsel %vm522, %v517, %v519
      %v526 = vsel %vm522, %v519, %v521
      %v533 = vadd.f32 %v459, %v523
      %v534 = vadd.f32 %v460, %v524
      %v535 = vadd.f32 %v461, %v515
      %v536 = vadd.f32 %v462, %v525
      %v537 = vadd.f32 %v463, %v526
      %v538 = vadd.f32 %v464, %v521
      %539 = vset.pattern.permute.xlu0 1
      %540 = vperm.xlu0 %539, %v483
      %v541 = vpop.permute.xlu0 %540
      %543 = vset.pattern.permute.xlu0 1
      %544 = vperm.xlu0 %543, %v484
      %v545 = vpop.permute.xlu0 %544
      %v547 = vperm.slane %v479, 1
      %v548 = vperm.slane %v480, 1
      %v549 = vperm.slane %v481, 1
      %v550 = vmul.f32 %v541, %v547
      %v551 = vmul.f32 %v541, %v548
      %v552 = vmul.f32 %v541, %v549
      %v553 = vmul.f32 %v545, %v547
      %v554 = vmul.f32 %v545, %v548
      %v555 = vmul.f32 %v545, %v549
      %562 = vrot.lane.b32.xlu0 %v550, 127
      %v563 = vpop.permute.xlu0 %562
      %564 = vrot.lane.b32.xlu0 %v551, 127
      %v565 = vpop.permute.xlu0 %564
      %566 = vrot.lane.b32.xlu0 %v552, 127
      %v567 = vpop.permute.xlu0 %566
      %568 = vrot.lane.b32.xlu0 %v553, 127
      %v569 = vpop.permute.xlu0 %568
      %570 = vrot.lane.b32.xlu0 %v554, 127
      %v571 = vpop.permute.xlu0 %570
      %572 = vrot.lane.b32.xlu0 %v555, 127
      %v573 = vpop.permute.xlu0 %572
      %v574 = vsel %vm522, %v563, %v565
      %v575 = vsel %vm522, %v565, %v567
      %v576 = vsel %vm522, %v569, %v571
      %v577 = vsel %vm522, %v571, %v573
      %v584 = vadd.f32 %v533, %v574
      %v585 = vadd.f32 %v534, %v575
      %v586 = vadd.f32 %v535, %v567
      %v587 = vadd.f32 %v536, %v576
      %v588 = vadd.f32 %v537, %v577
      %v589 = vadd.f32 %v538, %v573
      %590 = vset.pattern.permute.xlu0 2
      %591 = vperm.xlu0 %590, %v483
      %v592 = vpop.permute.xlu0 %591
      %594 = vset.pattern.permute.xlu0 2
      %595 = vperm.xlu0 %594, %v484
      %v596 = vpop.permute.xlu0 %595
      %v598 = vperm.slane %v479, 2
      %v599 = vperm.slane %v480, 2
      %v600 = vperm.slane %v481, 2
      %v601 = vmul.f32 %v592, %v598
      %v602 = vmul.f32 %v592, %v599
      %v603 = vmul.f32 %v592, %v600
      %v604 = vmul.f32 %v596, %v598
      %v605 = vmul.f32 %v596, %v599
      %v606 = vmul.f32 %v596, %v600
      %613 = vrot.lane.b32.xlu0 %v601, 127
      %v614 = vpop.permute.xlu0 %613
      %615 = vrot.lane.b32.xlu0 %v602, 127
      %v616 = vpop.permute.xlu0 %615
      %617 = vrot.lane.b32.xlu0 %v603, 127
      %v618 = vpop.permute.xlu0 %617
      %619 = vrot.lane.b32.xlu0 %v604, 127
      %v620 = vpop.permute.xlu0 %619
      %621 = vrot.lane.b32.xlu0 %v605, 127
      %v622 = vpop.permute.xlu0 %621
      %623 = vrot.lane.b32.xlu0 %v606, 127
      %v624 = vpop.permute.xlu0 %623
      %v625 = vsel %vm522, %v614, %v616
      %v626 = vsel %vm522, %v616, %v618
      %v627 = vsel %vm522, %v620, %v622
      %v628 = vsel %vm522, %v622, %v624
      %v635 = vadd.f32 %v584, %v625
      %v636 = vadd.f32 %v585, %v626
      %v637 = vadd.f32 %v586, %v618
      %v638 = vadd.f32 %v587, %v627
      %v639 = vadd.f32 %v588, %v628
      %v640 = vadd.f32 %v589, %v624
      %641 = vset.pattern.permute.xlu0 3
      %642 = vperm.xlu0 %641, %v483
      %v643 = vpop.permute.xlu0 %642
      %645 = vset.pattern.permute.xlu0 3
      %646 = vperm.xlu0 %645, %v484
      %v647 = vpop.permute.xlu0 %646
      %v649 = vperm.slane %v479, 3
      %v650 = vperm.slane %v480, 3
      %v651 = vperm.slane %v481, 3
      %v652 = vmul.f32 %v643, %v649
      %v653 = vmul.f32 %v643, %v650
      %v654 = vmul.f32 %v643, %v651
      %v655 = vmul.f32 %v647, %v649
      %v656 = vmul.f32 %v647, %v650
      %v657 = vmul.f32 %v647, %v651
      %664 = vrot.lane.b32.xlu0 %v652, 127
      %v665 = vpop.permute.xlu0 %664
      %666 = vrot.lane.b32.xlu0 %v653, 127
      %v667 = vpop.permute.xlu0 %666
      %668 = vrot.lane.b32.xlu0 %v654, 127
      %v669 = vpop.permute.xlu0 %668
      %670 = vrot.lane.b32.xlu0 %v655, 127
      %v671 = vpop.permute.xlu0 %670
      %672 = vrot.lane.b32.xlu0 %v656, 127
      %v673 = vpop.permute.xlu0 %672
      %674 = vrot.lane.b32.xlu0 %v657, 127
      %v675 = vpop.permute.xlu0 %674
      %v676 = vsel %vm522, %v665, %v667
      %v677 = vsel %vm522, %v667, %v669
      %v678 = vsel %vm522, %v671, %v673
      %v679 = vsel %vm522, %v673, %v675
      %v686 = vadd.f32 %v635, %v676
      %v687 = vadd.f32 %v636, %v677
      %v688 = vadd.f32 %v637, %v669
      %v689 = vadd.f32 %v638, %v678
      %v690 = vadd.f32 %v639, %v679
      %v691 = vadd.f32 %v640, %v675
      %692 = vset.pattern.permute.xlu0 4
      %693 = vperm.xlu0 %692, %v483
      %v694 = vpop.permute.xlu0 %693
      %696 = vset.pattern.permute.xlu0 4
      %697 = vperm.xlu0 %696, %v484
      %v698 = vpop.permute.xlu0 %697
      %v700 = vperm.slane %v479, 4
      %v701 = vperm.slane %v480, 4
      %v702 = vperm.slane %v481, 4
      %v703 = vmul.f32 %v694, %v700
      %v704 = vmul.f32 %v694, %v701
      %v705 = vmul.f32 %v694, %v702
      %v706 = vmul.f32 %v698, %v700
      %v707 = vmul.f32 %v698, %v701
      %v708 = vmul.f32 %v698, %v702
      %715 = vrot.lane.b32.xlu0 %v703, 127
      %v716 = vpop.permute.xlu0 %715
      %717 = vrot.lane.b32.xlu0 %v704, 127
      %v718 = vpop.permute.xlu0 %717
      %719 = vrot.lane.b32.xlu0 %v705, 127
      %v720 = vpop.permute.xlu0 %719
      %721 = vrot.lane.b32.xlu0 %v706, 127
      %v722 = vpop.permute.xlu0 %721
      %723 = vrot.lane.b32.xlu0 %v707, 127
      %v724 = vpop.permute.xlu0 %723
      %725 = vrot.lane.b32.xlu0 %v708, 127
      %v726 = vpop.permute.xlu0 %725
      %v727 = vsel %vm522, %v716, %v718
      %v728 = vsel %vm522, %v718, %v720
      %v729 = vsel %vm522, %v722, %v724
      %v730 = vsel %vm522, %v724, %v726
      %v737 = vadd.f32 %v686, %v727
      %v738 = vadd.f32 %v687, %v728
      %v739 = vadd.f32 %v688, %v720
      %v740 = vadd.f32 %v689, %v729
      %v741 = vadd.f32 %v690, %v730
      %v742 = vadd.f32 %v691, %v726
      %743 = vset.pattern.permute.xlu0 5
      %744 = vperm.xlu0 %743, %v483
      %v745 = vpop.permute.xlu0 %744
      %747 = vset.pattern.permute.xlu0 5
      %748 = vperm.xlu0 %747, %v484
      %v749 = vpop.permute.xlu0 %748
      %v751 = vperm.slane %v479, 5
      %v752 = vperm.slane %v480, 5
      %v753 = vperm.slane %v481, 5
      %v754 = vmul.f32 %v745, %v751
      %v755 = vmul.f32 %v745, %v752
      %v756 = vmul.f32 %v745, %v753
      %v757 = vmul.f32 %v749, %v751
      %v758 = vmul.f32 %v749, %v752
      %v759 = vmul.f32 %v749, %v753
      %766 = vrot.lane.b32.xlu0 %v754, 127
      %v767 = vpop.permute.xlu0 %766
      %768 = vrot.lane.b32.xlu0 %v755, 127
      %v769 = vpop.permute.xlu0 %768
      %770 = vrot.lane.b32.xlu0 %v756, 127
      %v771 = vpop.permute.xlu0 %770
      %772 = vrot.lane.b32.xlu0 %v757, 127
      %v773 = vpop.permute.xlu0 %772
      %774 = vrot.lane.b32.xlu0 %v758, 127
      %v775 = vpop.permute.xlu0 %774
      %776 = vrot.lane.b32.xlu0 %v759, 127
      %v777 = vpop.permute.xlu0 %776
      %v778 = vsel %vm522, %v767, %v769
      %v779 = vsel %vm522, %v769, %v771
      %v780 = vsel %vm522, %v773, %v775
      %v781 = vsel %vm522, %v775, %v777
      %v788 = vadd.f32 %v737, %v778
      %v789 = vadd.f32 %v738, %v779
      %v790 = vadd.f32 %v739, %v771
      %v791 = vadd.f32 %v740, %v780
      %v792 = vadd.f32 %v741, %v781
      %v793 = vadd.f32 %v742, %v777
      %794 = vset.pattern.permute.xlu0 6
      %795 = vperm.xlu0 %794, %v483
      %v796 = vpop.permute.xlu0 %795
      %798 = vset.pattern.permute.xlu0 6
      %799 = vperm.xlu0 %798, %v484
      %v800 = vpop.permute.xlu0 %799
      %v802 = vperm.slane %v479, 6
      %v803 = vperm.slane %v480, 6
      %v804 = vperm.slane %v481, 6
      %v805 = vmul.f32 %v796, %v802
      %v806 = vmul.f32 %v796, %v803
      %v807 = vmul.f32 %v796, %v804
      %v808 = vmul.f32 %v800, %v802
      %v809 = vmul.f32 %v800, %v803
      %v810 = vmul.f32 %v800, %v804
      %817 = vrot.lane.b32.xlu0 %v805, 127
      %v818 = vpop.permute.xlu0 %817
      %819 = vrot.lane.b32.xlu0 %v806, 127
      %v820 = vpop.permute.xlu0 %819
      %821 = vrot.lane.b32.xlu0 %v807, 127
      %v822 = vpop.permute.xlu0 %821
      %823 = vrot.lane.b32.xlu0 %v808, 127
      %v824 = vpop.permute.xlu0 %823
      %825 = vrot.lane.b32.xlu0 %v809, 127
      %v826 = vpop.permute.xlu0 %825
      %827 = vrot.lane.b32.xlu0 %v810, 127
      %v828 = vpop.permute.xlu0 %827
      %v829 = vsel %vm522, %v818, %v820
      %v830 = vsel %vm522, %v820, %v822
      %v831 = vsel %vm522, %v824, %v826
      %v832 = vsel %vm522, %v826, %v828
      %v839 = vadd.f32 %v788, %v829
      %v840 = vadd.f32 %v789, %v830
      %v841 = vadd.f32 %v790, %v822
      %v842 = vadd.f32 %v791, %v831
      %v843 = vadd.f32 %v792, %v832
      %v844 = vadd.f32 %v793, %v828
      %845 = vset.pattern.permute.xlu0 7
      %846 = vperm.xlu0 %845, %v483
      %v847 = vpop.permute.xlu0 %846
      %849 = vset.pattern.permute.xlu0 7
      %850 = vperm.xlu0 %849, %v484
      %v851 = vpop.permute.xlu0 %850
      %v853 = vperm.slane %v479, 7
      %v854 = vperm.slane %v480, 7
      %v855 = vperm.slane %v481, 7
      %v856 = vmul.f32 %v847, %v853
      %v857 = vmul.f32 %v847, %v854
      %v858 = vmul.f32 %v847, %v855
      %v859 = vmul.f32 %v851, %v853
      %v860 = vmul.f32 %v851, %v854
      %v861 = vmul.f32 %v851, %v855
      %868 = vrot.lane.b32.xlu0 %v856, 127
      %v869 = vpop.permute.xlu0 %868
      %870 = vrot.lane.b32.xlu0 %v857, 127
      %v871 = vpop.permute.xlu0 %870
      %872 = vrot.lane.b32.xlu0 %v858, 127
      %v873 = vpop.permute.xlu0 %872
      %874 = vrot.lane.b32.xlu0 %v859, 127
      %v875 = vpop.permute.xlu0 %874
      %876 = vrot.lane.b32.xlu0 %v860, 127
      %v877 = vpop.permute.xlu0 %876
      %878 = vrot.lane.b32.xlu0 %v861, 127
      %v879 = vpop.permute.xlu0 %878
      %v880 = vsel %vm522, %v869, %v871
      %v881 = vsel %vm522, %v871, %v873
      %v882 = vsel %vm522, %v875, %v877
      %v883 = vsel %vm522, %v877, %v879
      %v890 = vadd.f32 %v839, %v880
      %v891 = vadd.f32 %v840, %v881
      %v892 = vadd.f32 %v841, %v873
      %v893 = vadd.f32 %v842, %v882
      %v894 = vadd.f32 %v843, %v883
      %v895 = vadd.f32 %v844, %v879
      %s896 = scalar_lea.vmem %s5, 4
      %v897 = vld [vmem:[%s896] sm:$0x3]
      %v899 = vperm.slane %v897, 0
      %v900 = vperm.slane %v897, 1
      %901 = vrot.lane.b32.xlu0 %v899, 113
      %v902 = vpop.permute.xlu0 %901
      %903 = vrot.lane.b32.xlu0 %v900, 113
      %v904 = vpop.permute.xlu0 %903
      %vm905 = vcmask 924672
      %v906 = vsel %vm905, %v902, %v904
      %v910 = vmul.f32 %v258, %v902
      %v911 = vmul.f32 %v259, %v906
      %v912 = vmul.f32 %v260, %v904
      %s913 = scalar_lea.vmem %s1, 32
      %v914 = vld [vmem:[%s913] sm:$0xff]
      %v915 = vld [vmem:[%s913 + $0x8] sm:$0xff]
      %917 = vset.pattern.permute.xlu0 0
      %918 = vperm.xlu0 %917, %v914
      %v919 = vpop.permute.xlu0 %918
      %922 = vset.pattern.permute.xlu0 0
      %923 = vperm.xlu0 %922, %v915
      %v924 = vpop.permute.xlu0 %923
      %v926 = vperm.slane %v910, 0
      %v927 = vperm.slane %v911, 0
      %v928 = vperm.slane %v912, 0
      %v929 = vmul.f32 %v919, %v926
      %v930 = vmul.f32 %v919, %v927
      %v931 = vmul.f32 %v919, %v928
      %v932 = vmul.f32 %v924, %v926
      %v933 = vmul.f32 %v924, %v927
      %v934 = vmul.f32 %v924, %v928
      %941 = vrot.lane.b32.xlu0 %v929, 126
      %v942 = vpop.permute.xlu0 %941
      %943 = vrot.lane.b32.xlu0 %v930, 126
      %v944 = vpop.permute.xlu0 %943
      %945 = vrot.lane.b32.xlu0 %v931, 126
      %v946 = vpop.permute.xlu0 %945
      %947 = vrot.lane.b32.xlu0 %v932, 126
      %v948 = vpop.permute.xlu0 %947
      %949 = vrot.lane.b32.xlu0 %v933, 126
      %v950 = vpop.permute.xlu0 %949
      %951 = vrot.lane.b32.xlu0 %v934, 126
      %v952 = vpop.permute.xlu0 %951
      %vm953 = vcmask 1031168
      %v954 = vsel %vm953, %v942, %v944
      %v955 = vsel %vm953, %v944, %v946
      %v956 = vsel %vm953, %v948, %v950
      %v957 = vsel %vm953, %v950, %v952
      %v964 = vadd.f32 %v890, %v954
      %v965 = vadd.f32 %v891, %v955
      %v966 = vadd.f32 %v892, %v946
      %v967 = vadd.f32 %v893, %v956
      %v968 = vadd.f32 %v894, %v957
      %v969 = vadd.f32 %v895, %v952
      %970 = vset.pattern.permute.xlu0 1
      %971 = vperm.xlu0 %970, %v914
      %v972 = vpop.permute.xlu0 %971
      %974 = vset.pattern.permute.xlu0 1
      %975 = vperm.xlu0 %974, %v915
      %v976 = vpop.permute.xlu0 %975
      %v978 = vperm.slane %v910, 1
      %v979 = vperm.slane %v911, 1
      %v980 = vperm.slane %v912, 1
      %v981 = vmul.f32 %v972, %v978
      %v982 = vmul.f32 %v972, %v979
      %v983 = vmul.f32 %v972, %v980
      %v984 = vmul.f32 %v976, %v978
      %v985 = vmul.f32 %v976, %v979
      %v986 = vmul.f32 %v976, %v980
      %993 = vrot.lane.b32.xlu0 %v981, 126
      %v994 = vpop.permute.xlu0 %993
      %995 = vrot.lane.b32.xlu0 %v982, 126
      %v996 = vpop.permute.xlu0 %995
      %997 = vrot.lane.b32.xlu0 %v983, 126
      %v998 = vpop.permute.xlu0 %997
      %999 = vrot.lane.b32.xlu0 %v984, 126
      %v1000 = vpop.permute.xlu0 %999
      %1001 = vrot.lane.b32.xlu0 %v985, 126
      %v1002 = vpop.permute.xlu0 %1001
      %1003 = vrot.lane.b32.xlu0 %v986, 126
      %v1004 = vpop.permute.xlu0 %1003
      %v1005 = vsel %vm953, %v994, %v996
      %v1006 = vsel %vm953, %v996, %v998
      %v1007 = vsel %vm953, %v1000, %v1002
      %v1008 = vsel %vm953, %v1002, %v1004
      %v1015 = vadd.f32 %v964, %v1005
      %v1016 = vadd.f32 %v965, %v1006
      %v1017 = vadd.f32 %v966, %v998
      %v1018 = vadd.f32 %v967, %v1007
      %v1019 = vadd.f32 %v968, %v1008
      %v1020 = vadd.f32 %v969, %v1004
      %1021 = vset.pattern.permute.xlu0 2
      %1022 = vperm.xlu0 %1021, %v914
      %v1023 = vpop.permute.xlu0 %1022
      %1025 = vset.pattern.permute.xlu0 2
      %1026 = vperm.xlu0 %1025, %v915
      %v1027 = vpop.permute.xlu0 %1026
      %v1029 = vperm.slane %v910, 2
      %v1030 = vperm.slane %v911, 2
      %v1031 = vperm.slane %v912, 2
      %v1032 = vmul.f32 %v1023, %v1029
      %v1033 = vmul.f32 %v1023, %v1030
      %v1034 = vmul.f32 %v1023, %v1031
      %v1035 = vmul.f32 %v1027, %v1029
      %v1036 = vmul.f32 %v1027, %v1030
      %v1037 = vmul.f32 %v1027, %v1031
      %1044 = vrot.lane.b32.xlu0 %v1032, 126
      %v1045 = vpop.permute.xlu0 %1044
      %1046 = vrot.lane.b32.xlu0 %v1033, 126
      %v1047 = vpop.permute.xlu0 %1046
      %1048 = vrot.lane.b32.xlu0 %v1034, 126
      %v1049 = vpop.permute.xlu0 %1048
      %1050 = vrot.lane.b32.xlu0 %v1035, 126
      %v1051 = vpop.permute.xlu0 %1050
      %1052 = vrot.lane.b32.xlu0 %v1036, 126
      %v1053 = vpop.permute.xlu0 %1052
      %1054 = vrot.lane.b32.xlu0 %v1037, 126
      %v1055 = vpop.permute.xlu0 %1054
      %v1056 = vsel %vm953, %v1045, %v1047
      %v1057 = vsel %vm953, %v1047, %v1049
      %v1058 = vsel %vm953, %v1051, %v1053
      %v1059 = vsel %vm953, %v1053, %v1055
      %v1066 = vadd.f32 %v1015, %v1056
      %v1067 = vadd.f32 %v1016, %v1057
      %v1068 = vadd.f32 %v1017, %v1049
      %v1069 = vadd.f32 %v1018, %v1058
      %v1070 = vadd.f32 %v1019, %v1059
      %v1071 = vadd.f32 %v1020, %v1055
      %1072 = vset.pattern.permute.xlu0 3
      %1073 = vperm.xlu0 %1072, %v914
      %v1074 = vpop.permute.xlu0 %1073
      %1076 = vset.pattern.permute.xlu0 3
      %1077 = vperm.xlu0 %1076, %v915
      %v1078 = vpop.permute.xlu0 %1077
      %v1080 = vperm.slane %v910, 3
      %v1081 = vperm.slane %v911, 3
      %v1082 = vperm.slane %v912, 3
      %v1083 = vmul.f32 %v1074, %v1080
      %v1084 = vmul.f32 %v1074, %v1081
      %v1085 = vmul.f32 %v1074, %v1082
      %v1086 = vmul.f32 %v1078, %v1080
      %v1087 = vmul.f32 %v1078, %v1081
      %v1088 = vmul.f32 %v1078, %v1082
      %1095 = vrot.lane.b32.xlu0 %v1083, 126
      %v1096 = vpop.permute.xlu0 %1095
      %1097 = vrot.lane.b32.xlu0 %v1084, 126
      %v1098 = vpop.permute.xlu0 %1097
      %1099 = vrot.lane.b32.xlu0 %v1085, 126
      %v1100 = vpop.permute.xlu0 %1099
      %1101 = vrot.lane.b32.xlu0 %v1086, 126
      %v1102 = vpop.permute.xlu0 %1101
      %1103 = vrot.lane.b32.xlu0 %v1087, 126
      %v1104 = vpop.permute.xlu0 %1103
      %1105 = vrot.lane.b32.xlu0 %v1088, 126
      %v1106 = vpop.permute.xlu0 %1105
      %v1107 = vsel %vm953, %v1096, %v1098
      %v1108 = vsel %vm953, %v1098, %v1100
      %v1109 = vsel %vm953, %v1102, %v1104
      %v1110 = vsel %vm953, %v1104, %v1106
      %v1117 = vadd.f32 %v1066, %v1107
      %v1118 = vadd.f32 %v1067, %v1108
      %v1119 = vadd.f32 %v1068, %v1100
      %v1120 = vadd.f32 %v1069, %v1109
      %v1121 = vadd.f32 %v1070, %v1110
      %v1122 = vadd.f32 %v1071, %v1106
      %1123 = vset.pattern.permute.xlu0 4
      %1124 = vperm.xlu0 %1123, %v914
      %v1125 = vpop.permute.xlu0 %1124
      %1127 = vset.pattern.permute.xlu0 4
      %1128 = vperm.xlu0 %1127, %v915
      %v1129 = vpop.permute.xlu0 %1128
      %v1131 = vperm.slane %v910, 4
      %v1132 = vperm.slane %v911, 4
      %v1133 = vperm.slane %v912, 4
      %v1134 = vmul.f32 %v1125, %v1131
      %v1135 = vmul.f32 %v1125, %v1132
      %v1136 = vmul.f32 %v1125, %v1133
      %v1137 = vmul.f32 %v1129, %v1131
      %v1138 = vmul.f32 %v1129, %v1132
      %v1139 = vmul.f32 %v1129, %v1133
      %1146 = vrot.lane.b32.xlu0 %v1134, 126
      %v1147 = vpop.permute.xlu0 %1146
      %1148 = vrot.lane.b32.xlu0 %v1135, 126
      %v1149 = vpop.permute.xlu0 %1148
      %1150 = vrot.lane.b32.xlu0 %v1136, 126
      %v1151 = vpop.permute.xlu0 %1150
      %1152 = vrot.lane.b32.xlu0 %v1137, 126
      %v1153 = vpop.permute.xlu0 %1152
      %1154 = vrot.lane.b32.xlu0 %v1138, 126
      %v1155 = vpop.permute.xlu0 %1154
      %1156 = vrot.lane.b32.xlu0 %v1139, 126
      %v1157 = vpop.permute.xlu0 %1156
      %v1158 = vsel %vm953, %v1147, %v1149
      %v1159 = vsel %vm953, %v1149, %v1151
      %v1160 = vsel %vm953, %v1153, %v1155
      %v1161 = vsel %vm953, %v1155, %v1157
      %v1168 = vadd.f32 %v1117, %v1158
      %v1169 = vadd.f32 %v1118, %v1159
      %v1170 = vadd.f32 %v1119, %v1151
      %v1171 = vadd.f32 %v1120, %v1160
      %v1172 = vadd.f32 %v1121, %v1161
      %v1173 = vadd.f32 %v1122, %v1157
      %1174 = vset.pattern.permute.xlu0 5
      %1175 = vperm.xlu0 %1174, %v914
      %v1176 = vpop.permute.xlu0 %1175
      %1178 = vset.pattern.permute.xlu0 5
      %1179 = vperm.xlu0 %1178, %v915
      %v1180 = vpop.permute.xlu0 %1179
      %v1182 = vperm.slane %v910, 5
      %v1183 = vperm.slane %v911, 5
      %v1184 = vperm.slane %v912, 5
      %v1185 = vmul.f32 %v1176, %v1182
      %v1186 = vmul.f32 %v1176, %v1183
      %v1187 = vmul.f32 %v1176, %v1184
      %v1188 = vmul.f32 %v1180, %v1182
      %v1189 = vmul.f32 %v1180, %v1183
      %v1190 = vmul.f32 %v1180, %v1184
      %1197 = vrot.lane.b32.xlu0 %v1185, 126
      %v1198 = vpop.permute.xlu0 %1197
      %1199 = vrot.lane.b32.xlu0 %v1186, 126
      %v1200 = vpop.permute.xlu0 %1199
      %1201 = vrot.lane.b32.xlu0 %v1187, 126
      %v1202 = vpop.permute.xlu0 %1201
      %1203 = vrot.lane.b32.xlu0 %v1188, 126
      %v1204 = vpop.permute.xlu0 %1203
      %1205 = vrot.lane.b32.xlu0 %v1189, 126
      %v1206 = vpop.permute.xlu0 %1205
      %1207 = vrot.lane.b32.xlu0 %v1190, 126
      %v1208 = vpop.permute.xlu0 %1207
      %v1209 = vsel %vm953, %v1198, %v1200
      %v1210 = vsel %vm953, %v1200, %v1202
      %v1211 = vsel %vm953, %v1204, %v1206
      %v1212 = vsel %vm953, %v1206, %v1208
      %v1219 = vadd.f32 %v1168, %v1209
      %v1220 = vadd.f32 %v1169, %v1210
      %v1221 = vadd.f32 %v1170, %v1202
      %v1222 = vadd.f32 %v1171, %v1211
      %v1223 = vadd.f32 %v1172, %v1212
      %v1224 = vadd.f32 %v1173, %v1208
      %1225 = vset.pattern.permute.xlu0 6
      %1226 = vperm.xlu0 %1225, %v914
      %v1227 = vpop.permute.xlu0 %1226
      %1229 = vset.pattern.permute.xlu0 6
      %1230 = vperm.xlu0 %1229, %v915
      %v1231 = vpop.permute.xlu0 %1230
      %v1233 = vperm.slane %v910, 6
      %v1234 = vperm.slane %v911, 6
      %v1235 = vperm.slane %v912, 6
      %v1236 = vmul.f32 %v1227, %v1233
      %v1237 = vmul.f32 %v1227, %v1234
      %v1238 = vmul.f32 %v1227, %v1235
      %v1239 = vmul.f32 %v1231, %v1233
      %v1240 = vmul.f32 %v1231, %v1234
      %v1241 = vmul.f32 %v1231, %v1235
      %1248 = vrot.lane.b32.xlu0 %v1236, 126
      %v1249 = vpop.permute.xlu0 %1248
      %1250 = vrot.lane.b32.xlu0 %v1237, 126
      %v1251 = vpop.permute.xlu0 %1250
      %1252 = vrot.lane.b32.xlu0 %v1238, 126
      %v1253 = vpop.permute.xlu0 %1252
      %1254 = vrot.lane.b32.xlu0 %v1239, 126
      %v1255 = vpop.permute.xlu0 %1254
      %1256 = vrot.lane.b32.xlu0 %v1240, 126
      %v1257 = vpop.permute.xlu0 %1256
      %1258 = vrot.lane.b32.xlu0 %v1241, 126
      %v1259 = vpop.permute.xlu0 %1258
      %v1260 = vsel %vm953, %v1249, %v1251
      %v1261 = vsel %vm953, %v1251, %v1253
      %v1262 = vsel %vm953, %v1255, %v1257
      %v1263 = vsel %vm953, %v1257, %v1259
      %v1270 = vadd.f32 %v1219, %v1260
      %v1271 = vadd.f32 %v1220, %v1261
      %v1272 = vadd.f32 %v1221, %v1253
      %v1273 = vadd.f32 %v1222, %v1262
      %v1274 = vadd.f32 %v1223, %v1263
      %v1275 = vadd.f32 %v1224, %v1259
      %1276 = vset.pattern.permute.xlu0 7
      %1277 = vperm.xlu0 %1276, %v914
      %v1278 = vpop.permute.xlu0 %1277
      %1280 = vset.pattern.permute.xlu0 7
      %1281 = vperm.xlu0 %1280, %v915
      %v1282 = vpop.permute.xlu0 %1281
      %v1284 = vperm.slane %v910, 7
      %v1285 = vperm.slane %v911, 7
      %v1286 = vperm.slane %v912, 7
      %v1287 = vmul.f32 %v1278, %v1284
      %v1288 = vmul.f32 %v1278, %v1285
      %v1289 = vmul.f32 %v1278, %v1286
      %v1290 = vmul.f32 %v1282, %v1284
      %v1291 = vmul.f32 %v1282, %v1285
      %v1292 = vmul.f32 %v1282, %v1286
      %1299 = vrot.lane.b32.xlu0 %v1287, 126
      %v1300 = vpop.permute.xlu0 %1299
      %1301 = vrot.lane.b32.xlu0 %v1288, 126
      %v1302 = vpop.permute.xlu0 %1301
      %1303 = vrot.lane.b32.xlu0 %v1289, 126
      %v1304 = vpop.permute.xlu0 %1303
      %1305 = vrot.lane.b32.xlu0 %v1290, 126
      %v1306 = vpop.permute.xlu0 %1305
      %1307 = vrot.lane.b32.xlu0 %v1291, 126
      %v1308 = vpop.permute.xlu0 %1307
      %1309 = vrot.lane.b32.xlu0 %v1292, 126
      %v1310 = vpop.permute.xlu0 %1309
      %v1311 = vsel %vm953, %v1300, %v1302
      %v1312 = vsel %vm953, %v1302, %v1304
      %v1313 = vsel %vm953, %v1306, %v1308
      %v1314 = vsel %vm953, %v1308, %v1310
      %v1321 = vadd.f32 %v1270, %v1311
      %v1322 = vadd.f32 %v1271, %v1312
      %v1323 = vadd.f32 %v1272, %v1304
      %v1324 = vadd.f32 %v1273, %v1313
      %v1325 = vadd.f32 %v1274, %v1314
      %v1326 = vadd.f32 %v1275, %v1310
      %s1327 = scalar_lea.vmem %s5, 6
      %v1328 = vld [vmem:[%s1327] sm:$0x3]
      %v1330 = vperm.slane %v1328, 0
      %v1331 = vperm.slane %v1328, 1
      %1332 = vrot.lane.b32.xlu0 %v1330, 127
      %v1333 = vpop.permute.xlu0 %1332
      %1334 = vrot.lane.b32.xlu0 %v1331, 127
      %v1335 = vpop.permute.xlu0 %1334
      %v1336 = vsel %vm522, %v1333, %v1335
      %v1340 = vmul.f32 %v258, %v1333
      %v1341 = vmul.f32 %v259, %v1336
      %v1342 = vmul.f32 %v260, %v1335
      %s1343 = scalar_lea.vmem %s1, 48
      %v1344 = vld [vmem:[%s1343] sm:$0xff]
      %v1345 = vld [vmem:[%s1343 + $0x8] sm:$0xff]
      %1347 = vset.pattern.permute.xlu0 0
      %1348 = vperm.xlu0 %1347, %v1344
      %v1349 = vpop.permute.xlu0 %1348
      %1352 = vset.pattern.permute.xlu0 0
      %1353 = vperm.xlu0 %1352, %v1345
      %v1354 = vpop.permute.xlu0 %1353
      %v1356 = vperm.slane %v1340, 0
      %v1357 = vperm.slane %v1341, 0
      %v1358 = vperm.slane %v1342, 0
      %v1359 = vmul.f32 %v1349, %v1356
      %v1360 = vmul.f32 %v1349, %v1357
      %v1361 = vmul.f32 %v1349, %v1358
      %v1362 = vmul.f32 %v1354, %v1356
      %v1363 = vmul.f32 %v1354, %v1357
      %v1364 = vmul.f32 %v1354, %v1358
      %1371 = vrot.lane.b32.xlu0 %v1359, 112
      %v1372 = vpop.permute.xlu0 %1371
      %1373 = vrot.lane.b32.xlu0 %v1360, 112
      %v1374 = vpop.permute.xlu0 %1373
      %1375 = vrot.lane.b32.xlu0 %v1361, 112
      %v1376 = vpop.permute.xlu0 %1375
      %1377 = vrot.lane.b32.xlu0 %v1362, 112
      %v1378 = vpop.permute.xlu0 %1377
      %1379 = vrot.lane.b32.xlu0 %v1363, 112
      %v1380 = vpop.permute.xlu0 %1379
      %1381 = vrot.lane.b32.xlu0 %v1364, 112
      %v1382 = vpop.permute.xlu0 %1381
      %v1383 = vsel %vm474, %v1372, %v1374
      %v1384 = vsel %vm474, %v1374, %v1376
      %v1385 = vsel %vm474, %v1378, %v1380
      %v1386 = vsel %vm474, %v1380, %v1382
      %v1393 = vadd.f32 %v1321, %v1383
      %v1394 = vadd.f32 %v1322, %v1384
      %v1395 = vadd.f32 %v1323, %v1376
      %v1396 = vadd.f32 %v1324, %v1385
      %v1397 = vadd.f32 %v1325, %v1386
      %v1398 = vadd.f32 %v1326, %v1382
      %1399 = vset.pattern.permute.xlu0 1
      %1400 = vperm.xlu0 %1399, %v1344
      %v1401 = vpop.permute.xlu0 %1400
      %1403 = vset.pattern.permute.xlu0 1
      %1404 = vperm.xlu0 %1403, %v1345
      %v1405 = vpop.permute.xlu0 %1404
      %v1407 = vperm.slane %v1340, 1
      %v1408 = vperm.slane %v1341, 1
      %v1409 = vperm.slane %v1342, 1
      %v1410 = vmul.f32 %v1401, %v1407
      %v1411 = vmul.f32 %v1401, %v1408
      %v1412 = vmul.f32 %v1401, %v1409
      %v1413 = vmul.f32 %v1405, %v1407
      %v1414 = vmul.f32 %v1405, %v1408
      %v1415 = vmul.f32 %v1405, %v1409
      %1422 = vrot.lane.b32.xlu0 %v1410, 112
      %v1423 = vpop.permute.xlu0 %1422
      %1424 = vrot.lane.b32.xlu0 %v1411, 112
      %v1425 = vpop.permute.xlu0 %1424
      %1426 = vrot.lane.b32.xlu0 %v1412, 112
      %v1427 = vpop.permute.xlu0 %1426
      %1428 = vrot.lane.b32.xlu0 %v1413, 112
      %v1429 = vpop.permute.xlu0 %1428
      %1430 = vrot.lane.b32.xlu0 %v1414, 112
      %v1431 = vpop.permute.xlu0 %1430
      %1432 = vrot.lane.b32.xlu0 %v1415, 112
      %v1433 = vpop.permute.xlu0 %1432
      %v1434 = vsel %vm474, %v1423, %v1425
      %v1435 = vsel %vm474, %v1425, %v1427
      %v1436 = vsel %vm474, %v1429, %v1431
      %v1437 = vsel %vm474, %v1431, %v1433
      %v1444 = vadd.f32 %v1393, %v1434
      %v1445 = vadd.f32 %v1394, %v1435
      %v1446 = vadd.f32 %v1395, %v1427
      %v1447 = vadd.f32 %v1396, %v1436
      %v1448 = vadd.f32 %v1397, %v1437
      %v1449 = vadd.f32 %v1398, %v1433
      %1450 = vset.pattern.permute.xlu0 2
      %1451 = vperm.xlu0 %1450, %v1344
      %v1452 = vpop.permute.xlu0 %1451
      %1454 = vset.pattern.permute.xlu0 2
      %1455 = vperm.xlu0 %1454, %v1345
      %v1456 = vpop.permute.xlu0 %1455
      %v1458 = vperm.slane %v1340, 2
      %v1459 = vperm.slane %v1341, 2
      %v1460 = vperm.slane %v1342, 2
      %v1461 = vmul.f32 %v1452, %v1458
      %v1462 = vmul.f32 %v1452, %v1459
      %v1463 = vmul.f32 %v1452, %v1460
      %v1464 = vmul.f32 %v1456, %v1458
      %v1465 = vmul.f32 %v1456, %v1459
      %v1466 = vmul.f32 %v1456, %v1460
      %1473 = vrot.lane.b32.xlu0 %v1461, 112
      %v1474 = vpop.permute.xlu0 %1473
      %1475 = vrot.lane.b32.xlu0 %v1462, 112
      %v1476 = vpop.permute.xlu0 %1475
      %1477 = vrot.lane.b32.xlu0 %v1463, 112
      %v1478 = vpop.permute.xlu0 %1477
      %1479 = vrot.lane.b32.xlu0 %v1464, 112
      %v1480 = vpop.permute.xlu0 %1479
      %1481 = vrot.lane.b32.xlu0 %v1465, 112
      %v1482 = vpop.permute.xlu0 %1481
      %1483 = vrot.lane.b32.xlu0 %v1466, 112
      %v1484 = vpop.permute.xlu0 %1483
      %v1485 = vsel %vm474, %v1474, %v1476
      %v1486 = vsel %vm474, %v1476, %v1478
      %v1487 = vsel %vm474, %v1480, %v1482
      %v1488 = vsel %vm474, %v1482, %v1484
      %v1495 = vadd.f32 %v1444, %v1485
      %v1496 = vadd.f32 %v1445, %v1486
      %v1497 = vadd.f32 %v1446, %v1478
      %v1498 = vadd.f32 %v1447, %v1487
      %v1499 = vadd.f32 %v1448, %v1488
      %v1500 = vadd.f32 %v1449, %v1484
      %1501 = vset.pattern.permute.xlu0 3
      %1502 = vperm.xlu0 %1501, %v1344
      %v1503 = vpop.permute.xlu0 %1502
      %1505 = vset.pattern.permute.xlu0 3
      %1506 = vperm.xlu0 %1505, %v1345
      %v1507 = vpop.permute.xlu0 %1506
      %v1509 = vperm.slane %v1340, 3
      %v1510 = vperm.slane %v1341, 3
      %v1511 = vperm.slane %v1342, 3
      %v1512 = vmul.f32 %v1503, %v1509
      %v1513 = vmul.f32 %v1503, %v1510
      %v1514 = vmul.f32 %v1503, %v1511
      %v1515 = vmul.f32 %v1507, %v1509
      %v1516 = vmul.f32 %v1507, %v1510
      %v1517 = vmul.f32 %v1507, %v1511
      %1524 = vrot.lane.b32.xlu0 %v1512, 112
      %v1525 = vpop.permute.xlu0 %1524
      %1526 = vrot.lane.b32.xlu0 %v1513, 112
      %v1527 = vpop.permute.xlu0 %1526
      %1528 = vrot.lane.b32.xlu0 %v1514, 112
      %v1529 = vpop.permute.xlu0 %1528
      %1530 = vrot.lane.b32.xlu0 %v1515, 112
      %v1531 = vpop.permute.xlu0 %1530
      %1532 = vrot.lane.b32.xlu0 %v1516, 112
      %v1533 = vpop.permute.xlu0 %1532
      %1534 = vrot.lane.b32.xlu0 %v1517, 112
      %v1535 = vpop.permute.xlu0 %1534
      %v1536 = vsel %vm474, %v1525, %v1527
      %v1537 = vsel %vm474, %v1527, %v1529
      %v1538 = vsel %vm474, %v1531, %v1533
      %v1539 = vsel %vm474, %v1533, %v1535
      %v1546 = vadd.f32 %v1495, %v1536
      %v1547 = vadd.f32 %v1496, %v1537
      %v1548 = vadd.f32 %v1497, %v1529
      %v1549 = vadd.f32 %v1498, %v1538
      %v1550 = vadd.f32 %v1499, %v1539
      %v1551 = vadd.f32 %v1500, %v1535
      %1552 = vset.pattern.permute.xlu0 4
      %1553 = vperm.xlu0 %1552, %v1344
      %v1554 = vpop.permute.xlu0 %1553
      %1556 = vset.pattern.permute.xlu0 4
      %1557 = vperm.xlu0 %1556, %v1345
      %v1558 = vpop.permute.xlu0 %1557
      %v1560 = vperm.slane %v1340, 4
      %v1561 = vperm.slane %v1341, 4
      %v1562 = vperm.slane %v1342, 4
      %v1563 = vmul.f32 %v1554, %v1560
      %v1564 = vmul.f32 %v1554, %v1561
      %v1565 = vmul.f32 %v1554, %v1562
      %v1566 = vmul.f32 %v1558, %v1560
      %v1567 = vmul.f32 %v1558, %v1561
      %v1568 = vmul.f32 %v1558, %v1562
      %1575 = vrot.lane.b32.xlu0 %v1563, 112
      %v1576 = vpop.permute.xlu0 %1575
      %1577 = vrot.lane.b32.xlu0 %v1564, 112
      %v1578 = vpop.permute.xlu0 %1577
      %1579 = vrot.lane.b32.xlu0 %v1565, 112
      %v1580 = vpop.permute.xlu0 %1579
      %1581 = vrot.lane.b32.xlu0 %v1566, 112
      %v1582 = vpop.permute.xlu0 %1581
      %1583 = vrot.lane.b32.xlu0 %v1567, 112
      %v1584 = vpop.permute.xlu0 %1583
      %1585 = vrot.lane.b32.xlu0 %v1568, 112
      %v1586 = vpop.permute.xlu0 %1585
      %v1587 = vsel %vm474, %v1576, %v1578
      %v1588 = vsel %vm474, %v1578, %v1580
      %v1589 = vsel %vm474, %v1582, %v1584
      %v1590 = vsel %vm474, %v1584, %v1586
      %v1597 = vadd.f32 %v1546, %v1587
      %v1598 = vadd.f32 %v1547, %v1588
      %v1599 = vadd.f32 %v1548, %v1580
      %v1600 = vadd.f32 %v1549, %v1589
      %v1601 = vadd.f32 %v1550, %v1590
      %v1602 = vadd.f32 %v1551, %v1586
      %1603 = vset.pattern.permute.xlu0 5
      %1604 = vperm.xlu0 %1603, %v1344
      %v1605 = vpop.permute.xlu0 %1604
      %1607 = vset.pattern.permute.xlu0 5
      %1608 = vperm.xlu0 %1607, %v1345
      %v1609 = vpop.permute.xlu0 %1608
      %v1611 = vperm.slane %v1340, 5
      %v1612 = vperm.slane %v1341, 5
      %v1613 = vperm.slane %v1342, 5
      %v1614 = vmul.f32 %v1605, %v1611
      %v1615 = vmul.f32 %v1605, %v1612
      %v1616 = vmul.f32 %v1605, %v1613
      %v1617 = vmul.f32 %v1609, %v1611
      %v1618 = vmul.f32 %v1609, %v1612
      %v1619 = vmul.f32 %v1609, %v1613
      %1626 = vrot.lane.b32.xlu0 %v1614, 112
      %v1627 = vpop.permute.xlu0 %1626
      %1628 = vrot.lane.b32.xlu0 %v1615, 112
      %v1629 = vpop.permute.xlu0 %1628
      %1630 = vrot.lane.b32.xlu0 %v1616, 112
      %v1631 = vpop.permute.xlu0 %1630
      %1632 = vrot.lane.b32.xlu0 %v1617, 112
      %v1633 = vpop.permute.xlu0 %1632
      %1634 = vrot.lane.b32.xlu0 %v1618, 112
      %v1635 = vpop.permute.xlu0 %1634
      %1636 = vrot.lane.b32.xlu0 %v1619, 112
      %v1637 = vpop.permute.xlu0 %1636
      %v1638 = vsel %vm474, %v1627, %v1629
      %v1639 = vsel %vm474, %v1629, %v1631
      %v1640 = vsel %vm474, %v1633, %v1635
      %v1641 = vsel %vm474, %v1635, %v1637
      %v1648 = vadd.f32 %v1597, %v1638
      %v1649 = vadd.f32 %v1598, %v1639
      %v1650 = vadd.f32 %v1599, %v1631
      %v1651 = vadd.f32 %v1600, %v1640
      %v1652 = vadd.f32 %v1601, %v1641
      %v1653 = vadd.f32 %v1602, %v1637
      %1654 = vset.pattern.permute.xlu0 6
      %1655 = vperm.xlu0 %1654, %v1344
      %v1656 = vpop.permute.xlu0 %1655
      %1658 = vset.pattern.permute.xlu0 6
      %1659 = vperm.xlu0 %1658, %v1345
      %v1660 = vpop.permute.xlu0 %1659
      %v1662 = vperm.slane %v1340, 6
      %v1663 = vperm.slane %v1341, 6
      %v1664 = vperm.slane %v1342, 6
      %v1665 = vmul.f32 %v1656, %v1662
      %v1666 = vmul.f32 %v1656, %v1663
      %v1667 = vmul.f32 %v1656, %v1664
      %v1668 = vmul.f32 %v1660, %v1662
      %v1669 = vmul.f32 %v1660, %v1663
      %v1670 = vmul.f32 %v1660, %v1664
      %1677 = vrot.lane.b32.xlu0 %v1665, 112
      %v1678 = vpop.permute.xlu0 %1677
      %1679 = vrot.lane.b32.xlu0 %v1666, 112
      %v1680 = vpop.permute.xlu0 %1679
      %1681 = vrot.lane.b32.xlu0 %v1667, 112
      %v1682 = vpop.permute.xlu0 %1681
      %1683 = vrot.lane.b32.xlu0 %v1668, 112
      %v1684 = vpop.permute.xlu0 %1683
      %1685 = vrot.lane.b32.xlu0 %v1669, 112
      %v1686 = vpop.permute.xlu0 %1685
      %1687 = vrot.lane.b32.xlu0 %v1670, 112
      %v1688 = vpop.permute.xlu0 %1687
      %v1689 = vsel %vm474, %v1678, %v1680
      %v1690 = vsel %vm474, %v1680, %v1682
      %v1691 = vsel %vm474, %v1684, %v1686
      %v1692 = vsel %vm474, %v1686, %v1688
      %v1699 = vadd.f32 %v1648, %v1689
      %v1700 = vadd.f32 %v1649, %v1690
      %v1701 = vadd.f32 %v1650, %v1682
      %v1702 = vadd.f32 %v1651, %v1691
      %v1703 = vadd.f32 %v1652, %v1692
      %v1704 = vadd.f32 %v1653, %v1688
      %1705 = vset.pattern.permute.xlu0 7
      %1706 = vperm.xlu0 %1705, %v1344
      %v1707 = vpop.permute.xlu0 %1706
      %1709 = vset.pattern.permute.xlu0 7
      %1710 = vperm.xlu0 %1709, %v1345
      %v1711 = vpop.permute.xlu0 %1710
      %v1713 = vperm.slane %v1340, 7
      %v1714 = vperm.slane %v1341, 7
      %v1715 = vperm.slane %v1342, 7
      %v1716 = vmul.f32 %v1707, %v1713
      %v1717 = vmul.f32 %v1707, %v1714
      %v1718 = vmul.f32 %v1707, %v1715
      %v1719 = vmul.f32 %v1711, %v1713
      %v1720 = vmul.f32 %v1711, %v1714
      %v1721 = vmul.f32 %v1711, %v1715
      %1728 = vrot.lane.b32.xlu0 %v1716, 112
      %v1729 = vpop.permute.xlu0 %1728
      %1730 = vrot.lane.b32.xlu0 %v1717, 112
      %v1731 = vpop.permute.xlu0 %1730
      %1732 = vrot.lane.b32.xlu0 %v1718, 112
      %v1733 = vpop.permute.xlu0 %1732
      %1734 = vrot.lane.b32.xlu0 %v1719, 112
      %v1735 = vpop.permute.xlu0 %1734
      %1736 = vrot.lane.b32.xlu0 %v1720, 112
      %v1737 = vpop.permute.xlu0 %1736
      %1738 = vrot.lane.b32.xlu0 %v1721, 112
      %v1739 = vpop.permute.xlu0 %1738
      %v1740 = vsel %vm474, %v1729, %v1731
      %v1741 = vsel %vm474, %v1731, %v1733
      %v1742 = vsel %vm474, %v1735, %v1737
      %v1743 = vsel %vm474, %v1737, %v1739
      %v1750 = vadd.f32 %v1699, %v1740
      %v1751 = vadd.f32 %v1700, %v1741
      %v1752 = vadd.f32 %v1701, %v1733
      %v1753 = vadd.f32 %v1702, %v1742
      %v1754 = vadd.f32 %v1703, %v1743
      %v1755 = vadd.f32 %v1704, %v1739
      %s1756 = scalar_lea.vmem %s5, 8
      %v1757 = vld [vmem:[%s1756] sm:$0x3]
      %v1759 = vperm.slane %v1757, 0
      %v1760 = vperm.slane %v1757, 1
      %v1763 = vmul.f32 %v259, %v1759
      %v1764 = vmul.f32 %v260, %v1760
      %s1765 = scalar_lea.vmem %s1, 64
      %v1766 = vld [vmem:[%s1765] sm:$0xff]
      %v1767 = vld [vmem:[%s1765 + $0x8] sm:$0xff]
      %1769 = vset.pattern.permute.xlu0 0
      %1770 = vperm.xlu0 %1769, %v1766
      %v1771 = vpop.permute.xlu0 %1770
      %1774 = vset.pattern.permute.xlu0 0
      %1775 = vperm.xlu0 %1774, %v1767
      %v1776 = vpop.permute.xlu0 %1775
      %v1778 = vperm.slane %v1763, 0
      %v1779 = vperm.slane %v1764, 0
      %v1780 = vmul.f32 %v1771, %v1778
      %v1781 = vmul.f32 %v1771, %v1779
      %v1782 = vmul.f32 %v1776, %v1778
      %v1783 = vmul.f32 %v1776, %v1779
      %1788 = vrot.lane.b32.xlu0 %v1780, 111
      %v1789 = vpop.permute.xlu0 %1788
      %1790 = vrot.lane.b32.xlu0 %v1781, 111
      %v1791 = vpop.permute.xlu0 %1790
      %1792 = vrot.lane.b32.xlu0 %v1782, 111
      %v1793 = vpop.permute.xlu0 %1792
      %1794 = vrot.lane.b32.xlu0 %v1783, 111
      %v1795 = vpop.permute.xlu0 %1794
      %v1796 = vsel %vm269, %v1789, %v1791
      %v1797 = vsel %vm269, %v1793, %v1795
      %v1804 = vadd.f32 %v1750, %v1789
      %v1805 = vadd.f32 %v1751, %v1796
      %v1806 = vadd.f32 %v1752, %v1791
      %v1807 = vadd.f32 %v1753, %v1793
      %v1808 = vadd.f32 %v1754, %v1797
      %v1809 = vadd.f32 %v1755, %v1795
      %1810 = vset.pattern.permute.xlu0 1
      %1811 = vperm.xlu0 %1810, %v1766
      %v1812 = vpop.permute.xlu0 %1811
      %1814 = vset.pattern.permute.xlu0 1
      %1815 = vperm.xlu0 %1814, %v1767
      %v1816 = vpop.permute.xlu0 %1815
      %v1818 = vperm.slane %v1763, 1
      %v1819 = vperm.slane %v1764, 1
      %v1820 = vmul.f32 %v1812, %v1818
      %v1821 = vmul.f32 %v1812, %v1819
      %v1822 = vmul.f32 %v1816, %v1818
      %v1823 = vmul.f32 %v1816, %v1819
      %1828 = vrot.lane.b32.xlu0 %v1820, 111
      %v1829 = vpop.permute.xlu0 %1828
      %1830 = vrot.lane.b32.xlu0 %v1821, 111
      %v1831 = vpop.permute.xlu0 %1830
      %1832 = vrot.lane.b32.xlu0 %v1822, 111
      %v1833 = vpop.permute.xlu0 %1832
      %1834 = vrot.lane.b32.xlu0 %v1823, 111
      %v1835 = vpop.permute.xlu0 %1834
      %v1836 = vsel %vm269, %v1829, %v1831
      %v1837 = vsel %vm269, %v1833, %v1835
      %v1844 = vadd.f32 %v1804, %v1829
      %v1845 = vadd.f32 %v1805, %v1836
      %v1846 = vadd.f32 %v1806, %v1831
      %v1847 = vadd.f32 %v1807, %v1833
      %v1848 = vadd.f32 %v1808, %v1837
      %v1849 = vadd.f32 %v1809, %v1835
      %1850 = vset.pattern.permute.xlu0 2
      %1851 = vperm.xlu0 %1850, %v1766
      %v1852 = vpop.permute.xlu0 %1851
      %1854 = vset.pattern.permute.xlu0 2
      %1855 = vperm.xlu0 %1854, %v1767
      %v1856 = vpop.permute.xlu0 %1855
      %v1858 = vperm.slane %v1763, 2
      %v1859 = vperm.slane %v1764, 2
      %v1860 = vmul.f32 %v1852, %v1858
      %v1861 = vmul.f32 %v1852, %v1859
      %v1862 = vmul.f32 %v1856, %v1858
      %v1863 = vmul.f32 %v1856, %v1859
      %1868 = vrot.lane.b32.xlu0 %v1860, 111
      %v1869 = vpop.permute.xlu0 %1868
      %1870 = vrot.lane.b32.xlu0 %v1861, 111
      %v1871 = vpop.permute.xlu0 %1870
      %1872 = vrot.lane.b32.xlu0 %v1862, 111
      %v1873 = vpop.permute.xlu0 %1872
      %1874 = vrot.lane.b32.xlu0 %v1863, 111
      %v1875 = vpop.permute.xlu0 %1874
      %v1876 = vsel %vm269, %v1869, %v1871
      %v1877 = vsel %vm269, %v1873, %v1875
      %v1884 = vadd.f32 %v1844, %v1869
      %v1885 = vadd.f32 %v1845, %v1876
      %v1886 = vadd.f32 %v1846, %v1871
      %v1887 = vadd.f32 %v1847, %v1873
      %v1888 = vadd.f32 %v1848, %v1877
      %v1889 = vadd.f32 %v1849, %v1875
      %1890 = vset.pattern.permute.xlu0 3
      %1891 = vperm.xlu0 %1890, %v1766
      %v1892 = vpop.permute.xlu0 %1891
      %1894 = vset.pattern.permute.xlu0 3
      %1895 = vperm.xlu0 %1894, %v1767
      %v1896 = vpop.permute.xlu0 %1895
      %v1898 = vperm.slane %v1763, 3
      %v1899 = vperm.slane %v1764, 3
      %v1900 = vmul.f32 %v1892, %v1898
      %v1901 = vmul.f32 %v1892, %v1899
      %v1902 = vmul.f32 %v1896, %v1898
      %v1903 = vmul.f32 %v1896, %v1899
      %1908 = vrot.lane.b32.xlu0 %v1900, 111
      %v1909 = vpop.permute.xlu0 %1908
      %1910 = vrot.lane.b32.xlu0 %v1901, 111
      %v1911 = vpop.permute.xlu0 %1910
      %1912 = vrot.lane.b32.xlu0 %v1902, 111
      %v1913 = vpop.permute.xlu0 %1912
      %1914 = vrot.lane.b32.xlu0 %v1903, 111
      %v1915 = vpop.permute.xlu0 %1914
      %v1916 = vsel %vm269, %v1909, %v1911
      %v1917 = vsel %vm269, %v1913, %v1915
      %v1924 = vadd.f32 %v1884, %v1909
      %v1925 = vadd.f32 %v1885, %v1916
      %v1926 = vadd.f32 %v1886, %v1911
      %v1927 = vadd.f32 %v1887, %v1913
      %v1928 = vadd.f32 %v1888, %v1917
      %v1929 = vadd.f32 %v1889, %v1915
      %1930 = vset.pattern.permute.xlu0 4
      %1931 = vperm.xlu0 %1930, %v1766
      %v1932 = vpop.permute.xlu0 %1931
      %1934 = vset.pattern.permute.xlu0 4
      %1935 = vperm.xlu0 %1934, %v1767
      %v1936 = vpop.permute.xlu0 %1935
      %v1938 = vperm.slane %v1763, 4
      %v1939 = vperm.slane %v1764, 4
      %v1940 = vmul.f32 %v1932, %v1938
      %v1941 = vmul.f32 %v1932, %v1939
      %v1942 = vmul.f32 %v1936, %v1938
      %v1943 = vmul.f32 %v1936, %v1939
      %1948 = vrot.lane.b32.xlu0 %v1940, 111
      %v1949 = vpop.permute.xlu0 %1948
      %1950 = vrot.lane.b32.xlu0 %v1941, 111
      %v1951 = vpop.permute.xlu0 %1950
      %1952 = vrot.lane.b32.xlu0 %v1942, 111
      %v1953 = vpop.permute.xlu0 %1952
      %1954 = vrot.lane.b32.xlu0 %v1943, 111
      %v1955 = vpop.permute.xlu0 %1954
      %v1956 = vsel %vm269, %v1949, %v1951
      %v1957 = vsel %vm269, %v1953, %v1955
      %v1964 = vadd.f32 %v1924, %v1949
      %v1965 = vadd.f32 %v1925, %v1956
      %v1966 = vadd.f32 %v1926, %v1951
      %v1967 = vadd.f32 %v1927, %v1953
      %v1968 = vadd.f32 %v1928, %v1957
      %v1969 = vadd.f32 %v1929, %v1955
      %1970 = vset.pattern.permute.xlu0 5
      %1971 = vperm.xlu0 %1970, %v1766
      %v1972 = vpop.permute.xlu0 %1971
      %1974 = vset.pattern.permute.xlu0 5
      %1975 = vperm.xlu0 %1974, %v1767
      %v1976 = vpop.permute.xlu0 %1975
      %v1978 = vperm.slane %v1763, 5
      %v1979 = vperm.slane %v1764, 5
      %v1980 = vmul.f32 %v1972, %v1978
      %v1981 = vmul.f32 %v1972, %v1979
      %v1982 = vmul.f32 %v1976, %v1978
      %v1983 = vmul.f32 %v1976, %v1979
      %1988 = vrot.lane.b32.xlu0 %v1980, 111
      %v1989 = vpop.permute.xlu0 %1988
      %1990 = vrot.lane.b32.xlu0 %v1981, 111
      %v1991 = vpop.permute.xlu0 %1990
      %1992 = vrot.lane.b32.xlu0 %v1982, 111
      %v1993 = vpop.permute.xlu0 %1992
      %1994 = vrot.lane.b32.xlu0 %v1983, 111
      %v1995 = vpop.permute.xlu0 %1994
      %v1996 = vsel %vm269, %v1989, %v1991
      %v1997 = vsel %vm269, %v1993, %v1995
      %v2004 = vadd.f32 %v1964, %v1989
      %v2005 = vadd.f32 %v1965, %v1996
      %v2006 = vadd.f32 %v1966, %v1991
      %v2007 = vadd.f32 %v1967, %v1993
      %v2008 = vadd.f32 %v1968, %v1997
      %v2009 = vadd.f32 %v1969, %v1995
      %2010 = vset.pattern.permute.xlu0 6
      %2011 = vperm.xlu0 %2010, %v1766
      %v2012 = vpop.permute.xlu0 %2011
      %2014 = vset.pattern.permute.xlu0 6
      %2015 = vperm.xlu0 %2014, %v1767
      %v2016 = vpop.permute.xlu0 %2015
      %v2018 = vperm.slane %v1763, 6
      %v2019 = vperm.slane %v1764, 6
      %v2020 = vmul.f32 %v2012, %v2018
      %v2021 = vmul.f32 %v2012, %v2019
      %v2022 = vmul.f32 %v2016, %v2018
      %v2023 = vmul.f32 %v2016, %v2019
      %2028 = vrot.lane.b32.xlu0 %v2020, 111
      %v2029 = vpop.permute.xlu0 %2028
      %2030 = vrot.lane.b32.xlu0 %v2021, 111
      %v2031 = vpop.permute.xlu0 %2030
      %2032 = vrot.lane.b32.xlu0 %v2022, 111
      %v2033 = vpop.permute.xlu0 %2032
      %2034 = vrot.lane.b32.xlu0 %v2023, 111
      %v2035 = vpop.permute.xlu0 %2034
      %v2036 = vsel %vm269, %v2029, %v2031
      %v2037 = vsel %vm269, %v2033, %v2035
      %v2044 = vadd.f32 %v2004, %v2029
      %v2045 = vadd.f32 %v2005, %v2036
      %v2046 = vadd.f32 %v2006, %v2031
      %v2047 = vadd.f32 %v2007, %v2033
      %v2048 = vadd.f32 %v2008, %v2037
      %v2049 = vadd.f32 %v2009, %v2035
      %2050 = vset.pattern.permute.xlu0 7
      %2051 = vperm.xlu0 %2050, %v1766
      %v2052 = vpop.permute.xlu0 %2051
      %2054 = vset.pattern.permute.xlu0 7
      %2055 = vperm.xlu0 %2054, %v1767
      %v2056 = vpop.permute.xlu0 %2055
      %v2058 = vperm.slane %v1763, 7
      %v2059 = vperm.slane %v1764, 7
      %v2060 = vmul.f32 %v2052, %v2058
      %v2061 = vmul.f32 %v2052, %v2059
      %v2062 = vmul.f32 %v2056, %v2058
      %v2063 = vmul.f32 %v2056, %v2059
      %2068 = vrot.lane.b32.xlu0 %v2060, 111
      %v2069 = vpop.permute.xlu0 %2068
      %2070 = vrot.lane.b32.xlu0 %v2061, 111
      %v2071 = vpop.permute.xlu0 %2070
      %2072 = vrot.lane.b32.xlu0 %v2062, 111
      %v2073 = vpop.permute.xlu0 %2072
      %2074 = vrot.lane.b32.xlu0 %v2063, 111
      %v2075 = vpop.permute.xlu0 %2074
      %v2076 = vsel %vm269, %v2069, %v2071
      %v2077 = vsel %vm269, %v2073, %v2075
      %v2084 = vadd.f32 %v2044, %v2069
      %v2085 = vadd.f32 %v2045, %v2076
      %v2086 = vadd.f32 %v2046, %v2071
      %v2087 = vadd.f32 %v2047, %v2073
      %v2088 = vadd.f32 %v2048, %v2077
      %v2089 = vadd.f32 %v2049, %v2075
      %v2090 = vld [vmem:[#allocation2 + $0x8] sm:$0xff]
      %v2091 = vld [vmem:[#allocation2 + $0x10] sm:$0xff]
      %v2092 = vld [vmem:[#allocation2 + $0x18] sm:$0xff]
      %s2093 = scalar_lea.vmem %s5, 10
      %v2094 = vld [vmem:[%s2093] sm:$0x3]
      %v2096 = vperm.slane %v2094, 0
      %v2097 = vperm.slane %v2094, 1
      %2098 = vrot.lane.b32.xlu0 %v2096, 1
      %v2099 = vpop.permute.xlu0 %2098
      %2100 = vrot.lane.b32.xlu0 %v2097, 1
      %v2101 = vpop.permute.xlu0 %2100
      %vm2102 = vcmask 7168
      %v2103 = vsel %vm2102, %v2099, %v2101
      %v2107 = vmul.f32 %v2090, %v2099
      %v2108 = vmul.f32 %v2091, %v2103
      %v2109 = vmul.f32 %v2092, %v2101
      %s2110 = scalar_lea.vmem %s1, 80
      %v2111 = vld [vmem:[%s2110] sm:$0xff]
      %v2112 = vld [vmem:[%s2110 + $0x8] sm:$0xff]
      %2114 = vset.pattern.permute.xlu0 0
      %2115 = vperm.xlu0 %2114, %v2111
      %v2116 = vpop.permute.xlu0 %2115
      %2119 = vset.pattern.permute.xlu0 0
      %2120 = vperm.xlu0 %2119, %v2112
      %v2121 = vpop.permute.xlu0 %2120
      %v2123 = vperm.slane %v2107, 0
      %v2124 = vperm.slane %v2108, 0
      %v2125 = vperm.slane %v2109, 0
      %v2126 = vmul.f32 %v2116, %v2123
      %v2127 = vmul.f32 %v2116, %v2124
      %v2128 = vmul.f32 %v2116, %v2125
      %v2129 = vmul.f32 %v2121, %v2123
      %v2130 = vmul.f32 %v2121, %v2124
      %v2131 = vmul.f32 %v2121, %v2125
      %2138 = vrot.lane.b32.xlu0 %v2126, 110
      %v2139 = vpop.permute.xlu0 %2138
      %2140 = vrot.lane.b32.xlu0 %v2127, 110
      %v2141 = vpop.permute.xlu0 %2140
      %2142 = vrot.lane.b32.xlu0 %v2128, 110
      %v2143 = vpop.permute.xlu0 %2142
      %2144 = vrot.lane.b32.xlu0 %v2129, 110
      %v2145 = vpop.permute.xlu0 %2144
      %2146 = vrot.lane.b32.xlu0 %v2130, 110
      %v2147 = vpop.permute.xlu0 %2146
      %2148 = vrot.lane.b32.xlu0 %v2131, 110
      %v2149 = vpop.permute.xlu0 %2148
      %vm2150 = vcmask 900096
      %v2151 = vsel %vm2150, %v2139, %v2141
      %v2152 = vsel %vm2150, %v2141, %v2143
      %v2153 = vsel %vm2150, %v2145, %v2147
      %v2154 = vsel %vm2150, %v2147, %v2149
      %v2161 = vadd.f32 %v2084, %v2139
      %v2162 = vadd.f32 %v2085, %v2151
      %v2163 = vadd.f32 %v2086, %v2152
      %v2164 = vadd.f32 %v2087, %v2145
      %v2165 = vadd.f32 %v2088, %v2153
      %v2166 = vadd.f32 %v2089, %v2154
      %2167 = vset.pattern.permute.xlu0 1
      %2168 = vperm.xlu0 %2167, %v2111
      %v2169 = vpop.permute.xlu0 %2168
      %2171 = vset.pattern.permute.xlu0 1
      %2172 = vperm.xlu0 %2171, %v2112
      %v2173 = vpop.permute.xlu0 %2172
      %v2175 = vperm.slane %v2107, 1
      %v2176 = vperm.slane %v2108, 1
      %v2177 = vperm.slane %v2109, 1
      %v2178 = vmul.f32 %v2169, %v2175
      %v2179 = vmul.f32 %v2169, %v2176
      %v2180 = vmul.f32 %v2169, %v2177
      %v2181 = vmul.f32 %v2173, %v2175
      %v2182 = vmul.f32 %v2173, %v2176
      %v2183 = vmul.f32 %v2173, %v2177
      %2190 = vrot.lane.b32.xlu0 %v2178, 110
      %v2191 = vpop.permute.xlu0 %2190
      %2192 = vrot.lane.b32.xlu0 %v2179, 110
      %v2193 = vpop.permute.xlu0 %2192
      %2194 = vrot.lane.b32.xlu0 %v2180, 110
      %v2195 = vpop.permute.xlu0 %2194
      %2196 = vrot.lane.b32.xlu0 %v2181, 110
      %v2197 = vpop.permute.xlu0 %2196
      %2198 = vrot.lane.b32.xlu0 %v2182, 110
      %v2199 = vpop.permute.xlu0 %2198
      %2200 = vrot.lane.b32.xlu0 %v2183, 110
      %v2201 = vpop.permute.xlu0 %2200
      %v2202 = vsel %vm2150, %v2191, %v2193
      %v2203 = vsel %vm2150, %v2193, %v2195
      %v2204 = vsel %vm2150, %v2197, %v2199
      %v2205 = vsel %vm2150, %v2199, %v2201
      %v2212 = vadd.f32 %v2161, %v2191
      %v2213 = vadd.f32 %v2162, %v2202
      %v2214 = vadd.f32 %v2163, %v2203
      %v2215 = vadd.f32 %v2164, %v2197
      %v2216 = vadd.f32 %v2165, %v2204
      %v2217 = vadd.f32 %v2166, %v2205
      %2218 = vset.pattern.permute.xlu0 2
      %2219 = vperm.xlu0 %2218, %v2111
      %v2220 = vpop.permute.xlu0 %2219
      %2222 = vset.pattern.permute.xlu0 2
      %2223 = vperm.xlu0 %2222, %v2112
      %v2224 = vpop.permute.xlu0 %2223
      %v2226 = vperm.slane %v2107, 2
      %v2227 = vperm.slane %v2108, 2
      %v2228 = vperm.slane %v2109, 2
      %v2229 = vmul.f32 %v2220, %v2226
      %v2230 = vmul.f32 %v2220, %v2227
      %v2231 = vmul.f32 %v2220, %v2228
      %v2232 = vmul.f32 %v2224, %v2226
      %v2233 = vmul.f32 %v2224, %v2227
      %v2234 = vmul.f32 %v2224, %v2228
      %2241 = vrot.lane.b32.xlu0 %v2229, 110
      %v2242 = vpop.permute.xlu0 %2241
      %2243 = vrot.lane.b32.xlu0 %v2230, 110
      %v2244 = vpop.permute.xlu0 %2243
      %2245 = vrot.lane.b32.xlu0 %v2231, 110
      %v2246 = vpop.permute.xlu0 %2245
      %2247 = vrot.lane.b32.xlu0 %v2232, 110
      %v2248 = vpop.permute.xlu0 %2247
      %2249 = vrot.lane.b32.xlu0 %v2233, 110
      %v2250 = vpop.permute.xlu0 %2249
      %2251 = vrot.lane.b32.xlu0 %v2234, 110
      %v2252 = vpop.permute.xlu0 %2251
      %v2253 = vsel %vm2150, %v2242, %v2244
      %v2254 = vsel %vm2150, %v2244, %v2246
      %v2255 = vsel %vm2150, %v2248, %v2250
      %v2256 = vsel %vm2150, %v2250, %v2252
      %v2263 = vadd.f32 %v2212, %v2242
      %v2264 = vadd.f32 %v2213, %v2253
      %v2265 = vadd.f32 %v2214, %v2254
      %v2266 = vadd.f32 %v2215, %v2248
      %v2267 = vadd.f32 %v2216, %v2255
      %v2268 = vadd.f32 %v2217, %v2256
      %2269 = vset.pattern.permute.xlu0 3
      %2270 = vperm.xlu0 %2269, %v2111
      %v2271 = vpop.permute.xlu0 %2270
      %2273 = vset.pattern.permute.xlu0 3
      %2274 = vperm.xlu0 %2273, %v2112
      %v2275 = vpop.permute.xlu0 %2274
      %v2277 = vperm.slane %v2107, 3
      %v2278 = vperm.slane %v2108, 3
      %v2279 = vperm.slane %v2109, 3
      %v2280 = vmul.f32 %v2271, %v2277
      %v2281 = vmul.f32 %v2271, %v2278
      %v2282 = vmul.f32 %v2271, %v2279
      %v2283 = vmul.f32 %v2275, %v2277
      %v2284 = vmul.f32 %v2275, %v2278
      %v2285 = vmul.f32 %v2275, %v2279
      %2292 = vrot.lane.b32.xlu0 %v2280, 110
      %v2293 = vpop.permute.xlu0 %2292
      %2294 = vrot.lane.b32.xlu0 %v2281, 110
      %v2295 = vpop.permute.xlu0 %2294
      %2296 = vrot.lane.b32.xlu0 %v2282, 110
      %v2297 = vpop.permute.xlu0 %2296
      %2298 = vrot.lane.b32.xlu0 %v2283, 110
      %v2299 = vpop.permute.xlu0 %2298
      %2300 = vrot.lane.b32.xlu0 %v2284, 110
      %v2301 = vpop.permute.xlu0 %2300
      %2302 = vrot.lane.b32.xlu0 %v2285, 110
      %v2303 = vpop.permute.xlu0 %2302
      %v2304 = vsel %vm2150, %v2293, %v2295
      %v2305 = vsel %vm2150, %v2295, %v2297
      %v2306 = vsel %vm2150, %v2299, %v2301
      %v2307 = vsel %vm2150, %v2301, %v2303
      %v2314 = vadd.f32 %v2263, %v2293
      %v2315 = vadd.f32 %v2264, %v2304
      %v2316 = vadd.f32 %v2265, %v2305
      %v2317 = vadd.f32 %v2266, %v2299
      %v2318 = vadd.f32 %v2267, %v2306
      %v2319 = vadd.f32 %v2268, %v2307
      %2320 = vset.pattern.permute.xlu0 4
      %2321 = vperm.xlu0 %2320, %v2111
      %v2322 = vpop.permute.xlu0 %2321
      %2324 = vset.pattern.permute.xlu0 4
      %2325 = vperm.xlu0 %2324, %v2112
      %v2326 = vpop.permute.xlu0 %2325
      %v2328 = vperm.slane %v2107, 4
      %v2329 = vperm.slane %v2108, 4
      %v2330 = vperm.slane %v2109, 4
      %v2331 = vmul.f32 %v2322, %v2328
      %v2332 = vmul.f32 %v2322, %v2329
      %v2333 = vmul.f32 %v2322, %v2330
      %v2334 = vmul.f32 %v2326, %v2328
      %v2335 = vmul.f32 %v2326, %v2329
      %v2336 = vmul.f32 %v2326, %v2330
      %2343 = vrot.lane.b32.xlu0 %v2331, 110
      %v2344 = vpop.permute.xlu0 %2343
      %2345 = vrot.lane.b32.xlu0 %v2332, 110
      %v2346 = vpop.permute.xlu0 %2345
      %2347 = vrot.lane.b32.xlu0 %v2333, 110
      %v2348 = vpop.permute.xlu0 %2347
      %2349 = vrot.lane.b32.xlu0 %v2334, 110
      %v2350 = vpop.permute.xlu0 %2349
      %2351 = vrot.lane.b32.xlu0 %v2335, 110
      %v2352 = vpop.permute.xlu0 %2351
      %2353 = vrot.lane.b32.xlu0 %v2336, 110
      %v2354 = vpop.permute.xlu0 %2353
      %v2355 = vsel %vm2150, %v2344, %v2346
      %v2356 = vsel %vm2150, %v2346, %v2348
      %v2357 = vsel %vm2150, %v2350, %v2352
      %v2358 = vsel %vm2150, %v2352, %v2354
      %v2365 = vadd.f32 %v2314, %v2344
      %v2366 = vadd.f32 %v2315, %v2355
      %v2367 = vadd.f32 %v2316, %v2356
      %v2368 = vadd.f32 %v2317, %v2350
      %v2369 = vadd.f32 %v2318, %v2357
      %v2370 = vadd.f32 %v2319, %v2358
      %2371 = vset.pattern.permute.xlu0 5
      %2372 = vperm.xlu0 %2371, %v2111
      %v2373 = vpop.permute.xlu0 %2372
      %2375 = vset.pattern.permute.xlu0 5
      %2376 = vperm.xlu0 %2375, %v2112
      %v2377 = vpop.permute.xlu0 %2376
      %v2379 = vperm.slane %v2107, 5
      %v2380 = vperm.slane %v2108, 5
      %v2381 = vperm.slane %v2109, 5
      %v2382 = vmul.f32 %v2373, %v2379
      %v2383 = vmul.f32 %v2373, %v2380
      %v2384 = vmul.f32 %v2373, %v2381
      %v2385 = vmul.f32 %v2377, %v2379
      %v2386 = vmul.f32 %v2377, %v2380
      %v2387 = vmul.f32 %v2377, %v2381
      %2394 = vrot.lane.b32.xlu0 %v2382, 110
      %v2395 = vpop.permute.xlu0 %2394
      %2396 = vrot.lane.b32.xlu0 %v2383, 110
      %v2397 = vpop.permute.xlu0 %2396
      %2398 = vrot.lane.b32.xlu0 %v2384, 110
      %v2399 = vpop.permute.xlu0 %2398
      %2400 = vrot.lane.b32.xlu0 %v2385, 110
      %v2401 = vpop.permute.xlu0 %2400
      %2402 = vrot.lane.b32.xlu0 %v2386, 110
      %v2403 = vpop.permute.xlu0 %2402
      %2404 = vrot.lane.b32.xlu0 %v2387, 110
      %v2405 = vpop.permute.xlu0 %2404
      %v2406 = vsel %vm2150, %v2395, %v2397
      %v2407 = vsel %vm2150, %v2397, %v2399
      %v2408 = vsel %vm2150, %v2401, %v2403
      %v2409 = vsel %vm2150, %v2403, %v2405
      %v2416 = vadd.f32 %v2365, %v2395
      %v2417 = vadd.f32 %v2366, %v2406
      %v2418 = vadd.f32 %v2367, %v2407
      %v2419 = vadd.f32 %v2368, %v2401
      %v2420 = vadd.f32 %v2369, %v2408
      %v2421 = vadd.f32 %v2370, %v2409
      %2422 = vset.pattern.permute.xlu0 6
      %2423 = vperm.xlu0 %2422, %v2111
      %v2424 = vpop.permute.xlu0 %2423
      %2426 = vset.pattern.permute.xlu0 6
      %2427 = vperm.xlu0 %2426, %v2112
      %v2428 = vpop.permute.xlu0 %2427
      %v2430 = vperm.slane %v2107, 6
      %v2431 = vperm.slane %v2108, 6
      %v2432 = vperm.slane %v2109, 6
      %v2433 = vmul.f32 %v2424, %v2430
      %v2434 = vmul.f32 %v2424, %v2431
      %v2435 = vmul.f32 %v2424, %v2432
      %v2436 = vmul.f32 %v2428, %v2430
      %v2437 = vmul.f32 %v2428, %v2431
      %v2438 = vmul.f32 %v2428, %v2432
      %2445 = vrot.lane.b32.xlu0 %v2433, 110
      %v2446 = vpop.permute.xlu0 %2445
      %2447 = vrot.lane.b32.xlu0 %v2434, 110
      %v2448 = vpop.permute.xlu0 %2447
      %2449 = vrot.lane.b32.xlu0 %v2435, 110
      %v2450 = vpop.permute.xlu0 %2449
      %2451 = vrot.lane.b32.xlu0 %v2436, 110
      %v2452 = vpop.permute.xlu0 %2451
      %2453 = vrot.lane.b32.xlu0 %v2437, 110
      %v2454 = vpop.permute.xlu0 %2453
      %2455 = vrot.lane.b32.xlu0 %v2438, 110
      %v2456 = vpop.permute.xlu0 %2455
      %v2457 = vsel %vm2150, %v2446, %v2448
      %v2458 = vsel %vm2150, %v2448, %v2450
      %v2459 = vsel %vm2150, %v2452, %v2454
      %v2460 = vsel %vm2150, %v2454, %v2456
      %v2467 = vadd.f32 %v2416, %v2446
      %v2468 = vadd.f32 %v2417, %v2457
      %v2469 = vadd.f32 %v2418, %v2458
      %v2470 = vadd.f32 %v2419, %v2452
      %v2471 = vadd.f32 %v2420, %v2459
      %v2472 = vadd.f32 %v2421, %v2460
      %2473 = vset.pattern.permute.xlu0 7
      %2474 = vperm.xlu0 %2473, %v2111
      %v2475 = vpop.permute.xlu0 %2474
      %2477 = vset.pattern.permute.xlu0 7
      %2478 = vperm.xlu0 %2477, %v2112
      %v2479 = vpop.permute.xlu0 %2478
      %v2481 = vperm.slane %v2107, 7
      %v2482 = vperm.slane %v2108, 7
      %v2483 = vperm.slane %v2109, 7
      %v2484 = vmul.f32 %v2475, %v2481
      %v2485 = vmul.f32 %v2475, %v2482
      %v2486 = vmul.f32 %v2475, %v2483
      %v2487 = vmul.f32 %v2479, %v2481
      %v2488 = vmul.f32 %v2479, %v2482
      %v2489 = vmul.f32 %v2479, %v2483
      %2496 = vrot.lane.b32.xlu0 %v2484, 110
      %v2497 = vpop.permute.xlu0 %2496
      %2498 = vrot.lane.b32.xlu0 %v2485, 110
      %v2499 = vpop.permute.xlu0 %2498
      %2500 = vrot.lane.b32.xlu0 %v2486, 110
      %v2501 = vpop.permute.xlu0 %2500
      %2502 = vrot.lane.b32.xlu0 %v2487, 110
      %v2503 = vpop.permute.xlu0 %2502
      %2504 = vrot.lane.b32.xlu0 %v2488, 110
      %v2505 = vpop.permute.xlu0 %2504
      %2506 = vrot.lane.b32.xlu0 %v2489, 110
      %v2507 = vpop.permute.xlu0 %2506
      %v2508 = vsel %vm2150, %v2497, %v2499
      %v2509 = vsel %vm2150, %v2499, %v2501
      %v2510 = vsel %vm2150, %v2503, %v2505
      %v2511 = vsel %vm2150, %v2505, %v2507
      %v2518 = vadd.f32 %v2467, %v2497
      %v2519 = vadd.f32 %v2468, %v2508
      %v2520 = vadd.f32 %v2469, %v2509
      %v2521 = vadd.f32 %v2470, %v2503
      %v2522 = vadd.f32 %v2471, %v2510
      %v2523 = vadd.f32 %v2472, %v2511
      %s2524 = scalar_lea.vmem %s5, 12
      %v2525 = vld [vmem:[%s2524] sm:$0x3]
      %v2527 = vperm.slane %v2525, 0
      %v2528 = vperm.slane %v2525, 1
      %2529 = vrot.lane.b32.xlu0 %v2527, 15
      %v2530 = vpop.permute.xlu0 %2529
      %2531 = vrot.lane.b32.xlu0 %v2528, 15
      %v2532 = vpop.permute.xlu0 %2531
      %vm2533 = vcmask 121856
      %v2534 = vsel %vm2533, %v2530, %v2532
      %v2538 = vmul.f32 %v2090, %v2530
      %v2539 = vmul.f32 %v2091, %v2534
      %v2540 = vmul.f32 %v2092, %v2532
      %s2541 = scalar_lea.vmem %s1, 96
      %v2542 = vld [vmem:[%s2541] sm:$0xff]
      %v2543 = vld [vmem:[%s2541 + $0x8] sm:$0xff]
      %2545 = vset.pattern.permute.xlu0 0
      %2546 = vperm.xlu0 %2545, %v2542
      %v2547 = vpop.permute.xlu0 %2546
      %2550 = vset.pattern.permute.xlu0 0
      %2551 = vperm.xlu0 %2550, %v2543
      %v2552 = vpop.permute.xlu0 %2551
      %v2554 = vperm.slane %v2538, 0
      %v2555 = vperm.slane %v2539, 0
      %v2556 = vperm.slane %v2540, 0
      %v2557 = vmul.f32 %v2547, %v2554
      %v2558 = vmul.f32 %v2547, %v2555
      %v2559 = vmul.f32 %v2547, %v2556
      %v2560 = vmul.f32 %v2552, %v2554
      %v2561 = vmul.f32 %v2552, %v2555
      %v2562 = vmul.f32 %v2552, %v2556
      %2569 = vrot.lane.b32.xlu0 %v2557, 96
      %v2570 = vpop.permute.xlu0 %2569
      %2571 = vrot.lane.b32.xlu0 %v2558, 96
      %v2572 = vpop.permute.xlu0 %2571
      %2573 = vrot.lane.b32.xlu0 %v2559, 96
      %v2574 = vpop.permute.xlu0 %2573
      %2575 = vrot.lane.b32.xlu0 %v2560, 96
      %v2576 = vpop.permute.xlu0 %2575
      %2577 = vrot.lane.b32.xlu0 %v2561, 96
      %v2578 = vpop.permute.xlu0 %2577
      %2579 = vrot.lane.b32.xlu0 %v2562, 96
      %v2580 = vpop.permute.xlu0 %2579
      %vm2581 = vcmask 785408
      %v2582 = vsel %vm2581, %v2570, %v2572
      %v2583 = vsel %vm2581, %v2572, %v2574
      %v2584 = vsel %vm2581, %v2576, %v2578
      %v2585 = vsel %vm2581, %v2578, %v2580
      %v2592 = vadd.f32 %v2518, %v2570
      %v2593 = vadd.f32 %v2519, %v2582
      %v2594 = vadd.f32 %v2520, %v2583
      %v2595 = vadd.f32 %v2521, %v2576
      %v2596 = vadd.f32 %v2522, %v2584
      %v2597 = vadd.f32 %v2523, %v2585
      %2598 = vset.pattern.permute.xlu0 1
      %2599 = vperm.xlu0 %2598, %v2542
      %v2600 = vpop.permute.xlu0 %2599
      %2602 = vset.pattern.permute.xlu0 1
      %2603 = vperm.xlu0 %2602, %v2543
      %v2604 = vpop.permute.xlu0 %2603
      %v2606 = vperm.slane %v2538, 1
      %v2607 = vperm.slane %v2539, 1
      %v2608 = vperm.slane %v2540, 1
      %v2609 = vmul.f32 %v2600, %v2606
      %v2610 = vmul.f32 %v2600, %v2607
      %v2611 = vmul.f32 %v2600, %v2608
      %v2612 = vmul.f32 %v2604, %v2606
      %v2613 = vmul.f32 %v2604, %v2607
      %v2614 = vmul.f32 %v2604, %v2608
      %2621 = vrot.lane.b32.xlu0 %v2609, 96
      %v2622 = vpop.permute.xlu0 %2621
      %2623 = vrot.lane.b32.xlu0 %v2610, 96
      %v2624 = vpop.permute.xlu0 %2623
      %2625 = vrot.lane.b32.xlu0 %v2611, 96
      %v2626 = vpop.permute.xlu0 %2625
      %2627 = vrot.lane.b32.xlu0 %v2612, 96
      %v2628 = vpop.permute.xlu0 %2627
      %2629 = vrot.lane.b32.xlu0 %v2613, 96
      %v2630 = vpop.permute.xlu0 %2629
      %2631 = vrot.lane.b32.xlu0 %v2614, 96
      %v2632 = vpop.permute.xlu0 %2631
      %v2633 = vsel %vm2581, %v2622, %v2624
      %v2634 = vsel %vm2581, %v2624, %v2626
      %v2635 = vsel %vm2581, %v2628, %v2630
      %v2636 = vsel %vm2581, %v2630, %v2632
      %v2643 = vadd.f32 %v2592, %v2622
      %v2644 = vadd.f32 %v2593, %v2633
      %v2645 = vadd.f32 %v2594, %v2634
      %v2646 = vadd.f32 %v2595, %v2628
      %v2647 = vadd.f32 %v2596, %v2635
      %v2648 = vadd.f32 %v2597, %v2636
      %2649 = vset.pattern.permute.xlu0 2
      %2650 = vperm.xlu0 %2649, %v2542
      %v2651 = vpop.permute.xlu0 %2650
      %2653 = vset.pattern.permute.xlu0 2
      %2654 = vperm.xlu0 %2653, %v2543
      %v2655 = vpop.permute.xlu0 %2654
      %v2657 = vperm.slane %v2538, 2
      %v2658 = vperm.slane %v2539, 2
      %v2659 = vperm.slane %v2540, 2
      %v2660 = vmul.f32 %v2651, %v2657
      %v2661 = vmul.f32 %v2651, %v2658
      %v2662 = vmul.f32 %v2651, %v2659
      %v2663 = vmul.f32 %v2655, %v2657
      %v2664 = vmul.f32 %v2655, %v2658
      %v2665 = vmul.f32 %v2655, %v2659
      %2672 = vrot.lane.b32.xlu0 %v2660, 96
      %v2673 = vpop.permute.xlu0 %2672
      %2674 = vrot.lane.b32.xlu0 %v2661, 96
      %v2675 = vpop.permute.xlu0 %2674
      %2676 = vrot.lane.b32.xlu0 %v2662, 96
      %v2677 = vpop.permute.xlu0 %2676
      %2678 = vrot.lane.b32.xlu0 %v2663, 96
      %v2679 = vpop.permute.xlu0 %2678
      %2680 = vrot.lane.b32.xlu0 %v2664, 96
      %v2681 = vpop.permute.xlu0 %2680
      %2682 = vrot.lane.b32.xlu0 %v2665, 96
      %v2683 = vpop.permute.xlu0 %2682
      %v2684 = vsel %vm2581, %v2673, %v2675
      %v2685 = vsel %vm2581, %v2675, %v2677
      %v2686 = vsel %vm2581, %v2679, %v2681
      %v2687 = vsel %vm2581, %v2681, %v2683
      %v2694 = vadd.f32 %v2643, %v2673
      %v2695 = vadd.f32 %v2644, %v2684
      %v2696 = vadd.f32 %v2645, %v2685
      %v2697 = vadd.f32 %v2646, %v2679
      %v2698 = vadd.f32 %v2647, %v2686
      %v2699 = vadd.f32 %v2648, %v2687
      %2700 = vset.pattern.permute.xlu0 3
      %2701 = vperm.xlu0 %2700, %v2542
      %v2702 = vpop.permute.xlu0 %2701
      %2704 = vset.pattern.permute.xlu0 3
      %2705 = vperm.xlu0 %2704, %v2543
      %v2706 = vpop.permute.xlu0 %2705
      %v2708 = vperm.slane %v2538, 3
      %v2709 = vperm.slane %v2539, 3
      %v2710 = vperm.slane %v2540, 3
      %v2711 = vmul.f32 %v2702, %v2708
      %v2712 = vmul.f32 %v2702, %v2709
      %v2713 = vmul.f32 %v2702, %v2710
      %v2714 = vmul.f32 %v2706, %v2708
      %v2715 = vmul.f32 %v2706, %v2709
      %v2716 = vmul.f32 %v2706, %v2710
      %2723 = vrot.lane.b32.xlu0 %v2711, 96
      %v2724 = vpop.permute.xlu0 %2723
      %2725 = vrot.lane.b32.xlu0 %v2712, 96
      %v2726 = vpop.permute.xlu0 %2725
      %2727 = vrot.lane.b32.xlu0 %v2713, 96
      %v2728 = vpop.permute.xlu0 %2727
      %2729 = vrot.lane.b32.xlu0 %v2714, 96
      %v2730 = vpop.permute.xlu0 %2729
      %2731 = vrot.lane.b32.xlu0 %v2715, 96
      %v2732 = vpop.permute.xlu0 %2731
      %2733 = vrot.lane.b32.xlu0 %v2716, 96
      %v2734 = vpop.permute.xlu0 %2733
      %v2735 = vsel %vm2581, %v2724, %v2726
      %v2736 = vsel %vm2581, %v2726, %v2728
      %v2737 = vsel %vm2581, %v2730, %v2732
      %v2738 = vsel %vm2581, %v2732, %v2734
      %v2745 = vadd.f32 %v2694, %v2724
      %v2746 = vadd.f32 %v2695, %v2735
      %v2747 = vadd.f32 %v2696, %v2736
      %v2748 = vadd.f32 %v2697, %v2730
      %v2749 = vadd.f32 %v2698, %v2737
      %v2750 = vadd.f32 %v2699, %v2738
      %2751 = vset.pattern.permute.xlu0 4
      %2752 = vperm.xlu0 %2751, %v2542
      %v2753 = vpop.permute.xlu0 %2752
      %2755 = vset.pattern.permute.xlu0 4
      %2756 = vperm.xlu0 %2755, %v2543
      %v2757 = vpop.permute.xlu0 %2756
      %v2759 = vperm.slane %v2538, 4
      %v2760 = vperm.slane %v2539, 4
      %v2761 = vperm.slane %v2540, 4
      %v2762 = vmul.f32 %v2753, %v2759
      %v2763 = vmul.f32 %v2753, %v2760
      %v2764 = vmul.f32 %v2753, %v2761
      %v2765 = vmul.f32 %v2757, %v2759
      %v2766 = vmul.f32 %v2757, %v2760
      %v2767 = vmul.f32 %v2757, %v2761
      %2774 = vrot.lane.b32.xlu0 %v2762, 96
      %v2775 = vpop.permute.xlu0 %2774
      %2776 = vrot.lane.b32.xlu0 %v2763, 96
      %v2777 = vpop.permute.xlu0 %2776
      %2778 = vrot.lane.b32.xlu0 %v2764, 96
      %v2779 = vpop.permute.xlu0 %2778
      %2780 = vrot.lane.b32.xlu0 %v2765, 96
      %v2781 = vpop.permute.xlu0 %2780
      %2782 = vrot.lane.b32.xlu0 %v2766, 96
      %v2783 = vpop.permute.xlu0 %2782
      %2784 = vrot.lane.b32.xlu0 %v2767, 96
      %v2785 = vpop.permute.xlu0 %2784
      %v2786 = vsel %vm2581, %v2775, %v2777
      %v2787 = vsel %vm2581, %v2777, %v2779
      %v2788 = vsel %vm2581, %v2781, %v2783
      %v2789 = vsel %vm2581, %v2783, %v2785
      %v2796 = vadd.f32 %v2745, %v2775
      %v2797 = vadd.f32 %v2746, %v2786
      %v2798 = vadd.f32 %v2747, %v2787
      %v2799 = vadd.f32 %v2748, %v2781
      %v2800 = vadd.f32 %v2749, %v2788
      %v2801 = vadd.f32 %v2750, %v2789
      %2802 = vset.pattern.permute.xlu0 5
      %2803 = vperm.xlu0 %2802, %v2542
      %v2804 = vpop.permute.xlu0 %2803
      %2806 = vset.pattern.permute.xlu0 5
      %2807 = vperm.xlu0 %2806, %v2543
      %v2808 = vpop.permute.xlu0 %2807
      %v2810 = vperm.slane %v2538, 5
      %v2811 = vperm.slane %v2539, 5
      %v2812 = vperm.slane %v2540, 5
      %v2813 = vmul.f32 %v2804, %v2810
      %v2814 = vmul.f32 %v2804, %v2811
      %v2815 = vmul.f32 %v2804, %v2812
      %v2816 = vmul.f32 %v2808, %v2810
      %v2817 = vmul.f32 %v2808, %v2811
      %v2818 = vmul.f32 %v2808, %v2812
      %2825 = vrot.lane.b32.xlu0 %v2813, 96
      %v2826 = vpop.permute.xlu0 %2825
      %2827 = vrot.lane.b32.xlu0 %v2814, 96
      %v2828 = vpop.permute.xlu0 %2827
      %2829 = vrot.lane.b32.xlu0 %v2815, 96
      %v2830 = vpop.permute.xlu0 %2829
      %2831 = vrot.lane.b32.xlu0 %v2816, 96
      %v2832 = vpop.permute.xlu0 %2831
      %2833 = vrot.lane.b32.xlu0 %v2817, 96
      %v2834 = vpop.permute.xlu0 %2833
      %2835 = vrot.lane.b32.xlu0 %v2818, 96
      %v2836 = vpop.permute.xlu0 %2835
      %v2837 = vsel %vm2581, %v2826, %v2828
      %v2838 = vsel %vm2581, %v2828, %v2830
      %v2839 = vsel %vm2581, %v2832, %v2834
      %v2840 = vsel %vm2581, %v2834, %v2836
      %v2847 = vadd.f32 %v2796, %v2826
      %v2848 = vadd.f32 %v2797, %v2837
      %v2849 = vadd.f32 %v2798, %v2838
      %v2850 = vadd.f32 %v2799, %v2832
      %v2851 = vadd.f32 %v2800, %v2839
      %v2852 = vadd.f32 %v2801, %v2840
      %2853 = vset.pattern.permute.xlu0 6
      %2854 = vperm.xlu0 %2853, %v2542
      %v2855 = vpop.permute.xlu0 %2854
      %2857 = vset.pattern.permute.xlu0 6
      %2858 = vperm.xlu0 %2857, %v2543
      %v2859 = vpop.permute.xlu0 %2858
      %v2861 = vperm.slane %v2538, 6
      %v2862 = vperm.slane %v2539, 6
      %v2863 = vperm.slane %v2540, 6
      %v2864 = vmul.f32 %v2855, %v2861
      %v2865 = vmul.f32 %v2855, %v2862
      %v2866 = vmul.f32 %v2855, %v2863
      %v2867 = vmul.f32 %v2859, %v2861
      %v2868 = vmul.f32 %v2859, %v2862
      %v2869 = vmul.f32 %v2859, %v2863
      %2876 = vrot.lane.b32.xlu0 %v2864, 96
      %v2877 = vpop.permute.xlu0 %2876
      %2878 = vrot.lane.b32.xlu0 %v2865, 96
      %v2879 = vpop.permute.xlu0 %2878
      %2880 = vrot.lane.b32.xlu0 %v2866, 96
      %v2881 = vpop.permute.xlu0 %2880
      %2882 = vrot.lane.b32.xlu0 %v2867, 96
      %v2883 = vpop.permute.xlu0 %2882
      %2884 = vrot.lane.b32.xlu0 %v2868, 96
      %v2885 = vpop.permute.xlu0 %2884
      %2886 = vrot.lane.b32.xlu0 %v2869, 96
      %v2887 = vpop.permute.xlu0 %2886
      %v2888 = vsel %vm2581, %v2877, %v2879
      %v2889 = vsel %vm2581, %v2879, %v2881
      %v2890 = vsel %vm2581, %v2883, %v2885
      %v2891 = vsel %vm2581, %v2885, %v2887
      %v2898 = vadd.f32 %v2847, %v2877
      %v2899 = vadd.f32 %v2848, %v2888
      %v2900 = vadd.f32 %v2849, %v2889
      %v2901 = vadd.f32 %v2850, %v2883
      %v2902 = vadd.f32 %v2851, %v2890
      %v2903 = vadd.f32 %v2852, %v2891
      %2904 = vset.pattern.permute.xlu0 7
      %2905 = vperm.xlu0 %2904, %v2542
      %v2906 = vpop.permute.xlu0 %2905
      %2908 = vset.pattern.permute.xlu0 7
      %2909 = vperm.xlu0 %2908, %v2543
      %v2910 = vpop.permute.xlu0 %2909
      %v2912 = vperm.slane %v2538, 7
      %v2913 = vperm.slane %v2539, 7
      %v2914 = vperm.slane %v2540, 7
      %v2915 = vmul.f32 %v2906, %v2912
      %v2916 = vmul.f32 %v2906, %v2913
      %v2917 = vmul.f32 %v2906, %v2914
      %v2918 = vmul.f32 %v2910, %v2912
      %v2919 = vmul.f32 %v2910, %v2913
      %v2920 = vmul.f32 %v2910, %v2914
      %2927 = vrot.lane.b32.xlu0 %v2915, 96
      %v2928 = vpop.permute.xlu0 %2927
      %2929 = vrot.lane.b32.xlu0 %v2916, 96
      %v2930 = vpop.permute.xlu0 %2929
      %2931 = vrot.lane.b32.xlu0 %v2917, 96
      %v2932 = vpop.permute.xlu0 %2931
      %2933 = vrot.lane.b32.xlu0 %v2918, 96
      %v2934 = vpop.permute.xlu0 %2933
      %2935 = vrot.lane.b32.xlu0 %v2919, 96
      %v2936 = vpop.permute.xlu0 %2935
      %2937 = vrot.lane.b32.xlu0 %v2920, 96
      %v2938 = vpop.permute.xlu0 %2937
      %v2939 = vsel %vm2581, %v2928, %v2930
      %v2940 = vsel %vm2581, %v2930, %v2932
      %v2941 = vsel %vm2581, %v2934, %v2936
      %v2942 = vsel %vm2581, %v2936, %v2938
      %v2949 = vadd.f32 %v2898, %v2928
      %v2950 = vadd.f32 %v2899, %v2939
      %v2951 = vadd.f32 %v2900, %v2940
      %v2952 = vadd.f32 %v2901, %v2934
      %v2953 = vadd.f32 %v2902, %v2941
      %v2954 = vadd.f32 %v2903, %v2942
      %s2955 = scalar_lea.vmem %s5, 14
      %v2956 = vld [vmem:[%s2955] sm:$0x3]
      %v2958 = vperm.slane %v2956, 0
      %v2959 = vperm.slane %v2956, 1
      %2960 = vrot.lane.b32.xlu0 %v2958, 16
      %v2961 = vpop.permute.xlu0 %2960
      %2962 = vrot.lane.b32.xlu0 %v2959, 16
      %v2963 = vpop.permute.xlu0 %2962
      %vm2964 = vcmask 130048
      %v2965 = vsel %vm2964, %v2961, %v2963
      %v2969 = vmul.f32 %v2090, %v2961
      %v2970 = vmul.f32 %v2091, %v2965
      %v2971 = vmul.f32 %v2092, %v2963
      %s2972 = scalar_lea.vmem %s1, 112
      %v2973 = vld [vmem:[%s2972] sm:$0xff]
      %v2974 = vld [vmem:[%s2972 + $0x8] sm:$0xff]
      %2976 = vset.pattern.permute.xlu0 0
      %2977 = vperm.xlu0 %2976, %v2973
      %v2978 = vpop.permute.xlu0 %2977
      %2981 = vset.pattern.permute.xlu0 0
      %2982 = vperm.xlu0 %2981, %v2974
      %v2983 = vpop.permute.xlu0 %2982
      %v2985 = vperm.slane %v2969, 0
      %v2986 = vperm.slane %v2970, 0
      %v2987 = vperm.slane %v2971, 0
      %v2988 = vmul.f32 %v2978, %v2985
      %v2989 = vmul.f32 %v2978, %v2986
      %v2990 = vmul.f32 %v2978, %v2987
      %v2991 = vmul.f32 %v2983, %v2985
      %v2992 = vmul.f32 %v2983, %v2986
      %v2993 = vmul.f32 %v2983, %v2987
      %3000 = vrot.lane.b32.xlu0 %v2988, 95
      %v3001 = vpop.permute.xlu0 %3000
      %3002 = vrot.lane.b32.xlu0 %v2989, 95
      %v3003 = vpop.permute.xlu0 %3002
      %3004 = vrot.lane.b32.xlu0 %v2990, 95
      %v3005 = vpop.permute.xlu0 %3004
      %3006 = vrot.lane.b32.xlu0 %v2991, 95
      %v3007 = vpop.permute.xlu0 %3006
      %3008 = vrot.lane.b32.xlu0 %v2992, 95
      %v3009 = vpop.permute.xlu0 %3008
      %3010 = vrot.lane.b32.xlu0 %v2993, 95
      %v3011 = vpop.permute.xlu0 %3010
      %vm3012 = vcmask 777216
      %v3013 = vsel %vm3012, %v3001, %v3003
      %v3014 = vsel %vm3012, %v3003, %v3005
      %v3015 = vsel %vm3012, %v3007, %v3009
      %v3016 = vsel %vm3012, %v3009, %v3011
      %v3023 = vadd.f32 %v2949, %v3001
      %v3024 = vadd.f32 %v2950, %v3013
      %v3025 = vadd.f32 %v2951, %v3014
      %v3026 = vadd.f32 %v2952, %v3007
      %v3027 = vadd.f32 %v2953, %v3015
      %v3028 = vadd.f32 %v2954, %v3016
      %3029 = vset.pattern.permute.xlu0 1
      %3030 = vperm.xlu0 %3029, %v2973
      %v3031 = vpop.permute.xlu0 %3030
      %3033 = vset.pattern.permute.xlu0 1
      %3034 = vperm.xlu0 %3033, %v2974
      %v3035 = vpop.permute.xlu0 %3034
      %v3037 = vperm.slane %v2969, 1
      %v3038 = vperm.slane %v2970, 1
      %v3039 = vperm.slane %v2971, 1
      %v3040 = vmul.f32 %v3031, %v3037
      %v3041 = vmul.f32 %v3031, %v3038
      %v3042 = vmul.f32 %v3031, %v3039
      %v3043 = vmul.f32 %v3035, %v3037
      %v3044 = vmul.f32 %v3035, %v3038
      %v3045 = vmul.f32 %v3035, %v3039
      %3052 = vrot.lane.b32.xlu0 %v3040, 95
      %v3053 = vpop.permute.xlu0 %3052
      %3054 = vrot.lane.b32.xlu0 %v3041, 95
      %v3055 = vpop.permute.xlu0 %3054
      %3056 = vrot.lane.b32.xlu0 %v3042, 95
      %v3057 = vpop.permute.xlu0 %3056
      %3058 = vrot.lane.b32.xlu0 %v3043, 95
      %v3059 = vpop.permute.xlu0 %3058
      %3060 = vrot.lane.b32.xlu0 %v3044, 95
      %v3061 = vpop.permute.xlu0 %3060
      %3062 = vrot.lane.b32.xlu0 %v3045, 95
      %v3063 = vpop.permute.xlu0 %3062
      %v3064 = vsel %vm3012, %v3053, %v3055
      %v3065 = vsel %vm3012, %v3055, %v3057
      %v3066 = vsel %vm3012, %v3059, %v3061
      %v3067 = vsel %vm3012, %v3061, %v3063
      %v3074 = vadd.f32 %v3023, %v3053
      %v3075 = vadd.f32 %v3024, %v3064
      %v3076 = vadd.f32 %v3025, %v3065
      %v3077 = vadd.f32 %v3026, %v3059
      %v3078 = vadd.f32 %v3027, %v3066
      %v3079 = vadd.f32 %v3028, %v3067
      %3080 = vset.pattern.permute.xlu0 2
      %3081 = vperm.xlu0 %3080, %v2973
      %v3082 = vpop.permute.xlu0 %3081
      %3084 = vset.pattern.permute.xlu0 2
      %3085 = vperm.xlu0 %3084, %v2974
      %v3086 = vpop.permute.xlu0 %3085
      %v3088 = vperm.slane %v2969, 2
      %v3089 = vperm.slane %v2970, 2
      %v3090 = vperm.slane %v2971, 2
      %v3091 = vmul.f32 %v3082, %v3088
      %v3092 = vmul.f32 %v3082, %v3089
      %v3093 = vmul.f32 %v3082, %v3090
      %v3094 = vmul.f32 %v3086, %v3088
      %v3095 = vmul.f32 %v3086, %v3089
      %v3096 = vmul.f32 %v3086, %v3090
      %3103 = vrot.lane.b32.xlu0 %v3091, 95
      %v3104 = vpop.permute.xlu0 %3103
      %3105 = vrot.lane.b32.xlu0 %v3092, 95
      %v3106 = vpop.permute.xlu0 %3105
      %3107 = vrot.lane.b32.xlu0 %v3093, 95
      %v3108 = vpop.permute.xlu0 %3107
      %3109 = vrot.lane.b32.xlu0 %v3094, 95
      %v3110 = vpop.permute.xlu0 %3109
      %3111 = vrot.lane.b32.xlu0 %v3095, 95
      %v3112 = vpop.permute.xlu0 %3111
      %3113 = vrot.lane.b32.xlu0 %v3096, 95
      %v3114 = vpop.permute.xlu0 %3113
      %v3115 = vsel %vm3012, %v3104, %v3106
      %v3116 = vsel %vm3012, %v3106, %v3108
      %v3117 = vsel %vm3012, %v3110, %v3112
      %v3118 = vsel %vm3012, %v3112, %v3114
      %v3125 = vadd.f32 %v3074, %v3104
      %v3126 = vadd.f32 %v3075, %v3115
      %v3127 = vadd.f32 %v3076, %v3116
      %v3128 = vadd.f32 %v3077, %v3110
      %v3129 = vadd.f32 %v3078, %v3117
      %v3130 = vadd.f32 %v3079, %v3118
      %3131 = vset.pattern.permute.xlu0 3
      %3132 = vperm.xlu0 %3131, %v2973
      %v3133 = vpop.permute.xlu0 %3132
      %3135 = vset.pattern.permute.xlu0 3
      %3136 = vperm.xlu0 %3135, %v2974
      %v3137 = vpop.permute.xlu0 %3136
      %v3139 = vperm.slane %v2969, 3
      %v3140 = vperm.slane %v2970, 3
      %v3141 = vperm.slane %v2971, 3
      %v3142 = vmul.f32 %v3133, %v3139
      %v3143 = vmul.f32 %v3133, %v3140
      %v3144 = vmul.f32 %v3133, %v3141
      %v3145 = vmul.f32 %v3137, %v3139
      %v3146 = vmul.f32 %v3137, %v3140
      %v3147 = vmul.f32 %v3137, %v3141
      %3154 = vrot.lane.b32.xlu0 %v3142, 95
      %v3155 = vpop.permute.xlu0 %3154
      %3156 = vrot.lane.b32.xlu0 %v3143, 95
      %v3157 = vpop.permute.xlu0 %3156
      %3158 = vrot.lane.b32.xlu0 %v3144, 95
      %v3159 = vpop.permute.xlu0 %3158
      %3160 = vrot.lane.b32.xlu0 %v3145, 95
      %v3161 = vpop.permute.xlu0 %3160
      %3162 = vrot.lane.b32.xlu0 %v3146, 95
      %v3163 = vpop.permute.xlu0 %3162
      %3164 = vrot.lane.b32.xlu0 %v3147, 95
      %v3165 = vpop.permute.xlu0 %3164
      %v3166 = vsel %vm3012, %v3155, %v3157
      %v3167 = vsel %vm3012, %v3157, %v3159
      %v3168 = vsel %vm3012, %v3161, %v3163
      %v3169 = vsel %vm3012, %v3163, %v3165
      %v3176 = vadd.f32 %v3125, %v3155
      %v3177 = vadd.f32 %v3126, %v3166
      %v3178 = vadd.f32 %v3127, %v3167
      %v3179 = vadd.f32 %v3128, %v3161
      %v3180 = vadd.f32 %v3129, %v3168
      %v3181 = vadd.f32 %v3130, %v3169
      %3182 = vset.pattern.permute.xlu0 4
      %3183 = vperm.xlu0 %3182, %v2973
      %v3184 = vpop.permute.xlu0 %3183
      %3186 = vset.pattern.permute.xlu0 4
      %3187 = vperm.xlu0 %3186, %v2974
      %v3188 = vpop.permute.xlu0 %3187
      %v3190 = vperm.slane %v2969, 4
      %v3191 = vperm.slane %v2970, 4
      %v3192 = vperm.slane %v2971, 4
      %v3193 = vmul.f32 %v3184, %v3190
      %v3194 = vmul.f32 %v3184, %v3191
      %v3195 = vmul.f32 %v3184, %v3192
      %v3196 = vmul.f32 %v3188, %v3190
      %v3197 = vmul.f32 %v3188, %v3191
      %v3198 = vmul.f32 %v3188, %v3192
      %3205 = vrot.lane.b32.xlu0 %v3193, 95
      %v3206 = vpop.permute.xlu0 %3205
      %3207 = vrot.lane.b32.xlu0 %v3194, 95
      %v3208 = vpop.permute.xlu0 %3207
      %3209 = vrot.lane.b32.xlu0 %v3195, 95
      %v3210 = vpop.permute.xlu0 %3209
      %3211 = vrot.lane.b32.xlu0 %v3196, 95
      %v3212 = vpop.permute.xlu0 %3211
      %3213 = vrot.lane.b32.xlu0 %v3197, 95
      %v3214 = vpop.permute.xlu0 %3213
      %3215 = vrot.lane.b32.xlu0 %v3198, 95
      %v3216 = vpop.permute.xlu0 %3215
      %v3217 = vsel %vm3012, %v3206, %v3208
      %v3218 = vsel %vm3012, %v3208, %v3210
      %v3219 = vsel %vm3012, %v3212, %v3214
      %v3220 = vsel %vm3012, %v3214, %v3216
      %v3227 = vadd.f32 %v3176, %v3206
      %v3228 = vadd.f32 %v3177, %v3217
      %v3229 = vadd.f32 %v3178, %v3218
      %v3230 = vadd.f32 %v3179, %v3212
      %v3231 = vadd.f32 %v3180, %v3219
      %v3232 = vadd.f32 %v3181, %v3220
      %3233 = vset.pattern.permute.xlu0 5
      %3234 = vperm.xlu0 %3233, %v2973
      %v3235 = vpop.permute.xlu0 %3234
      %3237 = vset.pattern.permute.xlu0 5
      %3238 = vperm.xlu0 %3237, %v2974
      %v3239 = vpop.permute.xlu0 %3238
      %v3241 = vperm.slane %v2969, 5
      %v3242 = vperm.slane %v2970, 5
      %v3243 = vperm.slane %v2971, 5
      %v3244 = vmul.f32 %v3235, %v3241
      %v3245 = vmul.f32 %v3235, %v3242
      %v3246 = vmul.f32 %v3235, %v3243
      %v3247 = vmul.f32 %v3239, %v3241
      %v3248 = vmul.f32 %v3239, %v3242
      %v3249 = vmul.f32 %v3239, %v3243
      %3256 = vrot.lane.b32.xlu0 %v3244, 95
      %v3257 = vpop.permute.xlu0 %3256
      %3258 = vrot.lane.b32.xlu0 %v3245, 95
      %v3259 = vpop.permute.xlu0 %3258
      %3260 = vrot.lane.b32.xlu0 %v3246, 95
      %v3261 = vpop.permute.xlu0 %3260
      %3262 = vrot.lane.b32.xlu0 %v3247, 95
      %v3263 = vpop.permute.xlu0 %3262
      %3264 = vrot.lane.b32.xlu0 %v3248, 95
      %v3265 = vpop.permute.xlu0 %3264
      %3266 = vrot.lane.b32.xlu0 %v3249, 95
      %v3267 = vpop.permute.xlu0 %3266
      %v3268 = vsel %vm3012, %v3257, %v3259
      %v3269 = vsel %vm3012, %v3259, %v3261
      %v3270 = vsel %vm3012, %v3263, %v3265
      %v3271 = vsel %vm3012, %v3265, %v3267
      %v3278 = vadd.f32 %v3227, %v3257
      %v3279 = vadd.f32 %v3228, %v3268
      %v3280 = vadd.f32 %v3229, %v3269
      %v3281 = vadd.f32 %v3230, %v3263
      %v3282 = vadd.f32 %v3231, %v3270
      %v3283 = vadd.f32 %v3232, %v3271
      %3284 = vset.pattern.permute.xlu0 6
      %3285 = vperm.xlu0 %3284, %v2973
      %v3286 = vpop.permute.xlu0 %3285
      %3288 = vset.pattern.permute.xlu0 6
      %3289 = vperm.xlu0 %3288, %v2974
      %v3290 = vpop.permute.xlu0 %3289
      %v3292 = vperm.slane %v2969, 6
      %v3293 = vperm.slane %v2970, 6
      %v3294 = vperm.slane %v2971, 6
      %v3295 = vmul.f32 %v3286, %v3292
      %v3296 = vmul.f32 %v3286, %v3293
      %v3297 = vmul.f32 %v3286, %v3294
      %v3298 = vmul.f32 %v3290, %v3292
      %v3299 = vmul.f32 %v3290, %v3293
      %v3300 = vmul.f32 %v3290, %v3294
      %3307 = vrot.lane.b32.xlu0 %v3295, 95
      %v3308 = vpop.permute.xlu0 %3307
      %3309 = vrot.lane.b32.xlu0 %v3296, 95
      %v3310 = vpop.permute.xlu0 %3309
      %3311 = vrot.lane.b32.xlu0 %v3297, 95
      %v3312 = vpop.permute.xlu0 %3311
      %3313 = vrot.lane.b32.xlu0 %v3298, 95
      %v3314 = vpop.permute.xlu0 %3313
      %3315 = vrot.lane.b32.xlu0 %v3299, 95
      %v3316 = vpop.permute.xlu0 %3315
      %3317 = vrot.lane.b32.xlu0 %v3300, 95
      %v3318 = vpop.permute.xlu0 %3317
      %v3319 = vsel %vm3012, %v3308, %v3310
      %v3320 = vsel %vm3012, %v3310, %v3312
      %v3321 = vsel %vm3012, %v3314, %v3316
      %v3322 = vsel %vm3012, %v3316, %v3318
      %v3329 = vadd.f32 %v3278, %v3308
      %v3330 = vadd.f32 %v3279, %v3319
      %v3331 = vadd.f32 %v3280, %v3320
      %v3332 = vadd.f32 %v3281, %v3314
      %v3333 = vadd.f32 %v3282, %v3321
      %v3334 = vadd.f32 %v3283, %v3322
      %3335 = vset.pattern.permute.xlu0 7
      %3336 = vperm.xlu0 %3335, %v2973
      %v3337 = vpop.permute.xlu0 %3336
      %3339 = vset.pattern.permute.xlu0 7
      %3340 = vperm.xlu0 %3339, %v2974
      %v3341 = vpop.permute.xlu0 %3340
      %v3343 = vperm.slane %v2969, 7
      %v3344 = vperm.slane %v2970, 7
      %v3345 = vperm.slane %v2971, 7
      %v3346 = vmul.f32 %v3337, %v3343
      %v3347 = vmul.f32 %v3337, %v3344
      %v3348 = vmul.f32 %v3337, %v3345
      %v3349 = vmul.f32 %v3341, %v3343
      %v3350 = vmul.f32 %v3341, %v3344
      %v3351 = vmul.f32 %v3341, %v3345
      %3358 = vrot.lane.b32.xlu0 %v3346, 95
      %v3359 = vpop.permute.xlu0 %3358
      %3360 = vrot.lane.b32.xlu0 %v3347, 95
      %v3361 = vpop.permute.xlu0 %3360
      %3362 = vrot.lane.b32.xlu0 %v3348, 95
      %v3363 = vpop.permute.xlu0 %3362
      %3364 = vrot.lane.b32.xlu0 %v3349, 95
      %v3365 = vpop.permute.xlu0 %3364
      %3366 = vrot.lane.b32.xlu0 %v3350, 95
      %v3367 = vpop.permute.xlu0 %3366
      %3368 = vrot.lane.b32.xlu0 %v3351, 95
      %v3369 = vpop.permute.xlu0 %3368
      %v3370 = vsel %vm3012, %v3359, %v3361
      %v3371 = vsel %vm3012, %v3361, %v3363
      %v3372 = vsel %vm3012, %v3365, %v3367
      %v3373 = vsel %vm3012, %v3367, %v3369
      %v3380 = vadd.f32 %v3329, %v3359
      %v3381 = vadd.f32 %v3330, %v3370
      %v3382 = vadd.f32 %v3331, %v3371
      %v3383 = vadd.f32 %v3332, %v3365
      %v3384 = vadd.f32 %v3333, %v3372
      %v3385 = vadd.f32 %v3334, %v3373
      %s3386 = scalar_lea.vmem %s5, 16
      %v3387 = vld [vmem:[%s3386] sm:$0x3]
      %v3389 = vperm.slane %v3387, 0
      %v3390 = vperm.slane %v3387, 1
      %3391 = vrot.lane.b32.xlu0 %v3389, 17
      %v3392 = vpop.permute.xlu0 %3391
      %3393 = vrot.lane.b32.xlu0 %v3390, 17
      %v3394 = vpop.permute.xlu0 %3393
      %vm3395 = vcmask 138240
      %v3396 = vsel %vm3395, %v3392, %v3394
      %v3400 = vmul.f32 %v2090, %v3392
      %v3401 = vmul.f32 %v2091, %v3396
      %v3402 = vmul.f32 %v2092, %v3394
      %s3403 = scalar_lea.vmem %s1, 128
      %v3404 = vld [vmem:[%s3403] sm:$0xff]
      %v3405 = vld [vmem:[%s3403 + $0x8] sm:$0xff]
      %3407 = vset.pattern.permute.xlu0 0
      %3408 = vperm.xlu0 %3407, %v3404
      %v3409 = vpop.permute.xlu0 %3408
      %3412 = vset.pattern.permute.xlu0 0
      %3413 = vperm.xlu0 %3412, %v3405
      %v3414 = vpop.permute.xlu0 %3413
      %v3416 = vperm.slane %v3400, 0
      %v3417 = vperm.slane %v3401, 0
      %v3418 = vperm.slane %v3402, 0
      %v3419 = vmul.f32 %v3409, %v3416
      %v3420 = vmul.f32 %v3409, %v3417
      %v3421 = vmul.f32 %v3409, %v3418
      %v3422 = vmul.f32 %v3414, %v3416
      %v3423 = vmul.f32 %v3414, %v3417
      %v3424 = vmul.f32 %v3414, %v3418
      %3431 = vrot.lane.b32.xlu0 %v3419, 94
      %v3432 = vpop.permute.xlu0 %3431
      %3433 = vrot.lane.b32.xlu0 %v3420, 94
      %v3434 = vpop.permute.xlu0 %3433
      %3435 = vrot.lane.b32.xlu0 %v3421, 94
      %v3436 = vpop.permute.xlu0 %3435
      %3437 = vrot.lane.b32.xlu0 %v3422, 94
      %v3438 = vpop.permute.xlu0 %3437
      %3439 = vrot.lane.b32.xlu0 %v3423, 94
      %v3440 = vpop.permute.xlu0 %3439
      %3441 = vrot.lane.b32.xlu0 %v3424, 94
      %v3442 = vpop.permute.xlu0 %3441
      %vm3443 = vcmask 769024
      %v3444 = vsel %vm3443, %v3432, %v3434
      %v3445 = vsel %vm3443, %v3434, %v3436
      %v3446 = vsel %vm3443, %v3438, %v3440
      %v3447 = vsel %vm3443, %v3440, %v3442
      %v3454 = vadd.f32 %v3380, %v3432
      %v3455 = vadd.f32 %v3381, %v3444
      %v3456 = vadd.f32 %v3382, %v3445
      %v3457 = vadd.f32 %v3383, %v3438
      %v3458 = vadd.f32 %v3384, %v3446
      %v3459 = vadd.f32 %v3385, %v3447
      %3460 = vset.pattern.permute.xlu0 1
      %3461 = vperm.xlu0 %3460, %v3404
      %v3462 = vpop.permute.xlu0 %3461
      %3464 = vset.pattern.permute.xlu0 1
      %3465 = vperm.xlu0 %3464, %v3405
      %v3466 = vpop.permute.xlu0 %3465
      %v3468 = vperm.slane %v3400, 1
      %v3469 = vperm.slane %v3401, 1
      %v3470 = vperm.slane %v3402, 1
      %v3471 = vmul.f32 %v3462, %v3468
      %v3472 = vmul.f32 %v3462, %v3469
      %v3473 = vmul.f32 %v3462, %v3470
      %v3474 = vmul.f32 %v3466, %v3468
      %v3475 = vmul.f32 %v3466, %v3469
      %v3476 = vmul.f32 %v3466, %v3470
      %3483 = vrot.lane.b32.xlu0 %v3471, 94
      %v3484 = vpop.permute.xlu0 %3483
      %3485 = vrot.lane.b32.xlu0 %v3472, 94
      %v3486 = vpop.permute.xlu0 %3485
      %3487 = vrot.lane.b32.xlu0 %v3473, 94
      %v3488 = vpop.permute.xlu0 %3487
      %3489 = vrot.lane.b32.xlu0 %v3474, 94
      %v3490 = vpop.permute.xlu0 %3489
      %3491 = vrot.lane.b32.xlu0 %v3475, 94
      %v3492 = vpop.permute.xlu0 %3491
      %3493 = vrot.lane.b32.xlu0 %v3476, 94
      %v3494 = vpop.permute.xlu0 %3493
      %v3495 = vsel %vm3443, %v3484, %v3486
      %v3496 = vsel %vm3443, %v3486, %v3488
      %v3497 = vsel %vm3443, %v3490, %v3492
      %v3498 = vsel %vm3443, %v3492, %v3494
      %v3505 = vadd.f32 %v3454, %v3484
      %v3506 = vadd.f32 %v3455, %v3495
      %v3507 = vadd.f32 %v3456, %v3496
      %v3508 = vadd.f32 %v3457, %v3490
      %v3509 = vadd.f32 %v3458, %v3497
      %v3510 = vadd.f32 %v3459, %v3498
      %3511 = vset.pattern.permute.xlu0 2
      %3512 = vperm.xlu0 %3511, %v3404
      %v3513 = vpop.permute.xlu0 %3512
      %3515 = vset.pattern.permute.xlu0 2
      %3516 = vperm.xlu0 %3515, %v3405
      %v3517 = vpop.permute.xlu0 %3516
      %v3519 = vperm.slane %v3400, 2
      %v3520 = vperm.slane %v3401, 2
      %v3521 = vperm.slane %v3402, 2
      %v3522 = vmul.f32 %v3513, %v3519
      %v3523 = vmul.f32 %v3513, %v3520
      %v3524 = vmul.f32 %v3513, %v3521
      %v3525 = vmul.f32 %v3517, %v3519
      %v3526 = vmul.f32 %v3517, %v3520
      %v3527 = vmul.f32 %v3517, %v3521
      %3534 = vrot.lane.b32.xlu0 %v3522, 94
      %v3535 = vpop.permute.xlu0 %3534
      %3536 = vrot.lane.b32.xlu0 %v3523, 94
      %v3537 = vpop.permute.xlu0 %3536
      %3538 = vrot.lane.b32.xlu0 %v3524, 94
      %v3539 = vpop.permute.xlu0 %3538
      %3540 = vrot.lane.b32.xlu0 %v3525, 94
      %v3541 = vpop.permute.xlu0 %3540
      %3542 = vrot.lane.b32.xlu0 %v3526, 94
      %v3543 = vpop.permute.xlu0 %3542
      %3544 = vrot.lane.b32.xlu0 %v3527, 94
      %v3545 = vpop.permute.xlu0 %3544
      %v3546 = vsel %vm3443, %v3535, %v3537
      %v3547 = vsel %vm3443, %v3537, %v3539
      %v3548 = vsel %vm3443, %v3541, %v3543
      %v3549 = vsel %vm3443, %v3543, %v3545
      %v3556 = vadd.f32 %v3505, %v3535
      %v3557 = vadd.f32 %v3506, %v3546
      %v3558 = vadd.f32 %v3507, %v3547
      %v3559 = vadd.f32 %v3508, %v3541
      %v3560 = vadd.f32 %v3509, %v3548
      %v3561 = vadd.f32 %v3510, %v3549
      %3562 = vset.pattern.permute.xlu0 3
      %3563 = vperm.xlu0 %3562, %v3404
      %v3564 = vpop.permute.xlu0 %3563
      %3566 = vset.pattern.permute.xlu0 3
      %3567 = vperm.xlu0 %3566, %v3405
      %v3568 = vpop.permute.xlu0 %3567
      %v3570 = vperm.slane %v3400, 3
      %v3571 = vperm.slane %v3401, 3
      %v3572 = vperm.slane %v3402, 3
      %v3573 = vmul.f32 %v3564, %v3570
      %v3574 = vmul.f32 %v3564, %v3571
      %v3575 = vmul.f32 %v3564, %v3572
      %v3576 = vmul.f32 %v3568, %v3570
      %v3577 = vmul.f32 %v3568, %v3571
      %v3578 = vmul.f32 %v3568, %v3572
      %3585 = vrot.lane.b32.xlu0 %v3573, 94
      %v3586 = vpop.permute.xlu0 %3585
      %3587 = vrot.lane.b32.xlu0 %v3574, 94
      %v3588 = vpop.permute.xlu0 %3587
      %3589 = vrot.lane.b32.xlu0 %v3575, 94
      %v3590 = vpop.permute.xlu0 %3589
      %3591 = vrot.lane.b32.xlu0 %v3576, 94
      %v3592 = vpop.permute.xlu0 %3591
      %3593 = vrot.lane.b32.xlu0 %v3577, 94
      %v3594 = vpop.permute.xlu0 %3593
      %3595 = vrot.lane.b32.xlu0 %v3578, 94
      %v3596 = vpop.permute.xlu0 %3595
      %v3597 = vsel %vm3443, %v3586, %v3588
      %v3598 = vsel %vm3443, %v3588, %v3590
      %v3599 = vsel %vm3443, %v3592, %v3594
      %v3600 = vsel %vm3443, %v3594, %v3596
      %v3607 = vadd.f32 %v3556, %v3586
      %v3608 = vadd.f32 %v3557, %v3597
      %v3609 = vadd.f32 %v3558, %v3598
      %v3610 = vadd.f32 %v3559, %v3592
      %v3611 = vadd.f32 %v3560, %v3599
      %v3612 = vadd.f32 %v3561, %v3600
      %3613 = vset.pattern.permute.xlu0 4
      %3614 = vperm.xlu0 %3613, %v3404
      %v3615 = vpop.permute.xlu0 %3614
      %3617 = vset.pattern.permute.xlu0 4
      %3618 = vperm.xlu0 %3617, %v3405
      %v3619 = vpop.permute.xlu0 %3618
      %v3621 = vperm.slane %v3400, 4
      %v3622 = vperm.slane %v3401, 4
      %v3623 = vperm.slane %v3402, 4
      %v3624 = vmul.f32 %v3615, %v3621
      %v3625 = vmul.f32 %v3615, %v3622
      %v3626 = vmul.f32 %v3615, %v3623
      %v3627 = vmul.f32 %v3619, %v3621
      %v3628 = vmul.f32 %v3619, %v3622
      %v3629 = vmul.f32 %v3619, %v3623
      %3636 = vrot.lane.b32.xlu0 %v3624, 94
      %v3637 = vpop.permute.xlu0 %3636
      %3638 = vrot.lane.b32.xlu0 %v3625, 94
      %v3639 = vpop.permute.xlu0 %3638
      %3640 = vrot.lane.b32.xlu0 %v3626, 94
      %v3641 = vpop.permute.xlu0 %3640
      %3642 = vrot.lane.b32.xlu0 %v3627, 94
      %v3643 = vpop.permute.xlu0 %3642
      %3644 = vrot.lane.b32.xlu0 %v3628, 94
      %v3645 = vpop.permute.xlu0 %3644
      %3646 = vrot.lane.b32.xlu0 %v3629, 94
      %v3647 = vpop.permute.xlu0 %3646
      %v3648 = vsel %vm3443, %v3637, %v3639
      %v3649 = vsel %vm3443, %v3639, %v3641
      %v3650 = vsel %vm3443, %v3643, %v3645
      %v3651 = vsel %vm3443, %v3645, %v3647
      %v3658 = vadd.f32 %v3607, %v3637
      %v3659 = vadd.f32 %v3608, %v3648
      %v3660 = vadd.f32 %v3609, %v3649
      %v3661 = vadd.f32 %v3610, %v3643
      %v3662 = vadd.f32 %v3611, %v3650
      %v3663 = vadd.f32 %v3612, %v3651
      %3664 = vset.pattern.permute.xlu0 5
      %3665 = vperm.xlu0 %3664, %v3404
      %v3666 = vpop.permute.xlu0 %3665
      %3668 = vset.pattern.permute.xlu0 5
      %3669 = vperm.xlu0 %3668, %v3405
      %v3670 = vpop.permute.xlu0 %3669
      %v3672 = vperm.slane %v3400, 5
      %v3673 = vperm.slane %v3401, 5
      %v3674 = vperm.slane %v3402, 5
      %v3675 = vmul.f32 %v3666, %v3672
      %v3676 = vmul.f32 %v3666, %v3673
      %v3677 = vmul.f32 %v3666, %v3674
      %v3678 = vmul.f32 %v3670, %v3672
      %v3679 = vmul.f32 %v3670, %v3673
      %v3680 = vmul.f32 %v3670, %v3674
      %3687 = vrot.lane.b32.xlu0 %v3675, 94
      %v3688 = vpop.permute.xlu0 %3687
      %3689 = vrot.lane.b32.xlu0 %v3676, 94
      %v3690 = vpop.permute.xlu0 %3689
      %3691 = vrot.lane.b32.xlu0 %v3677, 94
      %v3692 = vpop.permute.xlu0 %3691
      %3693 = vrot.lane.b32.xlu0 %v3678, 94
      %v3694 = vpop.permute.xlu0 %3693
      %3695 = vrot.lane.b32.xlu0 %v3679, 94
      %v3696 = vpop.permute.xlu0 %3695
      %3697 = vrot.lane.b32.xlu0 %v3680, 94
      %v3698 = vpop.permute.xlu0 %3697
      %v3699 = vsel %vm3443, %v3688, %v3690
      %v3700 = vsel %vm3443, %v3690, %v3692
      %v3701 = vsel %vm3443, %v3694, %v3696
      %v3702 = vsel %vm3443, %v3696, %v3698
      %v3709 = vadd.f32 %v3658, %v3688
      %v3710 = vadd.f32 %v3659, %v3699
      %v3711 = vadd.f32 %v3660, %v3700
      %v3712 = vadd.f32 %v3661, %v3694
      %v3713 = vadd.f32 %v3662, %v3701
      %v3714 = vadd.f32 %v3663, %v3702
      %3715 = vset.pattern.permute.xlu0 6
      %3716 = vperm.xlu0 %3715, %v3404
      %v3717 = vpop.permute.xlu0 %3716
      %3719 = vset.pattern.permute.xlu0 6
      %3720 = vperm.xlu0 %3719, %v3405
      %v3721 = vpop.permute.xlu0 %3720
      %v3723 = vperm.slane %v3400, 6
      %v3724 = vperm.slane %v3401, 6
      %v3725 = vperm.slane %v3402, 6
      %v3726 = vmul.f32 %v3717, %v3723
      %v3727 = vmul.f32 %v3717, %v3724
      %v3728 = vmul.f32 %v3717, %v3725
      %v3729 = vmul.f32 %v3721, %v3723
      %v3730 = vmul.f32 %v3721, %v3724
      %v3731 = vmul.f32 %v3721, %v3725
      %3738 = vrot.lane.b32.xlu0 %v3726, 94
      %v3739 = vpop.permute.xlu0 %3738
      %3740 = vrot.lane.b32.xlu0 %v3727, 94
      %v3741 = vpop.permute.xlu0 %3740
      %3742 = vrot.lane.b32.xlu0 %v3728, 94
      %v3743 = vpop.permute.xlu0 %3742
      %3744 = vrot.lane.b32.xlu0 %v3729, 94
      %v3745 = vpop.permute.xlu0 %3744
      %3746 = vrot.lane.b32.xlu0 %v3730, 94
      %v3747 = vpop.permute.xlu0 %3746
      %3748 = vrot.lane.b32.xlu0 %v3731, 94
      %v3749 = vpop.permute.xlu0 %3748
      %v3750 = vsel %vm3443, %v3739, %v3741
      %v3751 = vsel %vm3443, %v3741, %v3743
      %v3752 = vsel %vm3443, %v3745, %v3747
      %v3753 = vsel %vm3443, %v3747, %v3749
      %v3760 = vadd.f32 %v3709, %v3739
      %v3761 = vadd.f32 %v3710, %v3750
      %v3762 = vadd.f32 %v3711, %v3751
      %v3763 = vadd.f32 %v3712, %v3745
      %v3764 = vadd.f32 %v3713, %v3752
      %v3765 = vadd.f32 %v3714, %v3753
      %3766 = vset.pattern.permute.xlu0 7
      %3767 = vperm.xlu0 %3766, %v3404
      %v3768 = vpop.permute.xlu0 %3767
      %3770 = vset.pattern.permute.xlu0 7
      %3771 = vperm.xlu0 %3770, %v3405
      %v3772 = vpop.permute.xlu0 %3771
      %v3774 = vperm.slane %v3400, 7
      %v3775 = vperm.slane %v3401, 7
      %v3776 = vperm.slane %v3402, 7
      %v3777 = vmul.f32 %v3768, %v3774
      %v3778 = vmul.f32 %v3768, %v3775
      %v3779 = vmul.f32 %v3768, %v3776
      %v3780 = vmul.f32 %v3772, %v3774
      %v3781 = vmul.f32 %v3772, %v3775
      %v3782 = vmul.f32 %v3772, %v3776
      %3789 = vrot.lane.b32.xlu0 %v3777, 94
      %v3790 = vpop.permute.xlu0 %3789
      %3791 = vrot.lane.b32.xlu0 %v3778, 94
      %v3792 = vpop.permute.xlu0 %3791
      %3793 = vrot.lane.b32.xlu0 %v3779, 94
      %v3794 = vpop.permute.xlu0 %3793
      %3795 = vrot.lane.b32.xlu0 %v3780, 94
      %v3796 = vpop.permute.xlu0 %3795
      %3797 = vrot.lane.b32.xlu0 %v3781, 94
      %v3798 = vpop.permute.xlu0 %3797
      %3799 = vrot.lane.b32.xlu0 %v3782, 94
      %v3800 = vpop.permute.xlu0 %3799
      %v3801 = vsel %vm3443, %v3790, %v3792
      %v3802 = vsel %vm3443, %v3792, %v3794
      %v3803 = vsel %vm3443, %v3796, %v3798
      %v3804 = vsel %vm3443, %v3798, %v3800
      %v3811 = vadd.f32 %v3760, %v3790
      %v3812 = vadd.f32 %v3761, %v3801
      %v3813 = vadd.f32 %v3762, %v3802
      %v3814 = vadd.f32 %v3763, %v3796
      %v3815 = vadd.f32 %v3764, %v3803
      %v3816 = vadd.f32 %v3765, %v3804
      %v3817 = vld [vmem:[%s2] sm:$0xff]
      %v3818 = vld [vmem:[%s2 + $0x8] sm:$0xff]
      %3820 = vset.pattern.permute.xlu0 0
      %3821 = vperm.xlu0 %3820, %v3817
      %v3822 = vpop.permute.xlu0 %3821
      %3825 = vset.pattern.permute.xlu0 0
      %3826 = vperm.xlu0 %3825, %v3818
      %v3827 = vpop.permute.xlu0 %3826
      %v3829 = vadd.f32 %v3811, %v3822
      %v3830 = vadd.f32 %v3812, %v3822
      %v3831 = vadd.f32 %v3813, %v3822
      %v3832 = vadd.f32 %v3814, %v3827
      %v3833 = vadd.f32 %v3815, %v3827
      %v3834 = vadd.f32 %v3816, %v3827
      %v3835 = vmul.f32 %v3829, 0.70710677
      %v3836 = vmul.f32 %v3830, 0.70710677
      %v3837 = vmul.f32 %v3831, 0.70710677
      %v3838 = vmul.f32 %v3832, 0.70710677
      %v3839 = vmul.f32 %v3833, 0.70710677
      %v3840 = vmul.f32 %v3834, 0.70710677
      %vm3841 = vcmp.ge.f32.partialorder %v3835, 0.0
      %vm3842 = vcmp.ge.f32.partialorder %v3836, 0.0
      %vm3843 = vcmp.ge.f32.partialorder %v3837, 0.0
      %vm3844 = vcmp.ge.f32.partialorder %v3838, 0.0
      %vm3845 = vcmp.ge.f32.partialorder %v3839, 0.0
      %vm3846 = vcmp.ge.f32.partialorder %v3840, 0.0
      %v3847 = vsub.f32 0.0, %v3835
      %v3848 = vsub.f32 0.0, %v3836
      %v3849 = vsub.f32 0.0, %v3837
      %v3850 = vsub.f32 0.0, %v3838
      %v3851 = vsub.f32 0.0, %v3839
      %v3852 = vsub.f32 0.0, %v3840
      %v3853 = vsel %vm3841, %v3835, %v3847
      %v3854 = vsel %vm3842, %v3836, %v3848
      %v3855 = vsel %vm3843, %v3837, %v3849
      %v3856 = vsel %vm3844, %v3838, %v3850
      %v3857 = vsel %vm3845, %v3839, %v3851
      %v3858 = vsel %vm3846, %v3840, %v3852
      %v3859 = vmul.f32 %v3853, 0.3275911
      %v3860 = vmul.f32 %v3854, 0.3275911
      %v3861 = vmul.f32 %v3855, 0.3275911
      %v3862 = vmul.f32 %v3856, 0.3275911
      %v3863 = vmul.f32 %v3857, 0.3275911
      %v3864 = vmul.f32 %v3858, 0.3275911
      %v3865 = vadd.f32 %v3859, 1.0
      %v3866 = vadd.f32 %v3860, 1.0
      %v3867 = vadd.f32 %v3861, 1.0
      %v3868 = vadd.f32 %v3862, 1.0
      %v3869 = vadd.f32 %v3863, 1.0
      %v3870 = vadd.f32 %v3864, 1.0
      %v3871 = vrcp.pop %v3865
      %v3872 = vmul.f32 %v3865, %v3871
      %v3873 = vsub.f32 1.0, %v3872
      %v3874 = vmul.f32 %v3871, %v3873
      %v3875 = vadd.f32 %v3871, %v3874
      %vm3876 = vweird.f32 %v3865
      %vm3877 = vweird.f32 %v3871
      %vm3878 = vmor %vm3876, %vm3877
      %v3879 = vsel %vm3878, %v3871, %v3875
      %v3880 = vand.u32 2147483647, %v3865
      %vm3881 = vcmp.eq.f32.partialorder %v3880, 8.507059e+37
      %v3882 = vand.u32 %v3865, 2147483648
      %v3883 = vor.u32 1.1754944e-38, %v3882
      %v3884 = vsel %vm3881, %v3883, %v3879
      %v3885 = vmul.f32 1.0, %v3884
      %v3886 = vrcp.pop %v3866
      %v3887 = vmul.f32 %v3866, %v3886
      %v3888 = vsub.f32 1.0, %v3887
      %v3889 = vmul.f32 %v3886, %v3888
      %v3890 = vadd.f32 %v3886, %v3889
      %vm3891 = vweird.f32 %v3866
      %vm3892 = vweird.f32 %v3886
      %vm3893 = vmor %vm3891, %vm3892
      %v3894 = vsel %vm3893, %v3886, %v3890
      %v3895 = vand.u32 2147483647, %v3866
      %vm3896 = vcmp.eq.f32.partialorder %v3895, 8.507059e+37
      %v3897 = vand.u32 %v3866, 2147483648
      %v3898 = vor.u32 1.1754944e-38, %v3897
      %v3899 = vsel %vm3896, %v3898, %v3894
      %v3900 = vmul.f32 1.0, %v3899
      %v3901 = vrcp.pop %v3867
      %v3902 = vmul.f32 %v3867, %v3901
      %v3903 = vsub.f32 1.0, %v3902
      %v3904 = vmul.f32 %v3901, %v3903
      %v3905 = vadd.f32 %v3901, %v3904
      %vm3906 = vweird.f32 %v3867
      %vm3907 = vweird.f32 %v3901
      %vm3908 = vmor %vm3906, %vm3907
      %v3909 = vsel %vm3908, %v3901, %v3905
      %v3910 = vand.u32 2147483647, %v3867
      %vm3911 = vcmp.eq.f32.partialorder %v3910, 8.507059e+37
      %v3912 = vand.u32 %v3867, 2147483648
      %v3913 = vor.u32 1.1754944e-38, %v3912
      %v3914 = vsel %vm3911, %v3913, %v3909
      %v3915 = vmul.f32 1.0, %v3914
      %v3916 = vrcp.pop %v3868
      %v3917 = vmul.f32 %v3868, %v3916
      %v3918 = vsub.f32 1.0, %v3917
      %v3919 = vmul.f32 %v3916, %v3918
      %v3920 = vadd.f32 %v3916, %v3919
      %vm3921 = vweird.f32 %v3868
      %vm3922 = vweird.f32 %v3916
      %vm3923 = vmor %vm3921, %vm3922
      %v3924 = vsel %vm3923, %v3916, %v3920
      %v3925 = vand.u32 2147483647, %v3868
      %vm3926 = vcmp.eq.f32.partialorder %v3925, 8.507059e+37
      %v3927 = vand.u32 %v3868, 2147483648
      %v3928 = vor.u32 1.1754944e-38, %v3927
      %v3929 = vsel %vm3926, %v3928, %v3924
      %v3930 = vmul.f32 1.0, %v3929
      %v3931 = vrcp.pop %v3869
      %v3932 = vmul.f32 %v3869, %v3931
      %v3933 = vsub.f32 1.0, %v3932
      %v3934 = vmul.f32 %v3931, %v3933
      %v3935 = vadd.f32 %v3931, %v3934
      %vm3936 = vweird.f32 %v3869
      %vm3937 = vweird.f32 %v3931
      %vm3938 = vmor %vm3936, %vm3937
      %v3939 = vsel %vm3938, %v3931, %v3935
      %v3940 = vand.u32 2147483647, %v3869
      %vm3941 = vcmp.eq.f32.partialorder %v3940, 8.507059e+37
      %v3942 = vand.u32 %v3869, 2147483648
      %v3943 = vor.u32 1.1754944e-38, %v3942
      %v3944 = vsel %vm3941, %v3943, %v3939
      %v3945 = vmul.f32 1.0, %v3944
      %v3946 = vrcp.pop %v3870
      %v3947 = vmul.f32 %v3870, %v3946
      %v3948 = vsub.f32 1.0, %v3947
      %v3949 = vmul.f32 %v3946, %v3948
      %v3950 = vadd.f32 %v3946, %v3949
      %vm3951 = vweird.f32 %v3870
      %vm3952 = vweird.f32 %v3946
      %vm3953 = vmor %vm3951, %vm3952
      %v3954 = vsel %vm3953, %v3946, %v3950
      %v3955 = vand.u32 2147483647, %v3870
      %vm3956 = vcmp.eq.f32.partialorder %v3955, 8.507059e+37
      %v3957 = vand.u32 %v3870, 2147483648
      %v3958 = vor.u32 1.1754944e-38, %v3957
      %v3959 = vsel %vm3956, %v3958, %v3954
      %v3960 = vmul.f32 1.0, %v3959
      %v3961 = vmul.f32 %v3885, 1.0614054
      %v3962 = vmul.f32 %v3900, 1.0614054
      %v3963 = vmul.f32 %v3915, 1.0614054
      %v3964 = vmul.f32 %v3930, 1.0614054
      %v3965 = vmul.f32 %v3945, 1.0614054
      %v3966 = vmul.f32 %v3960, 1.0614054
      %v3967 = vsub.f32 %v3961, 1.4531521
      %v3968 = vsub.f32 %v3962, 1.4531521
      %v3969 = vsub.f32 %v3963, 1.4531521
      %v3970 = vsub.f32 %v3964, 1.4531521
      %v3971 = vsub.f32 %v3965, 1.4531521
      %v3972 = vsub.f32 %v3966, 1.4531521
      %v3973 = vmul.f32 %v3967, %v3885
      %v3974 = vmul.f32 %v3968, %v3900
      %v3975 = vmul.f32 %v3969, %v3915
      %v3976 = vmul.f32 %v3970, %v3930
      %v3977 = vmul.f32 %v3971, %v3945
      %v3978 = vmul.f32 %v3972, %v3960
      %v3979 = vadd.f32 %v3973, 1.4214138
      %v3980 = vadd.f32 %v3974, 1.4214138
      %v3981 = vadd.f32 %v3975, 1.4214138
      %v3982 = vadd.f32 %v3976, 1.4214138
      %v3983 = vadd.f32 %v3977, 1.4214138
      %v3984 = vadd.f32 %v3978, 1.4214138
      %v3985 = vmul.f32 %v3979, %v3885
      %v3986 = vmul.f32 %v3980, %v3900
      %v3987 = vmul.f32 %v3981, %v3915
      %v3988 = vmul.f32 %v3982, %v3930
      %v3989 = vmul.f32 %v3983, %v3945
      %v3990 = vmul.f32 %v3984, %v3960
      %v3991 = vsub.f32 %v3985, 0.28449672
      %v3992 = vsub.f32 %v3986, 0.28449672
      %v3993 = vsub.f32 %v3987, 0.28449672
      %v3994 = vsub.f32 %v3988, 0.28449672
      %v3995 = vsub.f32 %v3989, 0.28449672
      %v3996 = vsub.f32 %v3990, 0.28449672
      %v3997 = vmul.f32 %v3991, %v3885
      %v3998 = vmul.f32 %v3992, %v3900
      %v3999 = vmul.f32 %v3993, %v3915
      %v4000 = vmul.f32 %v3994, %v3930
      %v4001 = vmul.f32 %v3995, %v3945
      %v4002 = vmul.f32 %v3996, %v3960
      %v4003 = vadd.f32 %v3997, 0.2548296
      %v4004 = vadd.f32 %v3998, 0.2548296
      %v4005 = vadd.f32 %v3999, 0.2548296
      %v4006 = vadd.f32 %v4000, 0.2548296
      %v4007 = vadd.f32 %v4001, 0.2548296
      %v4008 = vadd.f32 %v4002, 0.2548296
      %v4009 = vmul.f32 %v4003, %v3885
      %v4010 = vmul.f32 %v4004, %v3900
      %v4011 = vmul.f32 %v4005, %v3915
      %v4012 = vmul.f32 %v4006, %v3930
      %v4013 = vmul.f32 %v4007, %v3945
      %v4014 = vmul.f32 %v4008, %v3960
      %v4015 = vsub.f32 0.0, %v3853
      %v4016 = vsub.f32 0.0, %v3854
      %v4017 = vsub.f32 0.0, %v3855
      %v4018 = vsub.f32 0.0, %v3856
      %v4019 = vsub.f32 0.0, %v3857
      %v4020 = vsub.f32 0.0, %v3858
      %v4021 = vmul.f32 %v4015, %v3853
      %v4022 = vmul.f32 %v4016, %v3854
      %v4023 = vmul.f32 %v4017, %v3855
      %v4024 = vmul.f32 %v4018, %v3856
      %v4025 = vmul.f32 %v4019, %v3857
      %v4026 = vmul.f32 %v4020, %v3858
      %v4027 = vmul.f32 %v4021, 1.442695
      %v4028 = vpow.pop %v4027
      %v4029 = vmul.f32 %v4022, 1.442695
      %v4030 = vpow.pop %v4029
      %v4031 = vmul.f32 %v4023, 1.442695
      %v4032 = vpow.pop %v4031
      %v4033 = vmul.f32 %v4024, 1.442695
      %v4034 = vpow.pop %v4033
      %v4035 = vmul.f32 %v4025, 1.442695
      %v4036 = vpow.pop %v4035
      %v4037 = vmul.f32 %v4026, 1.442695
      %v4038 = vpow.pop %v4037
      %v4039 = vmul.f32 %v4009, %v4028
      %v4040 = vmul.f32 %v4010, %v4030
      %v4041 = vmul.f32 %v4011, %v4032
      %v4042 = vmul.f32 %v4012, %v4034
      %v4043 = vmul.f32 %v4013, %v4036
      %v4044 = vmul.f32 %v4014, %v4038
      %v4045 = vsub.f32 1.0, %v4039
      %v4046 = vsub.f32 1.0, %v4040
      %v4047 = vsub.f32 1.0, %v4041
      %v4048 = vsub.f32 1.0, %v4042
      %v4049 = vsub.f32 1.0, %v4043
      %v4050 = vsub.f32 1.0, %v4044
      %v4051 = vsub.f32 0.0, %v4045
      %v4052 = vsub.f32 0.0, %v4046
      %v4053 = vsub.f32 0.0, %v4047
      %v4054 = vsub.f32 0.0, %v4048
      %v4055 = vsub.f32 0.0, %v4049
      %v4056 = vsub.f32 0.0, %v4050
      %v4057 = vsel %vm3841, %v4045, %v4051
      %v4058 = vsel %vm3842, %v4046, %v4052
      %v4059 = vsel %vm3843, %v4047, %v4053
      %v4060 = vsel %vm3844, %v4048, %v4054
      %v4061 = vsel %vm3845, %v4049, %v4055
      %v4062 = vsel %vm3846, %v4050, %v4056
      %v4063 = vmul.f32 %v3829, 0.5
      %v4064 = vmul.f32 %v3830, 0.5
      %v4065 = vmul.f32 %v3831, 0.5
      %v4066 = vmul.f32 %v3832, 0.5
      %v4067 = vmul.f32 %v3833, 0.5
      %v4068 = vmul.f32 %v3834, 0.5
      %v4069 = vadd.f32 %v4057, 1.0
      %v4070 = vadd.f32 %v4058, 1.0
      %v4071 = vadd.f32 %v4059, 1.0
      %v4072 = vadd.f32 %v4060, 1.0
      %v4073 = vadd.f32 %v4061, 1.0
      %v4074 = vadd.f32 %v4062, 1.0
      %v4075 = vmul.f32 %v4063, %v4069
      %v4076 = vmul.f32 %v4064, %v4070
      %v4077 = vmul.f32 %v4065, %v4071
      %v4078 = vmul.f32 %v4066, %v4072
      %v4079 = vmul.f32 %v4067, %v4073
      %v4080 = vmul.f32 %v4068, %v4074
      %v4081 = vld [vmem:[%s3] sm:$0xff]
      %4083 = vset.pattern.permute.xlu0 0
      %4084 = vperm.xlu0 %4083, %v4081
      %v4085 = vpop.permute.xlu0 %4084
      %v4087 = vperm.slane %v4075, 0
      %v4088 = vperm.slane %v4076, 0
      %v4089 = vperm.slane %v4077, 0
      %v4090 = vmul.f32 %v4085, %v4087
      %v4091 = vmul.f32 %v4085, %v4088
      %v4092 = vmul.f32 %v4085, %v4089
      %v4093 = vadd.f32 %v4090, 0.0
      %v4094 = vadd.f32 %v4091, 0.0
      %v4095 = vadd.f32 %v4092, 0.0
      %4096 = vset.pattern.permute.xlu0 1
      %4097 = vperm.xlu0 %4096, %v4081
      %v4098 = vpop.permute.xlu0 %4097
      %v4100 = vperm.slane %v4075, 1
      %v4101 = vperm.slane %v4076, 1
      %v4102 = vperm.slane %v4077, 1
      %v4103 = vmul.f32 %v4098, %v4100
      %v4104 = vmul.f32 %v4098, %v4101
      %v4105 = vmul.f32 %v4098, %v4102
      %v4106 = vadd.f32 %v4093, %v4103
      %v4107 = vadd.f32 %v4094, %v4104
      %v4108 = vadd.f32 %v4095, %v4105
      %4109 = vset.pattern.permute.xlu0 2
      %4110 = vperm.xlu0 %4109, %v4081
      %v4111 = vpop.permute.xlu0 %4110
      %v4113 = vperm.slane %v4075, 2
      %v4114 = vperm.slane %v4076, 2
      %v4115 = vperm.slane %v4077, 2
      %v4116 = vmul.f32 %v4111, %v4113
      %v4117 = vmul.f32 %v4111, %v4114
      %v4118 = vmul.f32 %v4111, %v4115
      %v4119 = vadd.f32 %v4106, %v4116
      %v4120 = vadd.f32 %v4107, %v4117
      %v4121 = vadd.f32 %v4108, %v4118
      %4122 = vset.pattern.permute.xlu0 3
      %4123 = vperm.xlu0 %4122, %v4081
      %v4124 = vpop.permute.xlu0 %4123
      %v4126 = vperm.slane %v4075, 3
      %v4127 = vperm.slane %v4076, 3
      %v4128 = vperm.slane %v4077, 3
      %v4129 = vmul.f32 %v4124, %v4126
      %v4130 = vmul.f32 %v4124, %v4127
      %v4131 = vmul.f32 %v4124, %v4128
      %v4132 = vadd.f32 %v4119, %v4129
      %v4133 = vadd.f32 %v4120, %v4130
      %v4134 = vadd.f32 %v4121, %v4131
      %4135 = vset.pattern.permute.xlu0 4
      %4136 = vperm.xlu0 %4135, %v4081
      %v4137 = vpop.permute.xlu0 %4136
      %v4139 = vperm.slane %v4075, 4
      %v4140 = vperm.slane %v4076, 4
      %v4141 = vperm.slane %v4077, 4
      %v4142 = vmul.f32 %v4137, %v4139
      %v4143 = vmul.f32 %v4137, %v4140
      %v4144 = vmul.f32 %v4137, %v4141
      %v4145 = vadd.f32 %v4132, %v4142
      %v4146 = vadd.f32 %v4133, %v4143
      %v4147 = vadd.f32 %v4134, %v4144
      %4148 = vset.pattern.permute.xlu0 5
      %4149 = vperm.xlu0 %4148, %v4081
      %v4150 = vpop.permute.xlu0 %4149
      %v4152 = vperm.slane %v4075, 5
      %v4153 = vperm.slane %v4076, 5
      %v4154 = vperm.slane %v4077, 5
      %v4155 = vmul.f32 %v4150, %v4152
      %v4156 = vmul.f32 %v4150, %v4153
      %v4157 = vmul.f32 %v4150, %v4154
      %v4158 = vadd.f32 %v4145, %v4155
      %v4159 = vadd.f32 %v4146, %v4156
      %v4160 = vadd.f32 %v4147, %v4157
      %4161 = vset.pattern.permute.xlu0 6
      %4162 = vperm.xlu0 %4161, %v4081
      %v4163 = vpop.permute.xlu0 %4162
      %v4165 = vperm.slane %v4075, 6
      %v4166 = vperm.slane %v4076, 6
      %v4167 = vperm.slane %v4077, 6
      %v4168 = vmul.f32 %v4163, %v4165
      %v4169 = vmul.f32 %v4163, %v4166
      %v4170 = vmul.f32 %v4163, %v4167
      %v4171 = vadd.f32 %v4158, %v4168
      %v4172 = vadd.f32 %v4159, %v4169
      %v4173 = vadd.f32 %v4160, %v4170
      %4174 = vset.pattern.permute.xlu0 7
      %4175 = vperm.xlu0 %4174, %v4081
      %v4176 = vpop.permute.xlu0 %4175
      %v4178 = vperm.slane %v4075, 7
      %v4179 = vperm.slane %v4076, 7
      %v4180 = vperm.slane %v4077, 7
      %v4181 = vmul.f32 %v4176, %v4178
      %v4182 = vmul.f32 %v4176, %v4179
      %v4183 = vmul.f32 %v4176, %v4180
      %v4184 = vadd.f32 %v4171, %v4181
      %v4185 = vadd.f32 %v4172, %v4182
      %v4186 = vadd.f32 %v4173, %v4183
      %4187 = vset.pattern.permute.xlu0 8
      %4188 = vperm.xlu0 %4187, %v4081
      %v4189 = vpop.permute.xlu0 %4188
      %v4191 = vperm.slane %v4078, 0
      %v4192 = vperm.slane %v4079, 0
      %v4193 = vperm.slane %v4080, 0
      %v4194 = vmul.f32 %v4189, %v4191
      %v4195 = vmul.f32 %v4189, %v4192
      %v4196 = vmul.f32 %v4189, %v4193
      %v4197 = vadd.f32 %v4184, %v4194
      %v4198 = vadd.f32 %v4185, %v4195
      %v4199 = vadd.f32 %v4186, %v4196
      %4200 = vset.pattern.permute.xlu0 9
      %4201 = vperm.xlu0 %4200, %v4081
      %v4202 = vpop.permute.xlu0 %4201
      %v4204 = vperm.slane %v4078, 1
      %v4205 = vperm.slane %v4079, 1
      %v4206 = vperm.slane %v4080, 1
      %v4207 = vmul.f32 %v4202, %v4204
      %v4208 = vmul.f32 %v4202, %v4205
      %v4209 = vmul.f32 %v4202, %v4206
      %v4210 = vadd.f32 %v4197, %v4207
      %v4211 = vadd.f32 %v4198, %v4208
      %v4212 = vadd.f32 %v4199, %v4209
      %4213 = vset.pattern.permute.xlu0 10
      %4214 = vperm.xlu0 %4213, %v4081
      %v4215 = vpop.permute.xlu0 %4214
      %v4217 = vperm.slane %v4078, 2
      %v4218 = vperm.slane %v4079, 2
      %v4219 = vperm.slane %v4080, 2
      %v4220 = vmul.f32 %v4215, %v4217
      %v4221 = vmul.f32 %v4215, %v4218
      %v4222 = vmul.f32 %v4215, %v4219
      %v4223 = vadd.f32 %v4210, %v4220
      %v4224 = vadd.f32 %v4211, %v4221
      %v4225 = vadd.f32 %v4212, %v4222
      %4226 = vset.pattern.permute.xlu0 11
      %4227 = vperm.xlu0 %4226, %v4081
      %v4228 = vpop.permute.xlu0 %4227
      %v4230 = vperm.slane %v4078, 3
      %v4231 = vperm.slane %v4079, 3
      %v4232 = vperm.slane %v4080, 3
      %v4233 = vmul.f32 %v4228, %v4230
      %v4234 = vmul.f32 %v4228, %v4231
      %v4235 = vmul.f32 %v4228, %v4232
      %v4236 = vadd.f32 %v4223, %v4233
      %v4237 = vadd.f32 %v4224, %v4234
      %v4238 = vadd.f32 %v4225, %v4235
      %4239 = vset.pattern.permute.xlu0 12
      %4240 = vperm.xlu0 %4239, %v4081
      %v4241 = vpop.permute.xlu0 %4240
      %v4243 = vperm.slane %v4078, 4
      %v4244 = vperm.slane %v4079, 4
      %v4245 = vperm.slane %v4080, 4
      %v4246 = vmul.f32 %v4241, %v4243
      %v4247 = vmul.f32 %v4241, %v4244
      %v4248 = vmul.f32 %v4241, %v4245
      %v4249 = vadd.f32 %v4236, %v4246
      %v4250 = vadd.f32 %v4237, %v4247
      %v4251 = vadd.f32 %v4238, %v4248
      %4252 = vset.pattern.permute.xlu0 13
      %4253 = vperm.xlu0 %4252, %v4081
      %v4254 = vpop.permute.xlu0 %4253
      %v4256 = vperm.slane %v4078, 5
      %v4257 = vperm.slane %v4079, 5
      %v4258 = vperm.slane %v4080, 5
      %v4259 = vmul.f32 %v4254, %v4256
      %v4260 = vmul.f32 %v4254, %v4257
      %v4261 = vmul.f32 %v4254, %v4258
      %v4262 = vadd.f32 %v4249, %v4259
      %v4263 = vadd.f32 %v4250, %v4260
      %v4264 = vadd.f32 %v4251, %v4261
      %4265 = vset.pattern.permute.xlu0 14
      %4266 = vperm.xlu0 %4265, %v4081
      %v4267 = vpop.permute.xlu0 %4266
      %v4269 = vperm.slane %v4078, 6
      %v4270 = vperm.slane %v4079, 6
      %v4271 = vperm.slane %v4080, 6
      %v4272 = vmul.f32 %v4267, %v4269
      %v4273 = vmul.f32 %v4267, %v4270
      %v4274 = vmul.f32 %v4267, %v4271
      %v4275 = vadd.f32 %v4262, %v4272
      %v4276 = vadd.f32 %v4263, %v4273
      %v4277 = vadd.f32 %v4264, %v4274
      %4278 = vset.pattern.permute.xlu0 15
      %4279 = vperm.xlu0 %4278, %v4081
      %v4280 = vpop.permute.xlu0 %4279
      %v4282 = vperm.slane %v4078, 7
      %v4283 = vperm.slane %v4079, 7
      %v4284 = vperm.slane %v4080, 7
      %v4285 = vmul.f32 %v4280, %v4282
      %v4286 = vmul.f32 %v4280, %v4283
      %v4287 = vmul.f32 %v4280, %v4284
      %v4288 = vadd.f32 %v4275, %v4285
      %v4289 = vadd.f32 %v4276, %v4286
      %v4290 = vadd.f32 %v4277, %v4287
      %v4291 = vld [vmem:[%s4] sm:$0xff]
      %4293 = vset.pattern.permute.xlu0 0
      %4294 = vperm.xlu0 %4293, %v4291
      %v4295 = vpop.permute.xlu0 %4294
      %v4297 = vadd.f32 %v4288, %v4295
      %v4298 = vadd.f32 %v4289, %v4295
      %v4299 = vadd.f32 %v4290, %v4295
      %4303 = vrot.lane.b32.xlu0 %v4297, 17
      %v4304 = vpop.permute.xlu0 %4303
      %4305 = vrot.lane.b32.xlu0 %v4298, 17
      %v4306 = vpop.permute.xlu0 %4305
      %4307 = vrot.lane.b32.xlu0 %v4299, 17
      %v4308 = vpop.permute.xlu0 %4307
      %v4309 = vsel %vm3395, %v4304, %v4306
      %v4310 = vsel %vm3395, %v4306, %v4308
      %4313 = vst [vmem:[%s251] sm:$0xff] %v4309
      %4314 = vst [vmem:[%s251 + $0x8] sm:$0xff] %v4310
      %p4315 = scmp.lt.s32.totalorder %s17, 1
      %s4316 = scalar_select %p4315, %s17, 1
      %s4317 = smul.addr %s4316, 2
      %s4318 = smul.addr %s4317, 8
      %s4319 = scalar_lea.vmem %s6, %s4318
      // Predicated region
      $region45: #{ccm_forward.1} parent=43 // pred_check
        %p4320 = pneg %p166
      $region46: #{ccm_forward.1} parent=43 // pred_check_branch
        %4322 = sbr.rel (%p4320) target = $region48
      $region47: #{ccm_forward.1} parent=43 // pred_region
        _
      $region48: #{ccm_forward.1} parent=43 // pred_fallthru
        _
    $region44: #{ccm_forward.1} parent=5 // pred_fallthru
      _
    %p4323 = scmp.le.s32.totalorder 2, %s12
    // Predicated region
    $region49: #{ccm_forward.1} parent=5 // pred_check
      %p4324 = pneg %p4323
    $region50: #{ccm_forward.1} parent=5 // pred_check_branch
      %4326 = sbr.rel (%p4324) target = $region52
    $region51: #{ccm_forward.1} parent=5 // pred_region
      %s4327 = ssub.s32 %s12, 2
      // Predicated region
      $region53: #{ccm_forward.1} parent=51 // pred_check
        %p4328 = pneg %p172
      $region54: #{ccm_forward.1} parent=51 // pred_check_branch
        %4330 = sbr.rel (%p4328) target = $region56
      $region55: #{ccm_forward.1} parent=51 // pred_region
        %p4331 = scmp.lt.s32.totalorder %s18, 1
        %s4332 = scalar_select %p4331, %s18, 1
        %s4333 = smul.addr %s4332, 2
        %s4334 = smul.addr %s4333, 8
        %s4335 = scalar_lea.vmem %s6, %s4334
      $region56: #{ccm_forward.1} parent=51 // pred_fallthru
        _
    $region52: #{ccm_forward.1} parent=5 // pred_fallthru
      _
  $region6: #{ccm_forward.1} parent=0 // loop_footer
    %s16 = sadd.s32 1, %s12
  $region7: #{ccm_forward.1} parent=0 // loop_footer_branch
    %11 = sbr.rel target = $region3
  $region8: #{ccm_forward.1} parent=0 // loop_exit
    _

</llo_original>
